<compile_context>
chip_gen: v7x
topology: tpu7x:2x2x1
jax: 0.10.0
libtpu: 0.0.40
codegen_flags: <defaults>
</compile_context>

<pallas_src>
import jax
import jax.numpy as jnp
from jax.experimental import pallas as pl
from jax.experimental.pallas import tpu as pltpu  # noqa: F401 (TPU backend)

DIM = 512       # CrossAttention dim == dim_head == 512, heads == 1 -> to_out = Identity
FRAMES = 8      # fixed by the module's reshape(..., 8, C, H, W)
_EPS = 1e-8


def _normalize(x):
    # Row-wise L2 normalization (cosine-similarity prep).
    return x * jax.lax.rsqrt(jnp.sum(x * x, axis=-1, keepdims=True) + _EPS)


def _task_adapter_kernel(zs_ref, zq_ref, enh_ref, sem_ref, dists_ref):
    # zs_ref   : (n_way, n_support*8, D)  support features, grouped per class
    # zq_ref   : (NQ, 8, D)               query features
    # enh_ref  : (3, n_way, D)            text prompt embeddings (already permuted)
    # sem_ref  : (n_way, NQ)              semantic cosine score
    # dists_ref: (NQ, n_way)              query <-> prototype cosine score
    d = zq_ref.shape[-1]
    scale = float(d) ** -0.5

    zs = zs_ref[...].astype(jnp.float32)
    zq = zq_ref[...].astype(jnp.float32)
    enh = enh_ref[...].astype(jnp.float32)

    # ---- dists = cosine(z_query.mean(frames), z_proto.mean(support, frames)) ----
    # cosine similarity is scale-invariant -> use sums instead of means (no divides;
    # mean over n_support then over 8 equals mean over n_support*8 for equal groups).
    proto = jnp.sum(zs, axis=1)                        # (n_way, D)
    qvid = jnp.sum(zq, axis=1)                         # (NQ, D)
    dists_ref[...] = jnp.dot(_normalize(qvid), _normalize(proto).T,
                             preferred_element_type=jnp.float32)

    # ---- temporal cross-attention over adjacent frames (statically unrolled) ----
    # q_aft_tm[f] = softmax(q[f] @ q[f+1].T / sqrt(D)) @ q[f+1] + q[f+1]
    # ln_1 = Identity (dataset != 'somethingotam'), to_out = Identity (heads == 1,
    # dim_head == dim), Dropout is a no-op in eval; the residual added by the
    # reference loop is q_reshape[frame + 1] (i.e. the key/value frame).
    frames = [zq[:, f, :] for f in range(FRAMES)]      # each (NQ, D)
    qn = []                                            # L2-normalized q_aft_tm rows
    for f in range(FRAMES - 1):
        q = frames[f]
        kv = frames[f + 1]
        dots = jnp.dot(q, kv.T, preferred_element_type=jnp.float32) * scale
        m = jnp.max(dots, axis=-1, keepdims=True)
        e = jnp.exp(dots - m)
        # EUP approx reciprocal instead of a VALU divide.
        attn = e * pl.reciprocal(jnp.sum(e, axis=-1, keepdims=True), approx=True)
        out = jnp.dot(attn, kv, preferred_element_type=jnp.float32) + kv
        qn.append(_normalize(out))

    # ---- sem_dists = (1/9) * sum_{i=0..2} [cos(enh[i], q_aft_tm[2i])
    #                                      + cos(enh[i], q_aft_tm[2i+1])
    #                                      + cos(enh[i], q_aft_tm[2i+2])] ----
    # Fold the 9-pair accumulation into a single MXU matmul contracting over
    # the concatenated (pair, D) axis (K = 9*512) instead of 9 tiny matmuls.
    en = [_normalize(enh[i]) for i in range(3)]
    a_idx = (0, 0, 0, 1, 1, 1, 2, 2, 2)
    b_idx = (0, 1, 2, 2, 3, 4, 4, 5, 6)
    a_cat = jnp.concatenate([en[a] for a in a_idx], axis=-1)   # (n_way, 9*D)
    b_cat = jnp.concatenate([qn[b] for b in b_idx], axis=-1)   # (NQ,    9*D)
    sem_ref[...] = jnp.dot(a_cat, b_cat.T,
                           preferred_element_type=jnp.float32) * (1.0 / 9.0)


def task_adapter_forward(z_support, z_query, enh_embedding, n_way, n_support, n_query):
    """
    z_support:     (n_way * n_support, 8, 512)  -- self.feature(support_images) output
    z_query:       (n_way * n_query,   8, 512)  -- self.feature(target_images)  output
    enh_embedding: (3, n_way, 512)              -- self.text(...) prompt embeddings (permuted)
    returns (sem_dists, dists)
    """
    NQ = n_way * n_query
    # Contiguous (metadata-only) reshape so the kernel can sum over (support, frame).
    zs_grp = z_support.reshape(n_way, n_support * FRAMES, DIM)

    sem_dists, dists = pl.pallas_call(
        _task_adapter_kernel,
        out_shape=(jax.ShapeDtypeStruct((n_way, NQ), jnp.float32),
                   jax.ShapeDtypeStruct((NQ, n_way), jnp.float32)),
    )(zs_grp, z_query, enh_embedding)
    # The reference's .squeeze() on dists is a no-op for n_way, n_query > 1.
    return sem_dists, dists


if __name__ == "__main__":
    # TODO(synk): the CLIP ViT-B/16 adapter backbone, CLIP text encoder,
    # clip.tokenize and the YAML class-name lookup have no Pallas equivalent;
    # their output features are generated synthetically & deterministically.
    n_way, n_support, n_query = 2, 2, 3

    key = jax.random.PRNGKey(0)
    k1, k2, k3 = jax.random.split(key, 3)
    z_support = jax.random.normal(k1, (n_way * n_support, FRAMES, DIM), jnp.float32)
    z_query = jax.random.normal(k2, (n_way * n_query, FRAMES, DIM), jnp.float32)
    enh_embedding = jax.random.normal(k3, (3, n_way, DIM), jnp.float32)

    sem_dists, dists = task_adapter_forward(
        z_support, z_query, enh_embedding, n_way, n_support, n_query)
    jax.block_until_ready((sem_dists, dists))

    assert sem_dists.shape == (n_way, n_way * n_query)
    assert dists.shape == (n_way * n_query, n_way)
    print("KERNEL_OK")
</pallas_src>

<mosaic_0001>
module attributes {stable_mosaic.version = 11 : i64} {
  func.func @_task_adapter_kernel(%arg0: memref<2x16x512xf32, #tpu.memory_space<vmem>>, %arg1: memref<6x8x512xf32, #tpu.memory_space<vmem>>, %arg2: memref<3x2x512xf32, #tpu.memory_space<vmem>>, %arg3: memref<2x6xf32, #tpu.memory_space<vmem>>, %arg4: memref<6x2xf32, #tpu.memory_space<vmem>>) attributes {dimension_semantics = [], scalar_prefetch = 0 : i64, scratch_operands = 0 : i64, tpu.core_type = #tpu.core_type<tc>} {
    %c0 = arith.constant 0 : index
    %c0_0 = arith.constant 0 : index
    %c0_1 = arith.constant 0 : index
    %0 = vector.load %arg0[%c0, %c0_0, %c0_1] : memref<2x16x512xf32, #tpu.memory_space<vmem>>, vector<2x16x512xf32>
    %c0_2 = arith.constant 0 : index
    %c0_3 = arith.constant 0 : index
    %c0_4 = arith.constant 0 : index
    %1 = vector.load %arg1[%c0_2, %c0_3, %c0_4] : memref<6x8x512xf32, #tpu.memory_space<vmem>>, vector<6x8x512xf32>
    %c0_5 = arith.constant 0 : index
    %c0_6 = arith.constant 0 : index
    %c0_7 = arith.constant 0 : index
    %2 = vector.load %arg2[%c0_5, %c0_6, %c0_7] : memref<3x2x512xf32, #tpu.memory_space<vmem>>, vector<3x2x512xf32>
    %cst = arith.constant dense<0.000000e+00> : vector<2x512xf32>
    %3 = vector.multi_reduction <add>, %0, %cst [1] : vector<2x16x512xf32> to vector<2x512xf32>
    %cst_8 = arith.constant dense<0.000000e+00> : vector<6x512xf32>
    %4 = vector.multi_reduction <add>, %1, %cst_8 [1] : vector<6x8x512xf32> to vector<6x512xf32>
    %5 = arith.mulf %4, %4 : vector<6x512xf32>
    %cst_9 = arith.constant dense<0.000000e+00> : vector<6xf32>
    %6 = vector.multi_reduction <add>, %5, %cst_9 [1] : vector<6x512xf32> to vector<6xf32>
    %7 = vector.shape_cast %6 : vector<6xf32> to vector<6x1xf32>
    %cst_10 = arith.constant 9.99999993E-9 : f32
    %8 = vector.broadcast %cst_10 : f32 to vector<6x1xf32>
    %9 = arith.addf %7, %8 : vector<6x1xf32>
    %10 = math.rsqrt %9 : vector<6x1xf32>
    %11 = vector.broadcast %10 : vector<6x1xf32> to vector<6x512xf32>
    %12 = arith.mulf %4, %11 : vector<6x512xf32>
    %13 = arith.mulf %3, %3 : vector<2x512xf32>
    %cst_11 = arith.constant dense<0.000000e+00> : vector<2xf32>
    %14 = vector.multi_reduction <add>, %13, %cst_11 [1] : vector<2x512xf32> to vector<2xf32>
    %15 = vector.shape_cast %14 : vector<2xf32> to vector<2x1xf32>
    %cst_12 = arith.constant 9.99999993E-9 : f32
    %16 = vector.broadcast %cst_12 : f32 to vector<2x1xf32>
    %17 = arith.addf %15, %16 : vector<2x1xf32>
    %18 = math.rsqrt %17 : vector<2x1xf32>
    %19 = vector.broadcast %18 : vector<2x1xf32> to vector<2x512xf32>
    %20 = arith.mulf %3, %19 : vector<2x512xf32>
    %21 = tpu.transpose %20, [1, 0] : vector<2x512xf32> -> vector<512x2xf32>
    %cst_13 = arith.constant dense<0.000000e+00> : vector<6x2xf32>
    %22 = tpu.matmul %12, %21, %cst_13 {dimension_numbers = #tpu.dot_dimension_numbers<[1], [0], [0], [1], [0, 0, 1, 1], [], []>} : vector<6x512xf32>, vector<512x2xf32>, vector<6x2xf32> -> vector<6x2xf32>
    %c0_14 = arith.constant 0 : index
    %c0_15 = arith.constant 0 : index
    %23 = vector.load %arg4[%c0_14, %c0_15] : memref<6x2xf32, #tpu.memory_space<vmem>>, vector<6x2xf32>
    tpu.vector_store %arg4[%c0_14, %c0_15], %22 {strides = array<i32>} : memref<6x2xf32, #tpu.memory_space<vmem>>, vector<6x2xf32>,
    %24 = vector.extract_strided_slice %1 {offsets = [0, 0, 0], sizes = [6, 1, 512], strides = [1, 1, 1]} : vector<6x8x512xf32> to vector<6x1x512xf32>
    %25 = vector.shape_cast %24 : vector<6x1x512xf32> to vector<6x512xf32>
    %26 = vector.extract_strided_slice %1 {offsets = [0, 1, 0], sizes = [6, 1, 512], strides = [1, 1, 1]} : vector<6x8x512xf32> to vector<6x1x512xf32>
    %27 = vector.shape_cast %26 : vector<6x1x512xf32> to vector<6x512xf32>
    %28 = vector.extract_strided_slice %1 {offsets = [0, 2, 0], sizes = [6, 1, 512], strides = [1, 1, 1]} : vector<6x8x512xf32> to vector<6x1x512xf32>
    %29 = vector.shape_cast %28 : vector<6x1x512xf32> to vector<6x512xf32>
    %30 = vector.extract_strided_slice %1 {offsets = [0, 3, 0], sizes = [6, 1, 512], strides = [1, 1, 1]} : vector<6x8x512xf32> to vector<6x1x512xf32>
    %31 = vector.shape_cast %30 : vector<6x1x512xf32> to vector<6x512xf32>
    %32 = vector.extract_strided_slice %1 {offsets = [0, 4, 0], sizes = [6, 1, 512], strides = [1, 1, 1]} : vector<6x8x512xf32> to vector<6x1x512xf32>
    %33 = vector.shape_cast %32 : vector<6x1x512xf32> to vector<6x512xf32>
    %34 = vector.extract_strided_slice %1 {offsets = [0, 5, 0], sizes = [6, 1, 512], strides = [1, 1, 1]} : vector<6x8x512xf32> to vector<6x1x512xf32>
    %35 = vector.shape_cast %34 : vector<6x1x512xf32> to vector<6x512xf32>
    %36 = vector.extract_strided_slice %1 {offsets = [0, 6, 0], sizes = [6, 1, 512], strides = [1, 1, 1]} : vector<6x8x512xf32> to vector<6x1x512xf32>
    %37 = vector.shape_cast %36 : vector<6x1x512xf32> to vector<6x512xf32>
    %38 = vector.extract_strided_slice %1 {offsets = [0, 7, 0], sizes = [6, 1, 512], strides = [1, 1, 1]} : vector<6x8x512xf32> to vector<6x1x512xf32>
    %39 = vector.shape_cast %38 : vector<6x1x512xf32> to vector<6x512xf32>
    %40 = tpu.transpose %27, [1, 0] : vector<6x512xf32> -> vector<512x6xf32>
    %cst_16 = arith.constant dense<0.000000e+00> : vector<6x6xf32>
    %41 = tpu.matmul %25, %40, %cst_16 {dimension_numbers = #tpu.dot_dimension_numbers<[1], [0], [0], [1], [0, 0, 1, 1], [], []>} : vector<6x512xf32>, vector<512x6xf32>, vector<6x6xf32> -> vector<6x6xf32>
    %cst_17 = arith.constant 0.0441941731 : f32
    %42 = vector.broadcast %cst_17 : f32 to vector<6x6xf32>
    %43 = arith.mulf %41, %42 : vector<6x6xf32>
    %cst_18 = arith.constant dense<0xFF800000> : vector<6xf32>
    %44 = vector.multi_reduction <maximumf>, %43, %cst_18 [1] : vector<6x6xf32> to vector<6xf32>
    %45 = vector.shape_cast %44 : vector<6xf32> to vector<6x1xf32>
    %46 = vector.broadcast %45 : vector<6x1xf32> to vector<6x6xf32>
    %47 = arith.subf %43, %46 : vector<6x6xf32>
    %48 = math.exp %47 : vector<6x6xf32>
    %cst_19 = arith.constant dense<0.000000e+00> : vector<6xf32>
    %49 = vector.multi_reduction <add>, %48, %cst_19 [1] : vector<6x6xf32> to vector<6xf32>
    %50 = vector.shape_cast %49 : vector<6xf32> to vector<6x1xf32>
    %51 = tpu.reciprocal %50 {approx = true} : vector<6x1xf32> -> vector<6x1xf32>
    %52 = vector.broadcast %51 : vector<6x1xf32> to vector<6x6xf32>
    %53 = arith.mulf %48, %52 : vector<6x6xf32>
    %cst_20 = arith.constant dense<0.000000e+00> : vector<6x512xf32>
    %54 = tpu.matmul %53, %27, %cst_20 {dimension_numbers = #tpu.dot_dimension_numbers<[1], [0], [0], [1], [0, 0, 1, 1], [], []>} : vector<6x6xf32>, vector<6x512xf32>, vector<6x512xf32> -> vector<6x512xf32>
    %55 = arith.addf %54, %27 : vector<6x512xf32>
    %56 = arith.mulf %55, %55 : vector<6x512xf32>
    %cst_21 = arith.constant dense<0.000000e+00> : vector<6xf32>
    %57 = vector.multi_reduction <add>, %56, %cst_21 [1] : vector<6x512xf32> to vector<6xf32>
    %58 = vector.shape_cast %57 : vector<6xf32> to vector<6x1xf32>
    %cst_22 = arith.constant 9.99999993E-9 : f32
    %59 = vector.broadcast %cst_22 : f32 to vector<6x1xf32>
    %60 = arith.addf %58, %59 : vector<6x1xf32>
    %61 = math.rsqrt %60 : vector<6x1xf32>
    %62 = vector.broadcast %61 : vector<6x1xf32> to vector<6x512xf32>
    %63 = arith.mulf %55, %62 : vector<6x512xf32>
    %64 = tpu.transpose %29, [1, 0] : vector<6x512xf32> -> vector<512x6xf32>
    %cst_23 = arith.constant dense<0.000000e+00> : vector<6x6xf32>
    %65 = tpu.matmul %27, %64, %cst_23 {dimension_numbers = #tpu.dot_dimension_numbers<[1], [0], [0], [1], [0, 0, 1, 1], [], []>} : vector<6x512xf32>, vector<512x6xf32>, vector<6x6xf32> -> vector<6x6xf32>
    %cst_24 = arith.constant 0.0441941731 : f32
    %66 = vector.broadcast %cst_24 : f32 to vector<6x6xf32>
    %67 = arith.mulf %65, %66 : vector<6x6xf32>
    %cst_25 = arith.constant dense<0xFF800000> : vector<6xf32>
    %68 = vector.multi_reduction <maximumf>, %67, %cst_25 [1] : vector<6x6xf32> to vector<6xf32>
    %69 = vector.shape_cast %68 : vector<6xf32> to vector<6x1xf32>
    %70 = vector.broadcast %69 : vector<6x1xf32> to vector<6x6xf32>
    %71 = arith.subf %67, %70 : vector<6x6xf32>
    %72 = math.exp %71 : vector<6x6xf32>
    %cst_26 = arith.constant dense<0.000000e+00> : vector<6xf32>
    %73 = vector.multi_reduction <add>, %72, %cst_26 [1] : vector<6x6xf32> to vector<6xf32>
    %74 = vector.shape_cast %73 : vector<6xf32> to vector<6x1xf32>
    %75 = tpu.reciprocal %74 {approx = true} : vector<6x1xf32> -> vector<6x1xf32>
    %76 = vector.broadcast %75 : vector<6x1xf32> to vector<6x6xf32>
    %77 = arith.mulf %72, %76 : vector<6x6xf32>
    %cst_27 = arith.constant dense<0.000000e+00> : vector<6x512xf32>
    %78 = tpu.matmul %77, %29, %cst_27 {dimension_numbers = #tpu.dot_dimension_numbers<[1], [0], [0], [1], [0, 0, 1, 1], [], []>} : vector<6x6xf32>, vector<6x512xf32>, vector<6x512xf32> -> vector<6x512xf32>
    %79 = arith.addf %78, %29 : vector<6x512xf32>
    %80 = arith.mulf %79, %79 : vector<6x512xf32>
    %cst_28 = arith.constant dense<0.000000e+00> : vector<6xf32>
    %81 = vector.multi_reduction <add>, %80, %cst_28 [1] : vector<6x512xf32> to vector<6xf32>
    %82 = vector.shape_cast %81 : vector<6xf32> to vector<6x1xf32>
    %cst_29 = arith.constant 9.99999993E-9 : f32
    %83 = vector.broadcast %cst_29 : f32 to vector<6x1xf32>
    %84 = arith.addf %82, %83 : vector<6x1xf32>
    %85 = math.rsqrt %84 : vector<6x1xf32>
    %86 = vector.broadcast %85 : vector<6x1xf32> to vector<6x512xf32>
    %87 = arith.mulf %79, %86 : vector<6x512xf32>
    %88 = tpu.transpose %31, [1, 0] : vector<6x512xf32> -> vector<512x6xf32>
    %cst_30 = arith.constant dense<0.000000e+00> : vector<6x6xf32>
    %89 = tpu.matmul %29, %88, %cst_30 {dimension_numbers = #tpu.dot_dimension_numbers<[1], [0], [0], [1], [0, 0, 1, 1], [], []>} : vector<6x512xf32>, vector<512x6xf32>, vector<6x6xf32> -> vector<6x6xf32>
    %cst_31 = arith.constant 0.0441941731 : f32
    %90 = vector.broadcast %cst_31 : f32 to vector<6x6xf32>
    %91 = arith.mulf %89, %90 : vector<6x6xf32>
    %cst_32 = arith.constant dense<0xFF800000> : vector<6xf32>
    %92 = vector.multi_reduction <maximumf>, %91, %cst_32 [1] : vector<6x6xf32> to vector<6xf32>
    %93 = vector.shape_cast %92 : vector<6xf32> to vector<6x1xf32>
    %94 = vector.broadcast %93 : vector<6x1xf32> to vector<6x6xf32>
    %95 = arith.subf %91, %94 : vector<6x6xf32>
    %96 = math.exp %95 : vector<6x6xf32>
    %cst_33 = arith.constant dense<0.000000e+00> : vector<6xf32>
    %97 = vector.multi_reduction <add>, %96, %cst_33 [1] : vector<6x6xf32> to vector<6xf32>
    %98 = vector.shape_cast %97 : vector<6xf32> to vector<6x1xf32>
    %99 = tpu.reciprocal %98 {approx = true} : vector<6x1xf32> -> vector<6x1xf32>
    %100 = vector.broadcast %99 : vector<6x1xf32> to vector<6x6xf32>
    %101 = arith.mulf %96, %100 : vector<6x6xf32>
    %cst_34 = arith.constant dense<0.000000e+00> : vector<6x512xf32>
    %102 = tpu.matmul %101, %31, %cst_34 {dimension_numbers = #tpu.dot_dimension_numbers<[1], [0], [0], [1], [0, 0, 1, 1], [], []>} : vector<6x6xf32>, vector<6x512xf32>, vector<6x512xf32> -> vector<6x512xf32>
    %103 = arith.addf %102, %31 : vector<6x512xf32>
    %104 = arith.mulf %103, %103 : vector<6x512xf32>
    %cst_35 = arith.constant dense<0.000000e+00> : vector<6xf32>
    %105 = vector.multi_reduction <add>, %104, %cst_35 [1] : vector<6x512xf32> to vector<6xf32>
    %106 = vector.shape_cast %105 : vector<6xf32> to vector<6x1xf32>
    %cst_36 = arith.constant 9.99999993E-9 : f32
    %107 = vector.broadcast %cst_36 : f32 to vector<6x1xf32>
    %108 = arith.addf %106, %107 : vector<6x1xf32>
    %109 = math.rsqrt %108 : vector<6x1xf32>
    %110 = vector.broadcast %109 : vector<6x1xf32> to vector<6x512xf32>
    %111 = arith.mulf %103, %110 : vector<6x512xf32>
    %112 = tpu.transpose %33, [1, 0] : vector<6x512xf32> -> vector<512x6xf32>
    %cst_37 = arith.constant dense<0.000000e+00> : vector<6x6xf32>
    %113 = tpu.matmul %31, %112, %cst_37 {dimension_numbers = #tpu.dot_dimension_numbers<[1], [0], [0], [1], [0, 0, 1, 1], [], []>} : vector<6x512xf32>, vector<512x6xf32>, vector<6x6xf32> -> vector<6x6xf32>
    %cst_38 = arith.constant 0.0441941731 : f32
    %114 = vector.broadcast %cst_38 : f32 to vector<6x6xf32>
    %115 = arith.mulf %113, %114 : vector<6x6xf32>
    %cst_39 = arith.constant dense<0xFF800000> : vector<6xf32>
    %116 = vector.multi_reduction <maximumf>, %115, %cst_39 [1] : vector<6x6xf32> to vector<6xf32>
    %117 = vector.shape_cast %116 : vector<6xf32> to vector<6x1xf32>
    %118 = vector.broadcast %117 : vector<6x1xf32> to vector<6x6xf32>
    %119 = arith.subf %115, %118 : vector<6x6xf32>
    %120 = math.exp %119 : vector<6x6xf32>
    %cst_40 = arith.constant dense<0.000000e+00> : vector<6xf32>
    %121 = vector.multi_reduction <add>, %120, %cst_40 [1] : vector<6x6xf32> to vector<6xf32>
    %122 = vector.shape_cast %121 : vector<6xf32> to vector<6x1xf32>
    %123 = tpu.reciprocal %122 {approx = true} : vector<6x1xf32> -> vector<6x1xf32>
    %124 = vector.broadcast %123 : vector<6x1xf32> to vector<6x6xf32>
    %125 = arith.mulf %120, %124 : vector<6x6xf32>
    %cst_41 = arith.constant dense<0.000000e+00> : vector<6x512xf32>
    %126 = tpu.matmul %125, %33, %cst_41 {dimension_numbers = #tpu.dot_dimension_numbers<[1], [0], [0], [1], [0, 0, 1, 1], [], []>} : vector<6x6xf32>, vector<6x512xf32>, vector<6x512xf32> -> vector<6x512xf32>
    %127 = arith.addf %126, %33 : vector<6x512xf32>
    %128 = arith.mulf %127, %127 : vector<6x512xf32>
    %cst_42 = arith.constant dense<0.000000e+00> : vector<6xf32>
    %129 = vector.multi_reduction <add>, %128, %cst_42 [1] : vector<6x512xf32> to vector<6xf32>
    %130 = vector.shape_cast %129 : vector<6xf32> to vector<6x1xf32>
    %cst_43 = arith.constant 9.99999993E-9 : f32
    %131 = vector.broadcast %cst_43 : f32 to vector<6x1xf32>
    %132 = arith.addf %130, %131 : vector<6x1xf32>
    %133 = math.rsqrt %132 : vector<6x1xf32>
    %134 = vector.broadcast %133 : vector<6x1xf32> to vector<6x512xf32>
    %135 = arith.mulf %127, %134 : vector<6x512xf32>
    %136 = tpu.transpose %35, [1, 0] : vector<6x512xf32> -> vector<512x6xf32>
    %cst_44 = arith.constant dense<0.000000e+00> : vector<6x6xf32>
    %137 = tpu.matmul %33, %136, %cst_44 {dimension_numbers = #tpu.dot_dimension_numbers<[1], [0], [0], [1], [0, 0, 1, 1], [], []>} : vector<6x512xf32>, vector<512x6xf32>, vector<6x6xf32> -> vector<6x6xf32>
    %cst_45 = arith.constant 0.0441941731 : f32
    %138 = vector.broadcast %cst_45 : f32 to vector<6x6xf32>
    %139 = arith.mulf %137, %138 : vector<6x6xf32>
    %cst_46 = arith.constant dense<0xFF800000> : vector<6xf32>
    %140 = vector.multi_reduction <maximumf>, %139, %cst_46 [1] : vector<6x6xf32> to vector<6xf32>
    %141 = vector.shape_cast %140 : vector<6xf32> to vector<6x1xf32>
    %142 = vector.broadcast %141 : vector<6x1xf32> to vector<6x6xf32>
    %143 = arith.subf %139, %142 : vector<6x6xf32>
    %144 = math.exp %143 : vector<6x6xf32>
    %cst_47 = arith.constant dense<0.000000e+00> : vector<6xf32>
    %145 = vector.multi_reduction <add>, %144, %cst_47 [1] : vector<6x6xf32> to vector<6xf32>
    %146 = vector.shape_cast %145 : vector<6xf32> to vector<6x1xf32>
    %147 = tpu.reciprocal %146 {approx = true} : vector<6x1xf32> -> vector<6x1xf32>
    %148 = vector.broadcast %147 : vector<6x1xf32> to vector<6x6xf32>
    %149 = arith.mulf %144, %148 : vector<6x6xf32>
    %cst_48 = arith.constant dense<0.000000e+00> : vector<6x512xf32>
    %150 = tpu.matmul %149, %35, %cst_48 {dimension_numbers = #tpu.dot_dimension_numbers<[1], [0], [0], [1], [0, 0, 1, 1], [], []>} : vector<6x6xf32>, vector<6x512xf32>, vector<6x512xf32> -> vector<6x512xf32>
    %151 = arith.addf %150, %35 : vector<6x512xf32>
    %152 = arith.mulf %151, %151 : vector<6x512xf32>
    %cst_49 = arith.constant dense<0.000000e+00> : vector<6xf32>
    %153 = vector.multi_reduction <add>, %152, %cst_49 [1] : vector<6x512xf32> to vector<6xf32>
    %154 = vector.shape_cast %153 : vector<6xf32> to vector<6x1xf32>
    %cst_50 = arith.constant 9.99999993E-9 : f32
    %155 = vector.broadcast %cst_50 : f32 to vector<6x1xf32>
    %156 = arith.addf %154, %155 : vector<6x1xf32>
    %157 = math.rsqrt %156 : vector<6x1xf32>
    %158 = vector.broadcast %157 : vector<6x1xf32> to vector<6x512xf32>
    %159 = arith.mulf %151, %158 : vector<6x512xf32>
    %160 = tpu.transpose %37, [1, 0] : vector<6x512xf32> -> vector<512x6xf32>
    %cst_51 = arith.constant dense<0.000000e+00> : vector<6x6xf32>
    %161 = tpu.matmul %35, %160, %cst_51 {dimension_numbers = #tpu.dot_dimension_numbers<[1], [0], [0], [1], [0, 0, 1, 1], [], []>} : vector<6x512xf32>, vector<512x6xf32>, vector<6x6xf32> -> vector<6x6xf32>
    %cst_52 = arith.constant 0.0441941731 : f32
    %162 = vector.broadcast %cst_52 : f32 to vector<6x6xf32>
    %163 = arith.mulf %161, %162 : vector<6x6xf32>
    %cst_53 = arith.constant dense<0xFF800000> : vector<6xf32>
    %164 = vector.multi_reduction <maximumf>, %163, %cst_53 [1] : vector<6x6xf32> to vector<6xf32>
    %165 = vector.shape_cast %164 : vector<6xf32> to vector<6x1xf32>
    %166 = vector.broadcast %165 : vector<6x1xf32> to vector<6x6xf32>
    %167 = arith.subf %163, %166 : vector<6x6xf32>
    %168 = math.exp %167 : vector<6x6xf32>
    %cst_54 = arith.constant dense<0.000000e+00> : vector<6xf32>
    %169 = vector.multi_reduction <add>, %168, %cst_54 [1] : vector<6x6xf32> to vector<6xf32>
    %170 = vector.shape_cast %169 : vector<6xf32> to vector<6x1xf32>
    %171 = tpu.reciprocal %170 {approx = true} : vector<6x1xf32> -> vector<6x1xf32>
    %172 = vector.broadcast %171 : vector<6x1xf32> to vector<6x6xf32>
    %173 = arith.mulf %168, %172 : vector<6x6xf32>
    %cst_55 = arith.constant dense<0.000000e+00> : vector<6x512xf32>
    %174 = tpu.matmul %173, %37, %cst_55 {dimension_numbers = #tpu.dot_dimension_numbers<[1], [0], [0], [1], [0, 0, 1, 1], [], []>} : vector<6x6xf32>, vector<6x512xf32>, vector<6x512xf32> -> vector<6x512xf32>
    %175 = arith.addf %174, %37 : vector<6x512xf32>
    %176 = arith.mulf %175, %175 : vector<6x512xf32>
    %cst_56 = arith.constant dense<0.000000e+00> : vector<6xf32>
    %177 = vector.multi_reduction <add>, %176, %cst_56 [1] : vector<6x512xf32> to vector<6xf32>
    %178 = vector.shape_cast %177 : vector<6xf32> to vector<6x1xf32>
    %cst_57 = arith.constant 9.99999993E-9 : f32
    %179 = vector.broadcast %cst_57 : f32 to vector<6x1xf32>
    %180 = arith.addf %178, %179 : vector<6x1xf32>
    %181 = math.rsqrt %180 : vector<6x1xf32>
    %182 = vector.broadcast %181 : vector<6x1xf32> to vector<6x512xf32>
    %183 = arith.mulf %175, %182 : vector<6x512xf32>
    %184 = tpu.transpose %39, [1, 0] : vector<6x512xf32> -> vector<512x6xf32>
    %cst_58 = arith.constant dense<0.000000e+00> : vector<6x6xf32>
    %185 = tpu.matmul %37, %184, %cst_58 {dimension_numbers = #tpu.dot_dimension_numbers<[1], [0], [0], [1], [0, 0, 1, 1], [], []>} : vector<6x512xf32>, vector<512x6xf32>, vector<6x6xf32> -> vector<6x6xf32>
    %cst_59 = arith.constant 0.0441941731 : f32
    %186 = vector.broadcast %cst_59 : f32 to vector<6x6xf32>
    %187 = arith.mulf %185, %186 : vector<6x6xf32>
    %cst_60 = arith.constant dense<0xFF800000> : vector<6xf32>
    %188 = vector.multi_reduction <maximumf>, %187, %cst_60 [1] : vector<6x6xf32> to vector<6xf32>
    %189 = vector.shape_cast %188 : vector<6xf32> to vector<6x1xf32>
    %190 = vector.broadcast %189 : vector<6x1xf32> to vector<6x6xf32>
    %191 = arith.subf %187, %190 : vector<6x6xf32>
    %192 = math.exp %191 : vector<6x6xf32>
    %cst_61 = arith.constant dense<0.000000e+00> : vector<6xf32>
    %193 = vector.multi_reduction <add>, %192, %cst_61 [1] : vector<6x6xf32> to vector<6xf32>
    %194 = vector.shape_cast %193 : vector<6xf32> to vector<6x1xf32>
    %195 = tpu.reciprocal %194 {approx = true} : vector<6x1xf32> -> vector<6x1xf32>
    %196 = vector.broadcast %195 : vector<6x1xf32> to vector<6x6xf32>
    %197 = arith.mulf %192, %196 : vector<6x6xf32>
    %cst_62 = arith.constant dense<0.000000e+00> : vector<6x512xf32>
    %198 = tpu.matmul %197, %39, %cst_62 {dimension_numbers = #tpu.dot_dimension_numbers<[1], [0], [0], [1], [0, 0, 1, 1], [], []>} : vector<6x6xf32>, vector<6x512xf32>, vector<6x512xf32> -> vector<6x512xf32>
    %199 = arith.addf %198, %39 : vector<6x512xf32>
    %200 = arith.mulf %199, %199 : vector<6x512xf32>
    %cst_63 = arith.constant dense<0.000000e+00> : vector<6xf32>
    %201 = vector.multi_reduction <add>, %200, %cst_63 [1] : vector<6x512xf32> to vector<6xf32>
    %202 = vector.shape_cast %201 : vector<6xf32> to vector<6x1xf32>
    %cst_64 = arith.constant 9.99999993E-9 : f32
    %203 = vector.broadcast %cst_64 : f32 to vector<6x1xf32>
    %204 = arith.addf %202, %203 : vector<6x1xf32>
    %205 = math.rsqrt %204 : vector<6x1xf32>
    %206 = vector.broadcast %205 : vector<6x1xf32> to vector<6x512xf32>
    %207 = arith.mulf %199, %206 : vector<6x512xf32>
    %208 = vector.extract_strided_slice %2 {offsets = [0, 0, 0], sizes = [1, 2, 512], strides = [1, 1, 1]} : vector<3x2x512xf32> to vector<1x2x512xf32>
    %209 = vector.shape_cast %208 : vector<1x2x512xf32> to vector<2x512xf32>
    %210 = arith.mulf %209, %209 : vector<2x512xf32>
    %cst_65 = arith.constant dense<0.000000e+00> : vector<2xf32>
    %211 = vector.multi_reduction <add>, %210, %cst_65 [1] : vector<2x512xf32> to vector<2xf32>
    %212 = vector.shape_cast %211 : vector<2xf32> to vector<2x1xf32>
    %cst_66 = arith.constant 9.99999993E-9 : f32
    %213 = vector.broadcast %cst_66 : f32 to vector<2x1xf32>
    %214 = arith.addf %212, %213 : vector<2x1xf32>
    %215 = math.rsqrt %214 : vector<2x1xf32>
    %216 = vector.broadcast %215 : vector<2x1xf32> to vector<2x512xf32>
    %217 = arith.mulf %209, %216 : vector<2x512xf32>
    %218 = vector.extract_strided_slice %2 {offsets = [1, 0, 0], sizes = [1, 2, 512], strides = [1, 1, 1]} : vector<3x2x512xf32> to vector<1x2x512xf32>
    %219 = vector.shape_cast %218 : vector<1x2x512xf32> to vector<2x512xf32>
    %220 = arith.mulf %219, %219 : vector<2x512xf32>
    %cst_67 = arith.constant dense<0.000000e+00> : vector<2xf32>
    %221 = vector.multi_reduction <add>, %220, %cst_67 [1] : vector<2x512xf32> to vector<2xf32>
    %222 = vector.shape_cast %221 : vector<2xf32> to vector<2x1xf32>
    %cst_68 = arith.constant 9.99999993E-9 : f32
    %223 = vector.broadcast %cst_68 : f32 to vector<2x1xf32>
    %224 = arith.addf %222, %223 : vector<2x1xf32>
    %225 = math.rsqrt %224 : vector<2x1xf32>
    %226 = vector.broadcast %225 : vector<2x1xf32> to vector<2x512xf32>
    %227 = arith.mulf %219, %226 : vector<2x512xf32>
    %228 = vector.extract_strided_slice %2 {offsets = [2, 0, 0], sizes = [1, 2, 512], strides = [1, 1, 1]} : vector<3x2x512xf32> to vector<1x2x512xf32>
    %229 = vector.shape_cast %228 : vector<1x2x512xf32> to vector<2x512xf32>
    %230 = arith.mulf %229, %229 : vector<2x512xf32>
    %cst_69 = arith.constant dense<0.000000e+00> : vector<2xf32>
    %231 = vector.multi_reduction <add>, %230, %cst_69 [1] : vector<2x512xf32> to vector<2xf32>
    %232 = vector.shape_cast %231 : vector<2xf32> to vector<2x1xf32>
    %cst_70 = arith.constant 9.99999993E-9 : f32
    %233 = vector.broadcast %cst_70 : f32 to vector<2x1xf32>
    %234 = arith.addf %232, %233 : vector<2x1xf32>
    %235 = math.rsqrt %234 : vector<2x1xf32>
    %236 = vector.broadcast %235 : vector<2x1xf32> to vector<2x512xf32>
    %237 = arith.mulf %229, %236 : vector<2x512xf32>
    %238 = tpu.concatenate %217, %217, %217, %227, %227, %227, %237, %237, %237 in 1 : vector<2x512xf32>, vector<2x512xf32>, vector<2x512xf32>, vector<2x512xf32>, vector<2x512xf32>, vector<2x512xf32>, vector<2x512xf32>, vector<2x512xf32>, vector<2x512xf32> -> vector<2x4608xf32>
    %239 = tpu.concatenate %63, %87, %111, %111, %135, %159, %159, %183, %207 in 1 : vector<6x512xf32>, vector<6x512xf32>, vector<6x512xf32>, vector<6x512xf32>, vector<6x512xf32>, vector<6x512xf32>, vector<6x512xf32>, vector<6x512xf32>, vector<6x512xf32> -> vector<6x4608xf32>
    %240 = tpu.transpose %239, [1, 0] : vector<6x4608xf32> -> vector<4608x6xf32>
    %cst_71 = arith.constant dense<0.000000e+00> : vector<2x6xf32>
    %241 = tpu.matmul %238, %240, %cst_71 {dimension_numbers = #tpu.dot_dimension_numbers<[1], [0], [0], [1], [0, 0, 1, 1], [], []>} : vector<2x4608xf32>, vector<4608x6xf32>, vector<2x6xf32> -> vector<2x6xf32>
    %cst_72 = arith.constant 0.111111112 : f32
    %242 = vector.broadcast %cst_72 : f32 to vector<2x6xf32>
    %243 = arith.mulf %241, %242 : vector<2x6xf32>
    %c0_73 = arith.constant 0 : index
    %c0_74 = arith.constant 0 : index
    %244 = vector.load %arg3[%c0_73, %c0_74] : memref<2x6xf32, #tpu.memory_space<vmem>>, vector<2x6xf32>
    tpu.vector_store %arg3[%c0_73, %c0_74], %243 {strides = array<i32>} : memref<2x6xf32, #tpu.memory_space<vmem>>, vector<2x6xf32>,
    return
  }
}

</mosaic_0001>

<llo_original>
// kernel: tpu_custom_call.1
$region0: #{tpu_custom_call.1}
  #allocation0 [shape = 'u32[]', space=smem, size = 0x4, offset = 0x4, fixed_abs, tag = 'smem constant byte address 0x4 - core index']
  #allocation1 [shape = 'u32[144,128]{1,0:T(1,128)}', space=vmem, size = 0x12000, scoped, tag = 'internal scratch']
  %s0 = inlined_call_operand.hbm [shape: f32[2,16,512], index: 0, kind: input, shape index: {}]
  %s1 = inlined_call_operand.hbm [shape: f32[6,8,512], index: 1, kind: input, shape index: {}]
  %s2 = inlined_call_operand.hbm [shape: f32[3,2,512], index: 2, kind: input, shape index: {}]
  %s3 = inlined_call_operand.hbm [shape: f32[2,6], index: 3, kind: output, shape index: {0}]
  %s4 = inlined_call_operand.vmem [shape: f32[6,2], index: 4, kind: output, shape index: {1}]
  %5 = xla_tuple %s3, %s4
  %s6 = sld [smem:[#allocation0]]
  $region42: #{tpu_custom_call.1} parent=0
    _
  %s8 = ssub.s32 1, %s6
  %s9 = scalar_select 0, %s8, %s6
  $region1: #{tpu_custom_call.1} parent=0
    #allocation2 [shape = 'u8[65536]{0}', space=vmem, size = 0x10000, scoped, tag = 'input window, operand 0, single buffered']
    #allocation3 [shape = 's32[1]{0}', space=sflag, size = 0x4, scoped, tag = 'scoped memory for tpu_custom_call.1']
    #allocation4 [shape = 's32[1]{0}', space=sflag, size = 0x4, scoped, tag = 'scoped memory for tpu_custom_call.1']
    #allocation5 [shape = 'u8[98304]{0}', space=vmem, size = 0x18000, scoped, tag = 'input window, operand 1, single buffered']
    #allocation6 [shape = 's32[1]{0}', space=sflag, size = 0x4, scoped, tag = 'scoped memory for tpu_custom_call.1']
    #allocation7 [shape = 'u8[12288]{0}', space=vmem, size = 0x3000, scoped, tag = 'input window, operand 2, single buffered']
    #allocation8 [shape = 'u8[1024]{0}', space=vmem, size = 0x400, scoped, tag = 'output window, operand 0, single buffered']
    %10 = vsyncpa [#allocation3], 0
    %11 = vsyncpa [#allocation6], 0
    %12 = vsyncpa [#allocation4], 0
    // Predicated region
    $region2: #{tpu_custom_call.1} parent=1 // pred_check
      _
    $region3: #{tpu_custom_call.1} parent=1 // pred_check_branch
      %14 = sbr.rel (0) target = $region5
    $region4: #{tpu_custom_call.1} parent=1 // pred_region
      %s16 = ssub.s32 2048, 2048
      %17 = vsyncadd [#allocation3], %s16
      %s18 = sshll.u32 [#allocation2], 4
      %s19 = int_to_ptr.vmem [resolvable:$true] %s18
      %24 = dma.hbm_to_vmem [thread:$0]  %s0, 2048, %s19, [#allocation3], 512, 512, 32
    $region5: #{tpu_custom_call.1} parent=1 // pred_fallthru
      _
    // Predicated region
    $region6: #{tpu_custom_call.1} parent=1 // pred_check
      _
    $region7: #{tpu_custom_call.1} parent=1 // pred_check_branch
      %26 = sbr.rel (0) target = $region9
    $region8: #{tpu_custom_call.1} parent=1 // pred_region
      %s28 = ssub.s32 3072, 3072
      %29 = vsyncadd [#allocation6], %s28
      %s30 = sshll.u32 [#allocation5], 4
      %s31 = int_to_ptr.vmem [resolvable:$true] %s30
      %36 = dma.hbm_to_vmem [thread:$0]  %s1, 3072, %s31, [#allocation6], 512, 512, 32
    $region9: #{tpu_custom_call.1} parent=1 // pred_fallthru
      _
    // Predicated region
    $region10: #{tpu_custom_call.1} parent=1 // pred_check
      _
    $region11: #{tpu_custom_call.1} parent=1 // pred_check_branch
      %38 = sbr.rel (0) target = $region13
    $region12: #{tpu_custom_call.1} parent=1 // pred_region
      %s40 = ssub.s32 384, 384
      %41 = vsyncadd [#allocation6], %s40
      %s42 = sshll.u32 [#allocation7], 4
      %s43 = int_to_ptr.vmem [resolvable:$true] %s42
      %48 = dma.hbm_to_vmem [thread:$0]  %s2, 384, %s43, [#allocation6], 128, 128, 8
    $region13: #{tpu_custom_call.1} parent=1 // pred_fallthru
      _
    // Predicated region
    $region14: #{tpu_custom_call.1} parent=1 // pred_check
      _
    $region15: #{tpu_custom_call.1} parent=1 // pred_check_branch
      %50 = sbr.rel (0) target = $region17
    $region16: #{tpu_custom_call.1} parent=1 // pred_region
      %51 = dma.done [#allocation3], 2048
    $region17: #{tpu_custom_call.1} parent=1 // pred_fallthru
      _
    // Predicated region
    $region18: #{tpu_custom_call.1} parent=1 // pred_check
      _
    $region19: #{tpu_custom_call.1} parent=1 // pred_check_branch
      %53 = sbr.rel (0) target = $region21
    $region20: #{tpu_custom_call.1} parent=1 // pred_region
      %54 = dma.done [#allocation6], 3072
    $region21: #{tpu_custom_call.1} parent=1 // pred_fallthru
      _
    // Predicated region
    $region22: #{tpu_custom_call.1} parent=1 // pred_check
      _
    $region23: #{tpu_custom_call.1} parent=1 // pred_check_branch
      %56 = sbr.rel (0) target = $region25
    $region24: #{tpu_custom_call.1} parent=1 // pred_region
      %57 = dma.done [#allocation6], 384
    $region25: #{tpu_custom_call.1} parent=1 // pred_fallthru
      _
    %v58 = vld [vmem:[#allocation2] sm:$0xff]
    %v59 = vld [vmem:[#allocation2 + $0x8] sm:$0xff]
    %v60 = vld [vmem:[#allocation2 + $0x10] sm:$0xff]
    %v61 = vld [vmem:[#allocation2 + $0x18] sm:$0xff]
    %v62 = vld [vmem:[#allocation2 + $0x20] sm:$0xff]
    %v63 = vld [vmem:[#allocation2 + $0x28] sm:$0xff]
    %v64 = vld [vmem:[#allocation2 + $0x30] sm:$0xff]
    %v65 = vld [vmem:[#allocation2 + $0x38] sm:$0xff]
    %v66 = vld [vmem:[#allocation2 + $0x40] sm:$0xff]
    %v67 = vld [vmem:[#allocation2 + $0x48] sm:$0xff]
    %v68 = vld [vmem:[#allocation2 + $0x50] sm:$0xff]
    %v69 = vld [vmem:[#allocation2 + $0x58] sm:$0xff]
    %v70 = vld [vmem:[#allocation2 + $0x60] sm:$0xff]
    %v71 = vld [vmem:[#allocation2 + $0x68] sm:$0xff]
    %v72 = vld [vmem:[#allocation2 + $0x70] sm:$0xff]
    %v73 = vld [vmem:[#allocation2 + $0x78] sm:$0xff]
    %v74 = vld [vmem:[#allocation5] sm:$0xff]
    %v75 = vld [vmem:[#allocation5 + $0x8] sm:$0xff]
    %v76 = vld [vmem:[#allocation5 + $0x10] sm:$0xff]
    %v77 = vld [vmem:[#allocation5 + $0x18] sm:$0xff]
    %v78 = vld [vmem:[#allocation5 + $0x20] sm:$0xff]
    %v79 = vld [vmem:[#allocation5 + $0x28] sm:$0xff]
    %v80 = vld [vmem:[#allocation5 + $0x30] sm:$0xff]
    %v81 = vld [vmem:[#allocation5 + $0x38] sm:$0xff]
    %v82 = vld [vmem:[#allocation5 + $0x40] sm:$0xff]
    %v83 = vld [vmem:[#allocation5 + $0x48] sm:$0xff]
    %v84 = vld [vmem:[#allocation5 + $0x50] sm:$0xff]
    %v85 = vld [vmem:[#allocation5 + $0x58] sm:$0xff]
    %v86 = vld [vmem:[#allocation5 + $0x60] sm:$0xff]
    %v87 = vld [vmem:[#allocation5 + $0x68] sm:$0xff]
    %v88 = vld [vmem:[#allocation5 + $0x70] sm:$0xff]
    %v89 = vld [vmem:[#allocation5 + $0x78] sm:$0xff]
    %v90 = vld [vmem:[#allocation5 + $0x80] sm:$0xff]
    %v91 = vld [vmem:[#allocation5 + $0x88] sm:$0xff]
    %v92 = vld [vmem:[#allocation5 + $0x90] sm:$0xff]
    %v93 = vld [vmem:[#allocation5 + $0x98] sm:$0xff]
    %v94 = vld [vmem:[#allocation5 + $0xa0] sm:$0xff]
    %v95 = vld [vmem:[#allocation5 + $0xa8] sm:$0xff]
    %v96 = vld [vmem:[#allocation5 + $0xb0] sm:$0xff]
    %v97 = vld [vmem:[#allocation5 + $0xb8] sm:$0xff]
    %v98 = vld [vmem:[#allocation7] sm:$0xff]
    %v99 = vld [vmem:[#allocation7 + $0x8] sm:$0xff]
    %v100 = vld [vmem:[#allocation7 + $0x10] sm:$0xff]
    %v101 = vadd.f32 %v58, %v62
    %v102 = vrot.slane %v101, 4
    %v103 = vadd.f32 %v101, %v102
    %v104 = vrot.slane %v103, 2
    %v105 = vadd.f32 %v103, %v104
    %v106 = vrot.slane %v105, 1
    %v107 = vadd.f32 %v105, %v106
    %v108 = vadd.f32 %v59, %v63
    %v109 = vrot.slane %v108, 4
    %v110 = vadd.f32 %v108, %v109
    %v111 = vrot.slane %v110, 2
    %v112 = vadd.f32 %v110, %v111
    %v113 = vrot.slane %v112, 1
    %v114 = vadd.f32 %v112, %v113
    %v115 = vadd.f32 %v60, %v64
    %v116 = vrot.slane %v115, 4
    %v117 = vadd.f32 %v115, %v116
    %v118 = vrot.slane %v117, 2
    %v119 = vadd.f32 %v117, %v118
    %v120 = vrot.slane %v119, 1
    %v121 = vadd.f32 %v119, %v120
    %v122 = vadd.f32 %v61, %v65
    %v123 = vrot.slane %v122, 4
    %v124 = vadd.f32 %v122, %v123
    %v125 = vrot.slane %v124, 2
    %v126 = vadd.f32 %v124, %v125
    %v127 = vrot.slane %v126, 1
    %v128 = vadd.f32 %v126, %v127
    %v129 = vadd.f32 %v66, %v70
    %v130 = vrot.slane %v129, 4
    %v131 = vadd.f32 %v129, %v130
    %v132 = vrot.slane %v131, 2
    %v133 = vadd.f32 %v131, %v132
    %v134 = vrot.slane %v133, 1
    %v135 = vadd.f32 %v133, %v134
    %v136 = vadd.f32 %v67, %v71
    %v137 = vrot.slane %v136, 4
    %v138 = vadd.f32 %v136, %v137
    %v139 = vrot.slane %v138, 2
    %v140 = vadd.f32 %v138, %v139
    %v141 = vrot.slane %v140, 1
    %v142 = vadd.f32 %v140, %v141
    %v143 = vadd.f32 %v68, %v72
    %v144 = vrot.slane %v143, 4
    %v145 = vadd.f32 %v143, %v144
    %v146 = vrot.slane %v145, 2
    %v147 = vadd.f32 %v145, %v146
    %v148 = vrot.slane %v147, 1
    %v149 = vadd.f32 %v147, %v148
    %v150 = vadd.f32 %v69, %v73
    %v151 = vrot.slane %v150, 4
    %v152 = vadd.f32 %v150, %v151
    %v153 = vrot.slane %v152, 2
    %v154 = vadd.f32 %v152, %v153
    %v155 = vrot.slane %v154, 1
    %v156 = vadd.f32 %v154, %v155
    %v157 = vrot.slane %v74, 4
    %v158 = vadd.f32 %v74, %v157
    %v159 = vrot.slane %v158, 2
    %v160 = vadd.f32 %v158, %v159
    %v161 = vrot.slane %v160, 1
    %v162 = vadd.f32 %v160, %v161
    %v163 = vrot.slane %v75, 4
    %v164 = vadd.f32 %v75, %v163
    %v165 = vrot.slane %v164, 2
    %v166 = vadd.f32 %v164, %v165
    %v167 = vrot.slane %v166, 1
    %v168 = vadd.f32 %v166, %v167
    %v169 = vrot.slane %v76, 4
    %v170 = vadd.f32 %v76, %v169
    %v171 = vrot.slane %v170, 2
    %v172 = vadd.f32 %v170, %v171
    %v173 = vrot.slane %v172, 1
    %v174 = vadd.f32 %v172, %v173
    %v175 = vrot.slane %v77, 4
    %v176 = vadd.f32 %v77, %v175
    %v177 = vrot.slane %v176, 2
    %v178 = vadd.f32 %v176, %v177
    %v179 = vrot.slane %v178, 1
    %v180 = vadd.f32 %v178, %v179
    %v181 = vrot.slane %v78, 4
    %v182 = vadd.f32 %v78, %v181
    %v183 = vrot.slane %v182, 2
    %v184 = vadd.f32 %v182, %v183
    %v185 = vrot.slane %v184, 1
    %v186 = vadd.f32 %v184, %v185
    %v187 = vrot.slane %v79, 4
    %v188 = vadd.f32 %v79, %v187
    %v189 = vrot.slane %v188, 2
    %v190 = vadd.f32 %v188, %v189
    %v191 = vrot.slane %v190, 1
    %v192 = vadd.f32 %v190, %v191
    %v193 = vrot.slane %v80, 4
    %v194 = vadd.f32 %v80, %v193
    %v195 = vrot.slane %v194, 2
    %v196 = vadd.f32 %v194, %v195
    %v197 = vrot.slane %v196, 1
    %v198 = vadd.f32 %v196, %v197
    %v199 = vrot.slane %v81, 4
    %v200 = vadd.f32 %v81, %v199
    %v201 = vrot.slane %v200, 2
    %v202 = vadd.f32 %v200, %v201
    %v203 = vrot.slane %v202, 1
    %v204 = vadd.f32 %v202, %v203
    %v205 = vrot.slane %v82, 4
    %v206 = vadd.f32 %v82, %v205
    %v207 = vrot.slane %v206, 2
    %v208 = vadd.f32 %v206, %v207
    %v209 = vrot.slane %v208, 1
    %v210 = vadd.f32 %v208, %v209
    %v211 = vrot.slane %v83, 4
    %v212 = vadd.f32 %v83, %v211
    %v213 = vrot.slane %v212, 2
    %v214 = vadd.f32 %v212, %v213
    %v215 = vrot.slane %v214, 1
    %v216 = vadd.f32 %v214, %v215
    %v217 = vrot.slane %v84, 4
    %v218 = vadd.f32 %v84, %v217
    %v219 = vrot.slane %v218, 2
    %v220 = vadd.f32 %v218, %v219
    %v221 = vrot.slane %v220, 1
    %v222 = vadd.f32 %v220, %v221
    %v223 = vrot.slane %v85, 4
    %v224 = vadd.f32 %v85, %v223
    %v225 = vrot.slane %v224, 2
    %v226 = vadd.f32 %v224, %v225
    %v227 = vrot.slane %v226, 1
    %v228 = vadd.f32 %v226, %v227
    %v229 = vrot.slane %v86, 4
    %v230 = vadd.f32 %v86, %v229
    %v231 = vrot.slane %v230, 2
    %v232 = vadd.f32 %v230, %v231
    %v233 = vrot.slane %v232, 1
    %v234 = vadd.f32 %v232, %v233
    %v235 = vrot.slane %v87, 4
    %v236 = vadd.f32 %v87, %v235
    %v237 = vrot.slane %v236, 2
    %v238 = vadd.f32 %v236, %v237
    %v239 = vrot.slane %v238, 1
    %v240 = vadd.f32 %v238, %v239
    %v241 = vrot.slane %v88, 4
    %v242 = vadd.f32 %v88, %v241
    %v243 = vrot.slane %v242, 2
    %v244 = vadd.f32 %v242, %v243
    %v245 = vrot.slane %v244, 1
    %v246 = vadd.f32 %v244, %v245
    %v247 = vrot.slane %v89, 4
    %v248 = vadd.f32 %v89, %v247
    %v249 = vrot.slane %v248, 2
    %v250 = vadd.f32 %v248, %v249
    %v251 = vrot.slane %v250, 1
    %v252 = vadd.f32 %v250, %v251
    %v253 = vrot.slane %v90, 4
    %v254 = vadd.f32 %v90, %v253
    %v255 = vrot.slane %v254, 2
    %v256 = vadd.f32 %v254, %v255
    %v257 = vrot.slane %v256, 1
    %v258 = vadd.f32 %v256, %v257
    %v259 = vrot.slane %v91, 4
    %v260 = vadd.f32 %v91, %v259
    %v261 = vrot.slane %v260, 2
    %v262 = vadd.f32 %v260, %v261
    %v263 = vrot.slane %v262, 1
    %v264 = vadd.f32 %v262, %v263
    %v265 = vrot.slane %v92, 4
    %v266 = vadd.f32 %v92, %v265
    %v267 = vrot.slane %v266, 2
    %v268 = vadd.f32 %v266, %v267
    %v269 = vrot.slane %v268, 1
    %v270 = vadd.f32 %v268, %v269
    %v271 = vrot.slane %v93, 4
    %v272 = vadd.f32 %v93, %v271
    %v273 = vrot.slane %v272, 2
    %v274 = vadd.f32 %v272, %v273
    %v275 = vrot.slane %v274, 1
    %v276 = vadd.f32 %v274, %v275
    %v277 = vrot.slane %v94, 4
    %v278 = vadd.f32 %v94, %v277
    %v279 = vrot.slane %v278, 2
    %v280 = vadd.f32 %v278, %v279
    %v281 = vrot.slane %v280, 1
    %v282 = vadd.f32 %v280, %v281
    %v283 = vrot.slane %v95, 4
    %v284 = vadd.f32 %v95, %v283
    %v285 = vrot.slane %v284, 2
    %v286 = vadd.f32 %v284, %v285
    %v287 = vrot.slane %v286, 1
    %v288 = vadd.f32 %v286, %v287
    %v289 = vrot.slane %v96, 4
    %v290 = vadd.f32 %v96, %v289
    %v291 = vrot.slane %v290, 2
    %v292 = vadd.f32 %v290, %v291
    %v293 = vrot.slane %v292, 1
    %v294 = vadd.f32 %v292, %v293
    %v295 = vrot.slane %v97, 4
    %v296 = vadd.f32 %v97, %v295
    %v297 = vrot.slane %v296, 2
    %v298 = vadd.f32 %v296, %v297
    %v299 = vrot.slane %v298, 1
    %v300 = vadd.f32 %v298, %v299
    %v301 = vmul.f32 %v162, %v162
    %v302 = vmul.f32 %v168, %v168
    %v303 = vmul.f32 %v174, %v174
    %v304 = vmul.f32 %v180, %v180
    %v305 = vmul.f32 %v186, %v186
    %v306 = vmul.f32 %v192, %v192
    %v307 = vmul.f32 %v198, %v198
    %v308 = vmul.f32 %v204, %v204
    %v309 = vmul.f32 %v210, %v210
    %v310 = vmul.f32 %v216, %v216
    %v311 = vmul.f32 %v222, %v222
    %v312 = vmul.f32 %v228, %v228
    %v313 = vmul.f32 %v234, %v234
    %v314 = vmul.f32 %v240, %v240
    %v315 = vmul.f32 %v246, %v246
    %v316 = vmul.f32 %v252, %v252
    %v317 = vmul.f32 %v258, %v258
    %v318 = vmul.f32 %v264, %v264
    %v319 = vmul.f32 %v270, %v270
    %v320 = vmul.f32 %v276, %v276
    %v321 = vmul.f32 %v282, %v282
    %v322 = vmul.f32 %v288, %v288
    %v323 = vmul.f32 %v294, %v294
    %v324 = vmul.f32 %v300, %v300
    %vm349 = vcmask 1041409
    %v350 = vsel %vm349, %v305, %v301
    %vm351 = vcmask 1042434
    %v352 = vsel %vm351, %v309, %v350
    %vm353 = vcmask 1043459
    %v354 = vsel %vm353, %v313, %v352
    %vm355 = vcmask 1044484
    %v356 = vsel %vm355, %v317, %v354
    %vm357 = vcmask 1045509
    %v358 = vsel %vm357, %v321, %v356
    %v359 = vsel %vm349, %v306, %v302
    %v360 = vsel %vm351, %v310, %v359
    %v361 = vsel %vm353, %v314, %v360
    %v362 = vsel %vm355, %v318, %v361
    %v363 = vsel %vm357, %v322, %v362
    %v364 = vsel %vm349, %v307, %v303
    %v365 = vsel %vm351, %v311, %v364
    %v366 = vsel %vm353, %v315, %v365
    %v367 = vsel %vm355, %v319, %v366
    %v368 = vsel %vm357, %v323, %v367
    %v369 = vsel %vm349, %v308, %v304
    %v370 = vsel %vm351, %v312, %v369
    %v371 = vsel %vm353, %v316, %v370
    %v372 = vsel %vm355, %v320, %v371
    %v373 = vsel %vm357, %v324, %v372
    %vm378 = vcmask 1045504
    %v379 = vsel %vm378, %v358, 0.0
    %v380 = vsel %vm378, %v363, 0.0
    %v381 = vadd.f32 %v379, %v380
    %v382 = vsel %vm378, %v368, 0.0
    %v383 = vadd.f32 %v381, %v382
    %v384 = vsel %vm378, %v373, 0.0
    %v385 = vadd.f32 %v383, %v384
    %386 = vadd.xlane.f32.xlu0 %v385
    %v387 = vpop.xlane.xlu0 %386
    %v388 = vadd.f32 %v387, 1e-08
    %v389 = vrsqrt.pop %v388
    %v391 = vrot.slane %v389, 1
    %v392 = vrot.slane %v389, 2
    %v393 = vrot.slane %v389, 3
    %v394 = vrot.slane %v389, 4
    %v395 = vrot.slane %v389, 5
    %v402 = vmul.f32 %v162, %v389
    %v403 = vmul.f32 %v168, %v389
    %v404 = vmul.f32 %v174, %v389
    %v405 = vmul.f32 %v180, %v389
    %v406 = vmul.f32 %v186, %v391
    %v407 = vmul.f32 %v192, %v391
    %v408 = vmul.f32 %v198, %v391
    %v409 = vmul.f32 %v204, %v391
    %v410 = vmul.f32 %v210, %v392
    %v411 = vmul.f32 %v216, %v392
    %v412 = vmul.f32 %v222, %v392
    %v413 = vmul.f32 %v228, %v392
    %v414 = vmul.f32 %v234, %v393
    %v415 = vmul.f32 %v240, %v393
    %v416 = vmul.f32 %v246, %v393
    %v417 = vmul.f32 %v252, %v393
    %v418 = vmul.f32 %v258, %v394
    %v419 = vmul.f32 %v264, %v394
    %v420 = vmul.f32 %v270, %v394
    %v421 = vmul.f32 %v276, %v394
    %v422 = vmul.f32 %v282, %v395
    %v423 = vmul.f32 %v288, %v395
    %v424 = vmul.f32 %v294, %v395
    %v425 = vmul.f32 %v300, %v395
    %v426 = vmul.f32 %v107, %v107
    %v427 = vmul.f32 %v114, %v114
    %v428 = vmul.f32 %v121, %v121
    %v429 = vmul.f32 %v128, %v128
    %v430 = vmul.f32 %v135, %v135
    %v431 = vmul.f32 %v142, %v142
    %v432 = vmul.f32 %v149, %v149
    %v433 = vmul.f32 %v156, %v156
    %v442 = vsel %vm349, %v430, %v426
    %v443 = vsel %vm349, %v431, %v427
    %v444 = vsel %vm349, %v432, %v428
    %v445 = vsel %vm349, %v433, %v429
    %vm450 = vcmask 1041408
    %v451 = vsel %vm450, %v442, 0.0
    %v452 = vsel %vm450, %v443, 0.0
    %v453 = vadd.f32 %v451, %v452
    %v454 = vsel %vm450, %v444, 0.0
    %v455 = vadd.f32 %v453, %v454
    %v456 = vsel %vm450, %v445, 0.0
    %v457 = vadd.f32 %v455, %v456
    %458 = vadd.xlane.f32.xlu0 %v457
    %v459 = vpop.xlane.xlu0 %458
    %v460 = vadd.f32 %v459, 1e-08
    %v461 = vrsqrt.pop %v460
    %v463 = vrot.slane %v461, 1
    %v466 = vmul.f32 %v107, %v461
    %v467 = vmul.f32 %v114, %v461
    %v468 = vmul.f32 %v121, %v461
    %v469 = vmul.f32 %v128, %v461
    %v470 = vmul.f32 %v135, %v463
    %v471 = vmul.f32 %v142, %v463
    %v472 = vmul.f32 %v149, %v463
    %v473 = vmul.f32 %v156, %v463
    %v498 = vrot.slane %v406, 7
    %v499 = vsel %vm349, %v498, %v402
    %v500 = vrot.slane %v410, 6
    %v501 = vsel %vm351, %v500, %v499
    %v502 = vrot.slane %v414, 5
    %v503 = vsel %vm353, %v502, %v501
    %v504 = vrot.slane %v418, 4
    %v505 = vsel %vm355, %v504, %v503
    %v506 = vrot.slane %v422, 3
    %v507 = vsel %vm357, %v506, %v505
    %v508 = vrot.slane %v407, 7
    %v509 = vsel %vm349, %v508, %v403
    %v510 = vrot.slane %v411, 6
    %v511 = vsel %vm351, %v510, %v509
    %v512 = vrot.slane %v415, 5
    %v513 = vsel %vm353, %v512, %v511
    %v514 = vrot.slane %v419, 4
    %v515 = vsel %vm355, %v514, %v513
    %v516 = vrot.slane %v423, 3
    %v517 = vsel %vm357, %v516, %v515
    %v518 = vrot.slane %v408, 7
    %v519 = vsel %vm349, %v518, %v404
    %v520 = vrot.slane %v412, 6
    %v521 = vsel %vm351, %v520, %v519
    %v522 = vrot.slane %v416, 5
    %v523 = vsel %vm353, %v522, %v521
    %v524 = vrot.slane %v420, 4
    %v525 = vsel %vm355, %v524, %v523
    %v526 = vrot.slane %v424, 3
    %v527 = vsel %vm357, %v526, %v525
    %v528 = vrot.slane %v409, 7
    %v529 = vsel %vm349, %v528, %v405
    %v530 = vrot.slane %v413, 6
    %v531 = vsel %vm351, %v530, %v529
    %v532 = vrot.slane %v417, 5
    %v533 = vsel %vm353, %v532, %v531
    %v534 = vrot.slane %v421, 4
    %v535 = vsel %vm355, %v534, %v533
    %v536 = vrot.slane %v425, 3
    %v537 = vsel %vm357, %v536, %v535
    %v550 = vrot.slane %v470, 7
    %v551 = vsel %vm349, %v550, %v466
    %v552 = vrot.slane %v471, 7
    %v553 = vsel %vm349, %v552, %v467
    %v554 = vrot.slane %v472, 7
    %v555 = vsel %vm349, %v554, %v468
    %v556 = vrot.slane %v473, 7
    %v557 = vsel %vm349, %v556, %v469
    %562 = vmatprep.subr.mxu0 %v553
    %563 = vmatpush1.xpose.msra.mxu0 %v551
    %564 = vmatprep.subr.mxu0 0.0
    %565 = vmatpush1.xpose.msra.mxu0 0.0
    %566 = vmatprep.subr.mxu0 0.0
    %567 = vmatpush1.xpose.msra.mxu0 0.0
    %568 = vmatprep.subr.mxu0 0.0
    %569 = vmatpush1.xpose.msra.mxu0 0.0
    %570 = vmatprep.subr.mxu0 0.0
    %571 = vmatpush1.xpose.msra.mxu0 0.0
    %572 = vmatprep.subr.mxu0 0.0
    %573 = vmatpush1.xpose.msra.mxu0 0.0
    %574 = vmatprep.subr.mxu0 0.0
    %575 = vmatpush1.xpose.msra.mxu0 0.0
    %576 = vmatprep.subr.mxu0 0.0
    %577 = vmatpush1.xpose.msra.mxu0 0.0
    %578 = vmatprep.subr.mxu0 0.0
    %579 = vmatpush1.xpose.msra.mxu0 0.0
    %580 = vmatprep.subr.mxu0 0.0
    %581 = vmatpush1.xpose.msra.mxu0 0.0
    %582 = vmatprep.subr.mxu0 0.0
    %583 = vmatpush1.xpose.msra.mxu0 0.0
    %584 = vmatprep.subr.mxu0 0.0
    %585 = vmatpush1.xpose.msra.mxu0 0.0
    %586 = vmatprep.subr.mxu0 0.0
    %587 = vmatpush1.xpose.msra.mxu0 0.0
    %588 = vmatprep.subr.mxu0 0.0
    %589 = vmatpush1.xpose.msra.mxu0 0.0
    %590 = vmatprep.subr.mxu0 0.0
    %591 = vmatpush1.xpose.msra.mxu0 0.0
    %592 = vmatprep.subr.mxu0 0.0
    %593 = vmatpush1.xpose.msra.mxu0 0.0
    %594 = vmatprep.subr.mxu0 0.0
    %595 = vmatpush1.xpose.msra.mxu0 0.0
    %596 = vmatprep.subr.mxu0 0.0
    %597 = vmatpush1.xpose.msra.mxu0 0.0
    %598 = vmatprep.subr.mxu0 0.0
    %599 = vmatpush1.xpose.msra.mxu0 0.0
    %600 = vmatprep.subr.mxu0 0.0
    %601 = vmatpush1.xpose.msra.mxu0 0.0
    %602 = vmatprep.subr.mxu0 0.0
    %603 = vmatpush1.xpose.msra.mxu0 0.0
    %604 = vmatprep.subr.mxu0 0.0
    %605 = vmatpush1.xpose.msra.mxu0 0.0
    %606 = vmatprep.subr.mxu0 0.0
    %607 = vmatpush1.xpose.msra.mxu0 0.0
    %608 = vmatprep.subr.mxu0 0.0
    %609 = vmatpush1.xpose.msra.mxu0 0.0
    %610 = vmatprep.subr.mxu0 0.0
    %611 = vmatpush1.xpose.msra.mxu0 0.0
    %612 = vmatprep.subr.mxu0 0.0
    %613 = vmatpush1.xpose.msra.mxu0 0.0
    %614 = vmatprep.subr.mxu0 0.0
    %615 = vmatpush1.xpose.msra.mxu0 0.0
    %616 = vmatprep.subr.mxu0 0.0
    %617 = vmatpush1.xpose.msra.mxu0 0.0
    %618 = vmatprep.subr.mxu0 0.0
    %619 = vmatpush1.xpose.msra.mxu0 0.0
    %620 = vmatprep.subr.mxu0 0.0
    %621 = vmatpush1.xpose.msra.mxu0 0.0
    %622 = vmatprep.subr.mxu0 0.0
    %623 = vmatpush1.xpose.msra.mxu0 0.0
    %624 = vmatprep.subr.mxu0 0.0
    %625 = vmatpush1.xpose.msra.mxu0 0.0
    %626 = vmatprep.mubr.f32.mxu0 %v517
    %627 = vmatmul.mubr.f32.gmra.mrb[0].mxu0 %v507
    %v628 = vpop.f32.mrb[0].mxu0
    %v629 = vadd.f32 0.0, %v628
    %v630 = vpop.f32.mrb[0].mxu0
    %631 = vdwg.mxu0
    %632 = vmatprep.subr.mxu0 %v557
    %633 = vmatpush1.xpose.msra.mxu0 %v555
    %634 = vmatprep.subr.mxu0 0.0
    %635 = vmatpush1.xpose.msra.mxu0 0.0
    %636 = vmatprep.subr.mxu0 0.0
    %637 = vmatpush1.xpose.msra.mxu0 0.0
    %638 = vmatprep.subr.mxu0 0.0
    %639 = vmatpush1.xpose.msra.mxu0 0.0
    %640 = vmatprep.subr.mxu0 0.0
    %641 = vmatpush1.xpose.msra.mxu0 0.0
    %642 = vmatprep.subr.mxu0 0.0
    %643 = vmatpush1.xpose.msra.mxu0 0.0
    %644 = vmatprep.subr.mxu0 0.0
    %645 = vmatpush1.xpose.msra.mxu0 0.0
    %646 = vmatprep.subr.mxu0 0.0
    %647 = vmatpush1.xpose.msra.mxu0 0.0
    %648 = vmatprep.subr.mxu0 0.0
    %649 = vmatpush1.xpose.msra.mxu0 0.0
    %650 = vmatprep.subr.mxu0 0.0
    %651 = vmatpush1.xpose.msra.mxu0 0.0
    %652 = vmatprep.subr.mxu0 0.0
    %653 = vmatpush1.xpose.msra.mxu0 0.0
    %654 = vmatprep.subr.mxu0 0.0
    %655 = vmatpush1.xpose.msra.mxu0 0.0
    %656 = vmatprep.subr.mxu0 0.0
    %657 = vmatpush1.xpose.msra.mxu0 0.0
    %658 = vmatprep.subr.mxu0 0.0
    %659 = vmatpush1.xpose.msra.mxu0 0.0
    %660 = vmatprep.subr.mxu0 0.0
    %661 = vmatpush1.xpose.msra.mxu0 0.0
    %662 = vmatprep.subr.mxu0 0.0
    %663 = vmatpush1.xpose.msra.mxu0 0.0
    %664 = vmatprep.subr.mxu0 0.0
    %665 = vmatpush1.xpose.msra.mxu0 0.0
    %666 = vmatprep.subr.mxu0 0.0
    %667 = vmatpush1.xpose.msra.mxu0 0.0
    %668 = vmatprep.subr.mxu0 0.0
    %669 = vmatpush1.xpose.msra.mxu0 0.0
    %670 = vmatprep.subr.mxu0 0.0
    %671 = vmatpush1.xpose.msra.mxu0 0.0
    %672 = vmatprep.subr.mxu0 0.0
    %673 = vmatpush1.xpose.msra.mxu0 0.0
    %674 = vmatprep.subr.mxu0 0.0
    %675 = vmatpush1.xpose.msra.mxu0 0.0
    %676 = vmatprep.subr.mxu0 0.0
    %677 = vmatpush1.xpose.msra.mxu0 0.0
    %678 = vmatprep.subr.mxu0 0.0
    %679 = vmatpush1.xpose.msra.mxu0 0.0
    %680 = vmatprep.subr.mxu0 0.0
    %681 = vmatpush1.xpose.msra.mxu0 0.0
    %682 = vmatprep.subr.mxu0 0.0
    %683 = vmatpush1.xpose.msra.mxu0 0.0
    %684 = vmatprep.subr.mxu0 0.0
    %685 = vmatpush1.xpose.msra.mxu0 0.0
    %686 = vmatprep.subr.mxu0 0.0
    %687 = vmatpush1.xpose.msra.mxu0 0.0
    %688 = vmatprep.subr.mxu0 0.0
    %689 = vmatpush1.xpose.msra.mxu0 0.0
    %690 = vmatprep.subr.mxu0 0.0
    %691 = vmatpush1.xpose.msra.mxu0 0.0
    %692 = vmatprep.subr.mxu0 0.0
    %693 = vmatpush1.xpose.msra.mxu0 0.0
    %694 = vmatprep.subr.mxu0 0.0
    %695 = vmatpush1.xpose.msra.mxu0 0.0
    %696 = vmatprep.mubr.f32.mxu0 %v537
    %697 = vmatmul.mubr.f32.gmra.mrb[0].mxu0 %v527
    %v698 = vpop.f32.mrb[0].mxu0
    %v699 = vadd.f32 %v629, %v698
    %v700 = vpop.f32.mrb[0].mxu0
    %701 = vdwg.mxu0
    %vm702 = vcmask 13312
    %703 = vst.msk [vmem:[%s4] sm:$0x3f] %vm702, %v699
    %v728 = vrot.slane %v78, 7
    %v729 = vsel %vm349, %v728, %v74
    %v730 = vrot.slane %v82, 6
    %v731 = vsel %vm351, %v730, %v729
    %v732 = vrot.slane %v86, 5
    %v733 = vsel %vm353, %v732, %v731
    %v734 = vrot.slane %v90, 4
    %v735 = vsel %vm355, %v734, %v733
    %v736 = vrot.slane %v94, 3
    %v737 = vsel %vm357, %v736, %v735
    %v738 = vrot.slane %v79, 7
    %v739 = vsel %vm349, %v738, %v75
    %v740 = vrot.slane %v83, 6
    %v741 = vsel %vm351, %v740, %v739
    %v742 = vrot.slane %v87, 5
    %v743 = vsel %vm353, %v742, %v741
    %v744 = vrot.slane %v91, 4
    %v745 = vsel %vm355, %v744, %v743
    %v746 = vrot.slane %v95, 3
    %v747 = vsel %vm357, %v746, %v745
    %v748 = vrot.slane %v80, 7
    %v749 = vsel %vm349, %v748, %v76
    %v750 = vrot.slane %v84, 6
    %v751 = vsel %vm351, %v750, %v749
    %v752 = vrot.slane %v88, 5
    %v753 = vsel %vm353, %v752, %v751
    %v754 = vrot.slane %v92, 4
    %v755 = vsel %vm355, %v754, %v753
    %v756 = vrot.slane %v96, 3
    %v757 = vsel %vm357, %v756, %v755
    %v758 = vrot.slane %v81, 7
    %v759 = vsel %vm349, %v758, %v77
    %v760 = vrot.slane %v85, 6
    %v761 = vsel %vm351, %v760, %v759
    %v762 = vrot.slane %v89, 5
    %v763 = vsel %vm353, %v762, %v761
    %v764 = vrot.slane %v93, 4
    %v765 = vsel %vm355, %v764, %v763
    %v766 = vrot.slane %v97, 3
    %v767 = vsel %vm357, %v766, %v765
    %v772 = vrot.slane %v74, 1
    %v773 = vsel %vm349, %v78, %v772
    %v774 = vrot.slane %v82, 7
    %v775 = vsel %vm351, %v774, %v773
    %v776 = vrot.slane %v86, 6
    %v777 = vsel %vm353, %v776, %v775
    %v778 = vrot.slane %v90, 5
    %v779 = vsel %vm355, %v778, %v777
    %v780 = vrot.slane %v94, 4
    %v781 = vsel %vm357, %v780, %v779
    %v782 = vrot.slane %v75, 1
    %v783 = vsel %vm349, %v79, %v782
    %v784 = vrot.slane %v83, 7
    %v785 = vsel %vm351, %v784, %v783
    %v786 = vrot.slane %v87, 6
    %v787 = vsel %vm353, %v786, %v785
    %v788 = vrot.slane %v91, 5
    %v789 = vsel %vm355, %v788, %v787
    %v790 = vrot.slane %v95, 4
    %v791 = vsel %vm357, %v790, %v789
    %v792 = vrot.slane %v76, 1
    %v793 = vsel %vm349, %v80, %v792
    %v794 = vrot.slane %v84, 7
    %v795 = vsel %vm351, %v794, %v793
    %v796 = vrot.slane %v88, 6
    %v797 = vsel %vm353, %v796, %v795
    %v798 = vrot.slane %v92, 5
    %v799 = vsel %vm355, %v798, %v797
    %v800 = vrot.slane %v96, 4
    %v801 = vsel %vm357, %v800, %v799
    %v802 = vrot.slane %v77, 1
    %v803 = vsel %vm349, %v81, %v802
    %v804 = vrot.slane %v85, 7
    %v805 = vsel %vm351, %v804, %v803
    %v806 = vrot.slane %v89, 6
    %v807 = vsel %vm353, %v806, %v805
    %v808 = vrot.slane %v93, 5
    %v809 = vsel %vm355, %v808, %v807
    %v810 = vrot.slane %v97, 4
    %v811 = vsel %vm357, %v810, %v809
    %816 = vmatprep.subr.mxu0 %v791
    %817 = vmatpush1.xpose.msra.mxu0 %v781
    %818 = vmatprep.subr.mxu0 0.0
    %819 = vmatpush1.xpose.msra.mxu0 0.0
    %820 = vmatprep.subr.mxu0 0.0
    %821 = vmatpush1.xpose.msra.mxu0 0.0
    %822 = vmatprep.subr.mxu0 0.0
    %823 = vmatpush1.xpose.msra.mxu0 0.0
    %824 = vmatprep.subr.mxu0 0.0
    %825 = vmatpush1.xpose.msra.mxu0 0.0
    %826 = vmatprep.subr.mxu0 0.0
    %827 = vmatpush1.xpose.msra.mxu0 0.0
    %828 = vmatprep.subr.mxu0 0.0
    %829 = vmatpush1.xpose.msra.mxu0 0.0
    %830 = vmatprep.subr.mxu0 0.0
    %831 = vmatpush1.xpose.msra.mxu0 0.0
    %832 = vmatprep.subr.mxu0 0.0
    %833 = vmatpush1.xpose.msra.mxu0 0.0
    %834 = vmatprep.subr.mxu0 0.0
    %835 = vmatpush1.xpose.msra.mxu0 0.0
    %836 = vmatprep.subr.mxu0 0.0
    %837 = vmatpush1.xpose.msra.mxu0 0.0
    %838 = vmatprep.subr.mxu0 0.0
    %839 = vmatpush1.xpose.msra.mxu0 0.0
    %840 = vmatprep.subr.mxu0 0.0
    %841 = vmatpush1.xpose.msra.mxu0 0.0
    %842 = vmatprep.subr.mxu0 0.0
    %843 = vmatpush1.xpose.msra.mxu0 0.0
    %844 = vmatprep.subr.mxu0 0.0
    %845 = vmatpush1.xpose.msra.mxu0 0.0
    %846 = vmatprep.subr.mxu0 0.0
    %847 = vmatpush1.xpose.msra.mxu0 0.0
    %848 = vmatprep.subr.mxu0 0.0
    %849 = vmatpush1.xpose.msra.mxu0 0.0
    %850 = vmatprep.subr.mxu0 0.0
    %851 = vmatpush1.xpose.msra.mxu0 0.0
    %852 = vmatprep.subr.mxu0 0.0
    %853 = vmatpush1.xpose.msra.mxu0 0.0
    %854 = vmatprep.subr.mxu0 0.0
    %855 = vmatpush1.xpose.msra.mxu0 0.0
    %856 = vmatprep.subr.mxu0 0.0
    %857 = vmatpush1.xpose.msra.mxu0 0.0
    %858 = vmatprep.subr.mxu0 0.0
    %859 = vmatpush1.xpose.msra.mxu0 0.0
    %860 = vmatprep.subr.mxu0 0.0
    %861 = vmatpush1.xpose.msra.mxu0 0.0
    %862 = vmatprep.subr.mxu0 0.0
    %863 = vmatpush1.xpose.msra.mxu0 0.0
    %864 = vmatprep.subr.mxu0 0.0
    %865 = vmatpush1.xpose.msra.mxu0 0.0
    %866 = vmatprep.subr.mxu0 0.0
    %867 = vmatpush1.xpose.msra.mxu0 0.0
    %868 = vmatprep.subr.mxu0 0.0
    %869 = vmatpush1.xpose.msra.mxu0 0.0
    %870 = vmatprep.subr.mxu0 0.0
    %871 = vmatpush1.xpose.msra.mxu0 0.0
    %872 = vmatprep.subr.mxu0 0.0
    %873 = vmatpush1.xpose.msra.mxu0 0.0
    %874 = vmatprep.subr.mxu0 0.0
    %875 = vmatpush1.xpose.msra.mxu0 0.0
    %876 = vmatprep.subr.mxu0 0.0
    %877 = vmatpush1.xpose.msra.mxu0 0.0
    %878 = vmatprep.subr.mxu0 0.0
    %879 = vmatpush1.xpose.msra.mxu0 0.0
    %880 = vmatprep.mubr.f32.mxu0 %v747
    %881 = vmatmul.mubr.f32.gmra.mrb[0].mxu0 %v737
    %v882 = vpop.f32.mrb[0].mxu0
    %v883 = vadd.f32 0.0, %v882
    %v884 = vpop.f32.mrb[0].mxu0
    %885 = vdwg.mxu0
    %886 = vmatprep.subr.mxu0 %v811
    %887 = vmatpush1.xpose.msra.mxu0 %v801
    %888 = vmatprep.subr.mxu0 0.0
    %889 = vmatpush1.xpose.msra.mxu0 0.0
    %890 = vmatprep.subr.mxu0 0.0
    %891 = vmatpush1.xpose.msra.mxu0 0.0
    %892 = vmatprep.subr.mxu0 0.0
    %893 = vmatpush1.xpose.msra.mxu0 0.0
    %894 = vmatprep.subr.mxu0 0.0
    %895 = vmatpush1.xpose.msra.mxu0 0.0
    %896 = vmatprep.subr.mxu0 0.0
    %897 = vmatpush1.xpose.msra.mxu0 0.0
    %898 = vmatprep.subr.mxu0 0.0
    %899 = vmatpush1.xpose.msra.mxu0 0.0
    %900 = vmatprep.subr.mxu0 0.0
    %901 = vmatpush1.xpose.msra.mxu0 0.0
    %902 = vmatprep.subr.mxu0 0.0
    %903 = vmatpush1.xpose.msra.mxu0 0.0
    %904 = vmatprep.subr.mxu0 0.0
    %905 = vmatpush1.xpose.msra.mxu0 0.0
    %906 = vmatprep.subr.mxu0 0.0
    %907 = vmatpush1.xpose.msra.mxu0 0.0
    %908 = vmatprep.subr.mxu0 0.0
    %909 = vmatpush1.xpose.msra.mxu0 0.0
    %910 = vmatprep.subr.mxu0 0.0
    %911 = vmatpush1.xpose.msra.mxu0 0.0
    %912 = vmatprep.subr.mxu0 0.0
    %913 = vmatpush1.xpose.msra.mxu0 0.0
    %914 = vmatprep.subr.mxu0 0.0
    %915 = vmatpush1.xpose.msra.mxu0 0.0
    %916 = vmatprep.subr.mxu0 0.0
    %917 = vmatpush1.xpose.msra.mxu0 0.0
    %918 = vmatprep.subr.mxu0 0.0
    %919 = vmatpush1.xpose.msra.mxu0 0.0
    %920 = vmatprep.subr.mxu0 0.0
    %921 = vmatpush1.xpose.msra.mxu0 0.0
    %922 = vmatprep.subr.mxu0 0.0
    %923 = vmatpush1.xpose.msra.mxu0 0.0
    %924 = vmatprep.subr.mxu0 0.0
    %925 = vmatpush1.xpose.msra.mxu0 0.0
    %926 = vmatprep.subr.mxu0 0.0
    %927 = vmatpush1.xpose.msra.mxu0 0.0
    %928 = vmatprep.subr.mxu0 0.0
    %929 = vmatpush1.xpose.msra.mxu0 0.0
    %930 = vmatprep.subr.mxu0 0.0
    %931 = vmatpush1.xpose.msra.mxu0 0.0
    %932 = vmatprep.subr.mxu0 0.0
    %933 = vmatpush1.xpose.msra.mxu0 0.0
    %934 = vmatprep.subr.mxu0 0.0
    %935 = vmatpush1.xpose.msra.mxu0 0.0
    %936 = vmatprep.subr.mxu0 0.0
    %937 = vmatpush1.xpose.msra.mxu0 0.0
    %938 = vmatprep.subr.mxu0 0.0
    %939 = vmatpush1.xpose.msra.mxu0 0.0
    %940 = vmatprep.subr.mxu0 0.0
    %941 = vmatpush1.xpose.msra.mxu0 0.0
    %942 = vmatprep.subr.mxu0 0.0
    %943 = vmatpush1.xpose.msra.mxu0 0.0
    %944 = vmatprep.subr.mxu0 0.0
    %945 = vmatpush1.xpose.msra.mxu0 0.0
    %946 = vmatprep.subr.mxu0 0.0
    %947 = vmatpush1.xpose.msra.mxu0 0.0
    %948 = vmatprep.subr.mxu0 0.0
    %949 = vmatpush1.xpose.msra.mxu0 0.0
    %950 = vmatprep.mubr.f32.mxu0 %v767
    %951 = vmatmul.mubr.f32.gmra.mrb[0].mxu0 %v757
    %v952 = vpop.f32.mrb[0].mxu0
    %v953 = vadd.f32 %v883, %v952
    %v954 = vpop.f32.mrb[0].mxu0
    %955 = vdwg.mxu0
    %v956 = vmul.f32 %v953, 0.044194173
    %vm957 = vcmask 46080
    %v958 = vsel %vm957, %v956, -inf
    %959 = vmax.xlane.f32.xlu0 %v958
    %v960 = vpop.xlane.xlu0 %959
    %v961 = vsub.f32 %v956, %v960
    %v962 = vmul.f32 %v961, 1.442695
    %v963 = vpow.pop %v962
    %v964 = vsel %vm957, %v963, 0.0
    %965 = vadd.xlane.f32.xlu0 %v964
    %v966 = vpop.xlane.xlu0 %965
    %v967 = vrcp.pop %v966
    %v968 = vmul.f32 %v963, %v967
    %vm969 = vcmask 48128
    %v971 = vsel %vm969, %v968, 0
    %v973 = vsel %vm378, %v781, 0
    %v975 = vsel %vm378, %v791, 0
    %v977 = vsel %vm378, %v801, 0
    %v979 = vsel %vm378, %v811, 0
    %981 = vmatprep.subr.mxu0 %v975
    %982 = vmatpush1.msra.mxu0 %v973
    %983 = vmatprep.subr.mxu0 0.0
    %984 = vmatpush1.msra.mxu0 0.0
    %985 = vmatprep.subr.mxu0 0.0
    %986 = vmatpush1.msra.mxu0 0.0
    %987 = vmatprep.subr.mxu0 0.0
    %988 = vmatpush1.msra.mxu0 0.0
    %989 = vmatprep.subr.mxu0 0.0
    %990 = vmatpush1.msra.mxu0 0.0
    %991 = vmatprep.subr.mxu0 0.0
    %992 = vmatpush1.msra.mxu0 0.0
    %993 = vmatprep.subr.mxu0 0.0
    %994 = vmatpush1.msra.mxu0 0.0
    %995 = vmatprep.subr.mxu0 0.0
    %996 = vmatpush1.msra.mxu0 0.0
    %997 = vmatprep.subr.mxu0 0.0
    %998 = vmatpush1.msra.mxu0 0.0
    %999 = vmatprep.subr.mxu0 0.0
    %1000 = vmatpush1.msra.mxu0 0.0
    %1001 = vmatprep.subr.mxu0 0.0
    %1002 = vmatpush1.msra.mxu0 0.0
    %1003 = vmatprep.subr.mxu0 0.0
    %1004 = vmatpush1.msra.mxu0 0.0
    %1005 = vmatprep.subr.mxu0 0.0
    %1006 = vmatpush1.msra.mxu0 0.0
    %1007 = vmatprep.subr.mxu0 0.0
    %1008 = vmatpush1.msra.mxu0 0.0
    %1009 = vmatprep.subr.mxu0 0.0
    %1010 = vmatpush1.msra.mxu0 0.0
    %1011 = vmatprep.subr.mxu0 0.0
    %1012 = vmatpush1.msra.mxu0 0.0
    %1013 = vmatprep.subr.mxu0 0.0
    %1014 = vmatpush1.msra.mxu0 0.0
    %1015 = vmatprep.subr.mxu0 0.0
    %1016 = vmatpush1.msra.mxu0 0.0
    %1017 = vmatprep.subr.mxu0 0.0
    %1018 = vmatpush1.msra.mxu0 0.0
    %1019 = vmatprep.subr.mxu0 0.0
    %1020 = vmatpush1.msra.mxu0 0.0
    %1021 = vmatprep.subr.mxu0 0.0
    %1022 = vmatpush1.msra.mxu0 0.0
    %1023 = vmatprep.subr.mxu0 0.0
    %1024 = vmatpush1.msra.mxu0 0.0
    %1025 = vmatprep.subr.mxu0 0.0
    %1026 = vmatpush1.msra.mxu0 0.0
    %1027 = vmatprep.subr.mxu0 0.0
    %1028 = vmatpush1.msra.mxu0 0.0
    %1029 = vmatprep.subr.mxu0 0.0
    %1030 = vmatpush1.msra.mxu0 0.0
    %1031 = vmatprep.subr.mxu0 0.0
    %1032 = vmatpush1.msra.mxu0 0.0
    %1033 = vmatprep.subr.mxu0 0.0
    %1034 = vmatpush1.msra.mxu0 0.0
    %1035 = vmatprep.subr.mxu0 0.0
    %1036 = vmatpush1.msra.mxu0 0.0
    %1037 = vmatprep.subr.mxu0 0.0
    %1038 = vmatpush1.msra.mxu0 0.0
    %1039 = vmatprep.subr.mxu0 0.0
    %1040 = vmatpush1.msra.mxu0 0.0
    %1041 = vmatprep.subr.mxu0 0.0
    %1042 = vmatpush1.msra.mxu0 0.0
    %1043 = vmatprep.subr.mxu0 0.0
    %1044 = vmatpush1.msra.mxu0 0.0
    %1045 = vmatprep.mubr.f32.mxu0 0.0
    %1046 = vmatmul.mubr.f32.gmra.mrb[0].mxu0 %v971
    %v1047 = vpop.f32.mrb[0].mxu0
    %v1048 = vadd.f32 %v781, %v1047
    %v1049 = vpop.f32.mrb[0].mxu0
    %v1050 = vadd.f32 %v791, %v1049
    %1051 = vdwg.mxu0
    %1052 = vmatprep.subr.mxu0 %v979
    %1053 = vmatpush1.msra.mxu0 %v977
    %1054 = vmatprep.subr.mxu0 0.0
    %1055 = vmatpush1.msra.mxu0 0.0
    %1056 = vmatprep.subr.mxu0 0.0
    %1057 = vmatpush1.msra.mxu0 0.0
    %1058 = vmatprep.subr.mxu0 0.0
    %1059 = vmatpush1.msra.mxu0 0.0
    %1060 = vmatprep.subr.mxu0 0.0
    %1061 = vmatpush1.msra.mxu0 0.0
    %1062 = vmatprep.subr.mxu0 0.0
    %1063 = vmatpush1.msra.mxu0 0.0
    %1064 = vmatprep.subr.mxu0 0.0
    %1065 = vmatpush1.msra.mxu0 0.0
    %1066 = vmatprep.subr.mxu0 0.0
    %1067 = vmatpush1.msra.mxu0 0.0
    %1068 = vmatprep.subr.mxu0 0.0
    %1069 = vmatpush1.msra.mxu0 0.0
    %1070 = vmatprep.subr.mxu0 0.0
    %1071 = vmatpush1.msra.mxu0 0.0
    %1072 = vmatprep.subr.mxu0 0.0
    %1073 = vmatpush1.msra.mxu0 0.0
    %1074 = vmatprep.subr.mxu0 0.0
    %1075 = vmatpush1.msra.mxu0 0.0
    %1076 = vmatprep.subr.mxu0 0.0
    %1077 = vmatpush1.msra.mxu0 0.0
    %1078 = vmatprep.subr.mxu0 0.0
    %1079 = vmatpush1.msra.mxu0 0.0
    %1080 = vmatprep.subr.mxu0 0.0
    %1081 = vmatpush1.msra.mxu0 0.0
    %1082 = vmatprep.subr.mxu0 0.0
    %1083 = vmatpush1.msra.mxu0 0.0
    %1084 = vmatprep.subr.mxu0 0.0
    %1085 = vmatpush1.msra.mxu0 0.0
    %1086 = vmatprep.subr.mxu0 0.0
    %1087 = vmatpush1.msra.mxu0 0.0
    %1088 = vmatprep.subr.mxu0 0.0
    %1089 = vmatpush1.msra.mxu0 0.0
    %1090 = vmatprep.subr.mxu0 0.0
    %1091 = vmatpush1.msra.mxu0 0.0
    %1092 = vmatprep.subr.mxu0 0.0
    %1093 = vmatpush1.msra.mxu0 0.0
    %1094 = vmatprep.subr.mxu0 0.0
    %1095 = vmatpush1.msra.mxu0 0.0
    %1096 = vmatprep.subr.mxu0 0.0
    %1097 = vmatpush1.msra.mxu0 0.0
    %1098 = vmatprep.subr.mxu0 0.0
    %1099 = vmatpush1.msra.mxu0 0.0
    %1100 = vmatprep.subr.mxu0 0.0
    %1101 = vmatpush1.msra.mxu0 0.0
    %1102 = vmatprep.subr.mxu0 0.0
    %1103 = vmatpush1.msra.mxu0 0.0
    %1104 = vmatprep.subr.mxu0 0.0
    %1105 = vmatpush1.msra.mxu0 0.0
    %1106 = vmatprep.subr.mxu0 0.0
    %1107 = vmatpush1.msra.mxu0 0.0
    %1108 = vmatprep.subr.mxu0 0.0
    %1109 = vmatpush1.msra.mxu0 0.0
    %1110 = vmatprep.subr.mxu0 0.0
    %1111 = vmatpush1.msra.mxu0 0.0
    %1112 = vmatprep.subr.mxu0 0.0
    %1113 = vmatpush1.msra.mxu0 0.0
    %1114 = vmatprep.subr.mxu0 0.0
    %1115 = vmatpush1.msra.mxu0 0.0
    %1116 = vmatprep.mubr.f32.mxu0 0.0
    %1117 = vmatmul.mubr.f32.gmra.mrb[0].mxu0 %v971
    %v1118 = vpop.f32.mrb[0].mxu0
    %v1119 = vadd.f32 %v801, %v1118
    %v1120 = vpop.f32.mrb[0].mxu0
    %v1121 = vadd.f32 %v811, %v1120
    %1122 = vdwg.mxu0
    %v1123 = vmul.f32 %v1048, %v1048
    %v1124 = vmul.f32 %v1050, %v1050
    %v1125 = vmul.f32 %v1119, %v1119
    %v1126 = vmul.f32 %v1121, %v1121
    %v1127 = vsel %vm378, %v1123, 0.0
    %v1128 = vsel %vm378, %v1124, 0.0
    %v1129 = vadd.f32 %v1127, %v1128
    %v1130 = vsel %vm378, %v1125, 0.0
    %v1131 = vadd.f32 %v1129, %v1130
    %v1132 = vsel %vm378, %v1126, 0.0
    %v1133 = vadd.f32 %v1131, %v1132
    %1134 = vadd.xlane.f32.xlu0 %v1133
    %v1135 = vpop.xlane.xlu0 %1134
    %v1136 = vadd.f32 %v1135, 1e-08
    %v1137 = vrsqrt.pop %v1136
    %v1138 = vmul.f32 %v1048, %v1137
    %v1139 = vmul.f32 %v1050, %v1137
    %v1140 = vmul.f32 %v1119, %v1137
    %v1141 = vmul.f32 %v1121, %v1137
    %v1142 = vrot.slane %v74, 2
    %v1143 = vrot.slane %v78, 1
    %v1144 = vsel %vm349, %v1143, %v1142
    %v1145 = vsel %vm351, %v82, %v1144
    %v1146 = vrot.slane %v86, 7
    %v1147 = vsel %vm353, %v1146, %v1145
    %v1148 = vrot.slane %v90, 6
    %v1149 = vsel %vm355, %v1148, %v1147
    %v1150 = vrot.slane %v94, 5
    %v1151 = vsel %vm357, %v1150, %v1149
    %v1152 = vrot.slane %v75, 2
    %v1153 = vrot.slane %v79, 1
    %v1154 = vsel %vm349, %v1153, %v1152
    %v1155 = vsel %vm351, %v83, %v1154
    %v1156 = vrot.slane %v87, 7
    %v1157 = vsel %vm353, %v1156, %v1155
    %v1158 = vrot.slane %v91, 6
    %v1159 = vsel %vm355, %v1158, %v1157
    %v1160 = vrot.slane %v95, 5
    %v1161 = vsel %vm357, %v1160, %v1159
    %v1162 = vrot.slane %v76, 2
    %v1163 = vrot.slane %v80, 1
    %v1164 = vsel %vm349, %v1163, %v1162
    %v1165 = vsel %vm351, %v84, %v1164
    %v1166 = vrot.slane %v88, 7
    %v1167 = vsel %vm353, %v1166, %v1165
    %v1168 = vrot.slane %v92, 6
    %v1169 = vsel %vm355, %v1168, %v1167
    %v1170 = vrot.slane %v96, 5
    %v1171 = vsel %vm357, %v1170, %v1169
    %v1172 = vrot.slane %v77, 2
    %v1173 = vrot.slane %v81, 1
    %v1174 = vsel %vm349, %v1173, %v1172
    %v1175 = vsel %vm351, %v85, %v1174
    %v1176 = vrot.slane %v89, 7
    %v1177 = vsel %vm353, %v1176, %v1175
    %v1178 = vrot.slane %v93, 6
    %v1179 = vsel %vm355, %v1178, %v1177
    %v1180 = vrot.slane %v97, 5
    %v1181 = vsel %vm357, %v1180, %v1179
    %1186 = vmatprep.subr.mxu0 %v1161
    %1187 = vmatpush1.xpose.msra.mxu0 %v1151
    %1188 = vmatprep.subr.mxu0 0.0
    %1189 = vmatpush1.xpose.msra.mxu0 0.0
    %1190 = vmatprep.subr.mxu0 0.0
    %1191 = vmatpush1.xpose.msra.mxu0 0.0
    %1192 = vmatprep.subr.mxu0 0.0
    %1193 = vmatpush1.xpose.msra.mxu0 0.0
    %1194 = vmatprep.subr.mxu0 0.0
    %1195 = vmatpush1.xpose.msra.mxu0 0.0
    %1196 = vmatprep.subr.mxu0 0.0
    %1197 = vmatpush1.xpose.msra.mxu0 0.0
    %1198 = vmatprep.subr.mxu0 0.0
    %1199 = vmatpush1.xpose.msra.mxu0 0.0
    %1200 = vmatprep.subr.mxu0 0.0
    %1201 = vmatpush1.xpose.msra.mxu0 0.0
    %1202 = vmatprep.subr.mxu0 0.0
    %1203 = vmatpush1.xpose.msra.mxu0 0.0
    %1204 = vmatprep.subr.mxu0 0.0
    %1205 = vmatpush1.xpose.msra.mxu0 0.0
    %1206 = vmatprep.subr.mxu0 0.0
    %1207 = vmatpush1.xpose.msra.mxu0 0.0
    %1208 = vmatprep.subr.mxu0 0.0
    %1209 = vmatpush1.xpose.msra.mxu0 0.0
    %1210 = vmatprep.subr.mxu0 0.0
    %1211 = vmatpush1.xpose.msra.mxu0 0.0
    %1212 = vmatprep.subr.mxu0 0.0
    %1213 = vmatpush1.xpose.msra.mxu0 0.0
    %1214 = vmatprep.subr.mxu0 0.0
    %1215 = vmatpush1.xpose.msra.mxu0 0.0
    %1216 = vmatprep.subr.mxu0 0.0
    %1217 = vmatpush1.xpose.msra.mxu0 0.0
    %1218 = vmatprep.subr.mxu0 0.0
    %1219 = vmatpush1.xpose.msra.mxu0 0.0
    %1220 = vmatprep.subr.mxu0 0.0
    %1221 = vmatpush1.xpose.msra.mxu0 0.0
    %1222 = vmatprep.subr.mxu0 0.0
    %1223 = vmatpush1.xpose.msra.mxu0 0.0
    %1224 = vmatprep.subr.mxu0 0.0
    %1225 = vmatpush1.xpose.msra.mxu0 0.0
    %1226 = vmatprep.subr.mxu0 0.0
    %1227 = vmatpush1.xpose.msra.mxu0 0.0
    %1228 = vmatprep.subr.mxu0 0.0
    %1229 = vmatpush1.xpose.msra.mxu0 0.0
    %1230 = vmatprep.subr.mxu0 0.0
    %1231 = vmatpush1.xpose.msra.mxu0 0.0
    %1232 = vmatprep.subr.mxu0 0.0
    %1233 = vmatpush1.xpose.msra.mxu0 0.0
    %1234 = vmatprep.subr.mxu0 0.0
    %1235 = vmatpush1.xpose.msra.mxu0 0.0
    %1236 = vmatprep.subr.mxu0 0.0
    %1237 = vmatpush1.xpose.msra.mxu0 0.0
    %1238 = vmatprep.subr.mxu0 0.0
    %1239 = vmatpush1.xpose.msra.mxu0 0.0
    %1240 = vmatprep.subr.mxu0 0.0
    %1241 = vmatpush1.xpose.msra.mxu0 0.0
    %1242 = vmatprep.subr.mxu0 0.0
    %1243 = vmatpush1.xpose.msra.mxu0 0.0
    %1244 = vmatprep.subr.mxu0 0.0
    %1245 = vmatpush1.xpose.msra.mxu0 0.0
    %1246 = vmatprep.subr.mxu0 0.0
    %1247 = vmatpush1.xpose.msra.mxu0 0.0
    %1248 = vmatprep.subr.mxu0 0.0
    %1249 = vmatpush1.xpose.msra.mxu0 0.0
    %1250 = vmatprep.mubr.f32.mxu0 %v791
    %1251 = vmatmul.mubr.f32.gmra.mrb[0].mxu0 %v781
    %v1252 = vpop.f32.mrb[0].mxu0
    %v1253 = vadd.f32 0.0, %v1252
    %v1254 = vpop.f32.mrb[0].mxu0
    %1255 = vdwg.mxu0
    %1256 = vmatprep.subr.mxu0 %v1181
    %1257 = vmatpush1.xpose.msra.mxu0 %v1171
    %1258 = vmatprep.subr.mxu0 0.0
    %1259 = vmatpush1.xpose.msra.mxu0 0.0
    %1260 = vmatprep.subr.mxu0 0.0
    %1261 = vmatpush1.xpose.msra.mxu0 0.0
    %1262 = vmatprep.subr.mxu0 0.0
    %1263 = vmatpush1.xpose.msra.mxu0 0.0
    %1264 = vmatprep.subr.mxu0 0.0
    %1265 = vmatpush1.xpose.msra.mxu0 0.0
    %1266 = vmatprep.subr.mxu0 0.0
    %1267 = vmatpush1.xpose.msra.mxu0 0.0
    %1268 = vmatprep.subr.mxu0 0.0
    %1269 = vmatpush1.xpose.msra.mxu0 0.0
    %1270 = vmatprep.subr.mxu0 0.0
    %1271 = vmatpush1.xpose.msra.mxu0 0.0
    %1272 = vmatprep.subr.mxu0 0.0
    %1273 = vmatpush1.xpose.msra.mxu0 0.0
    %1274 = vmatprep.subr.mxu0 0.0
    %1275 = vmatpush1.xpose.msra.mxu0 0.0
    %1276 = vmatprep.subr.mxu0 0.0
    %1277 = vmatpush1.xpose.msra.mxu0 0.0
    %1278 = vmatprep.subr.mxu0 0.0
    %1279 = vmatpush1.xpose.msra.mxu0 0.0
    %1280 = vmatprep.subr.mxu0 0.0
    %1281 = vmatpush1.xpose.msra.mxu0 0.0
    %1282 = vmatprep.subr.mxu0 0.0
    %1283 = vmatpush1.xpose.msra.mxu0 0.0
    %1284 = vmatprep.subr.mxu0 0.0
    %1285 = vmatpush1.xpose.msra.mxu0 0.0
    %1286 = vmatprep.subr.mxu0 0.0
    %1287 = vmatpush1.xpose.msra.mxu0 0.0
    %1288 = vmatprep.subr.mxu0 0.0
    %1289 = vmatpush1.xpose.msra.mxu0 0.0
    %1290 = vmatprep.subr.mxu0 0.0
    %1291 = vmatpush1.xpose.msra.mxu0 0.0
    %1292 = vmatprep.subr.mxu0 0.0
    %1293 = vmatpush1.xpose.msra.mxu0 0.0
    %1294 = vmatprep.subr.mxu0 0.0
    %1295 = vmatpush1.xpose.msra.mxu0 0.0
    %1296 = vmatprep.subr.mxu0 0.0
    %1297 = vmatpush1.xpose.msra.mxu0 0.0
    %1298 = vmatprep.subr.mxu0 0.0
    %1299 = vmatpush1.xpose.msra.mxu0 0.0
    %1300 = vmatprep.subr.mxu0 0.0
    %1301 = vmatpush1.xpose.msra.mxu0 0.0
    %1302 = vmatprep.subr.mxu0 0.0
    %1303 = vmatpush1.xpose.msra.mxu0 0.0
    %1304 = vmatprep.subr.mxu0 0.0
    %1305 = vmatpush1.xpose.msra.mxu0 0.0
    %1306 = vmatprep.subr.mxu0 0.0
    %1307 = vmatpush1.xpose.msra.mxu0 0.0
    %1308 = vmatprep.subr.mxu0 0.0
    %1309 = vmatpush1.xpose.msra.mxu0 0.0
    %1310 = vmatprep.subr.mxu0 0.0
    %1311 = vmatpush1.xpose.msra.mxu0 0.0
    %1312 = vmatprep.subr.mxu0 0.0
    %1313 = vmatpush1.xpose.msra.mxu0 0.0
    %1314 = vmatprep.subr.mxu0 0.0
    %1315 = vmatpush1.xpose.msra.mxu0 0.0
    %1316 = vmatprep.subr.mxu0 0.0
    %1317 = vmatpush1.xpose.msra.mxu0 0.0
    %1318 = vmatprep.subr.mxu0 0.0
    %1319 = vmatpush1.xpose.msra.mxu0 0.0
    %1320 = vmatprep.mubr.f32.mxu0 %v811
    %1321 = vmatmul.mubr.f32.gmra.mrb[0].mxu0 %v801
    %v1322 = vpop.f32.mrb[0].mxu0
    %v1323 = vadd.f32 %v1253, %v1322
    %v1324 = vpop.f32.mrb[0].mxu0
    %1325 = vdwg.mxu0
    %v1326 = vmul.f32 %v1323, 0.044194173
    %v1327 = vsel %vm957, %v1326, -inf
    %1328 = vmax.xlane.f32.xlu0 %v1327
    %v1329 = vpop.xlane.xlu0 %1328
    %v1330 = vsub.f32 %v1326, %v1329
    %v1331 = vmul.f32 %v1330, 1.442695
    %v1332 = vpow.pop %v1331
    %v1333 = vsel %vm957, %v1332, 0.0
    %1334 = vadd.xlane.f32.xlu0 %v1333
    %v1335 = vpop.xlane.xlu0 %1334
    %v1336 = vrcp.pop %v1335
    %v1337 = vmul.f32 %v1332, %v1336
    %v1339 = vsel %vm969, %v1337, 0
    %v1341 = vsel %vm378, %v1151, 0
    %v1343 = vsel %vm378, %v1161, 0
    %v1345 = vsel %vm378, %v1171, 0
    %v1347 = vsel %vm378, %v1181, 0
    %1349 = vmatprep.subr.mxu0 %v1343
    %1350 = vmatpush1.msra.mxu0 %v1341
    %1351 = vmatprep.subr.mxu0 0.0
    %1352 = vmatpush1.msra.mxu0 0.0
    %1353 = vmatprep.subr.mxu0 0.0
    %1354 = vmatpush1.msra.mxu0 0.0
    %1355 = vmatprep.subr.mxu0 0.0
    %1356 = vmatpush1.msra.mxu0 0.0
    %1357 = vmatprep.subr.mxu0 0.0
    %1358 = vmatpush1.msra.mxu0 0.0
    %1359 = vmatprep.subr.mxu0 0.0
    %1360 = vmatpush1.msra.mxu0 0.0
    %1361 = vmatprep.subr.mxu0 0.0
    %1362 = vmatpush1.msra.mxu0 0.0
    %1363 = vmatprep.subr.mxu0 0.0
    %1364 = vmatpush1.msra.mxu0 0.0
    %1365 = vmatprep.subr.mxu0 0.0
    %1366 = vmatpush1.msra.mxu0 0.0
    %1367 = vmatprep.subr.mxu0 0.0
    %1368 = vmatpush1.msra.mxu0 0.0
    %1369 = vmatprep.subr.mxu0 0.0
    %1370 = vmatpush1.msra.mxu0 0.0
    %1371 = vmatprep.subr.mxu0 0.0
    %1372 = vmatpush1.msra.mxu0 0.0
    %1373 = vmatprep.subr.mxu0 0.0
    %1374 = vmatpush1.msra.mxu0 0.0
    %1375 = vmatprep.subr.mxu0 0.0
    %1376 = vmatpush1.msra.mxu0 0.0
    %1377 = vmatprep.subr.mxu0 0.0
    %1378 = vmatpush1.msra.mxu0 0.0
    %1379 = vmatprep.subr.mxu0 0.0
    %1380 = vmatpush1.msra.mxu0 0.0
    %1381 = vmatprep.subr.mxu0 0.0
    %1382 = vmatpush1.msra.mxu0 0.0
    %1383 = vmatprep.subr.mxu0 0.0
    %1384 = vmatpush1.msra.mxu0 0.0
    %1385 = vmatprep.subr.mxu0 0.0
    %1386 = vmatpush1.msra.mxu0 0.0
    %1387 = vmatprep.subr.mxu0 0.0
    %1388 = vmatpush1.msra.mxu0 0.0
    %1389 = vmatprep.subr.mxu0 0.0
    %1390 = vmatpush1.msra.mxu0 0.0
    %1391 = vmatprep.subr.mxu0 0.0
    %1392 = vmatpush1.msra.mxu0 0.0
    %1393 = vmatprep.subr.mxu0 0.0
    %1394 = vmatpush1.msra.mxu0 0.0
    %1395 = vmatprep.subr.mxu0 0.0
    %1396 = vmatpush1.msra.mxu0 0.0
    %1397 = vmatprep.subr.mxu0 0.0
    %1398 = vmatpush1.msra.mxu0 0.0
    %1399 = vmatprep.subr.mxu0 0.0
    %1400 = vmatpush1.msra.mxu0 0.0
    %1401 = vmatprep.subr.mxu0 0.0
    %1402 = vmatpush1.msra.mxu0 0.0
    %1403 = vmatprep.subr.mxu0 0.0
    %1404 = vmatpush1.msra.mxu0 0.0
    %1405 = vmatprep.subr.mxu0 0.0
    %1406 = vmatpush1.msra.mxu0 0.0
    %1407 = vmatprep.subr.mxu0 0.0
    %1408 = vmatpush1.msra.mxu0 0.0
    %1409 = vmatprep.subr.mxu0 0.0
    %1410 = vmatpush1.msra.mxu0 0.0
    %1411 = vmatprep.subr.mxu0 0.0
    %1412 = vmatpush1.msra.mxu0 0.0
    %1413 = vmatprep.mubr.f32.mxu0 0.0
    %1414 = vmatmul.mubr.f32.gmra.mrb[0].mxu0 %v1339
    %v1415 = vpop.f32.mrb[0].mxu0
    %v1416 = vadd.f32 %v1151, %v1415
    %v1417 = vpop.f32.mrb[0].mxu0
    %v1418 = vadd.f32 %v1161, %v1417
    %1419 = vdwg.mxu0
    %1420 = vmatprep.subr.mxu0 %v1347
    %1421 = vmatpush1.msra.mxu0 %v1345
    %1422 = vmatprep.subr.mxu0 0.0
    %1423 = vmatpush1.msra.mxu0 0.0
    %1424 = vmatprep.subr.mxu0 0.0
    %1425 = vmatpush1.msra.mxu0 0.0
    %1426 = vmatprep.subr.mxu0 0.0
    %1427 = vmatpush1.msra.mxu0 0.0
    %1428 = vmatprep.subr.mxu0 0.0
    %1429 = vmatpush1.msra.mxu0 0.0
    %1430 = vmatprep.subr.mxu0 0.0
    %1431 = vmatpush1.msra.mxu0 0.0
    %1432 = vmatprep.subr.mxu0 0.0
    %1433 = vmatpush1.msra.mxu0 0.0
    %1434 = vmatprep.subr.mxu0 0.0
    %1435 = vmatpush1.msra.mxu0 0.0
    %1436 = vmatprep.subr.mxu0 0.0
    %1437 = vmatpush1.msra.mxu0 0.0
    %1438 = vmatprep.subr.mxu0 0.0
    %1439 = vmatpush1.msra.mxu0 0.0
    %1440 = vmatprep.subr.mxu0 0.0
    %1441 = vmatpush1.msra.mxu0 0.0
    %1442 = vmatprep.subr.mxu0 0.0
    %1443 = vmatpush1.msra.mxu0 0.0
    %1444 = vmatprep.subr.mxu0 0.0
    %1445 = vmatpush1.msra.mxu0 0.0
    %1446 = vmatprep.subr.mxu0 0.0
    %1447 = vmatpush1.msra.mxu0 0.0
    %1448 = vmatprep.subr.mxu0 0.0
    %1449 = vmatpush1.msra.mxu0 0.0
    %1450 = vmatprep.subr.mxu0 0.0
    %1451 = vmatpush1.msra.mxu0 0.0
    %1452 = vmatprep.subr.mxu0 0.0
    %1453 = vmatpush1.msra.mxu0 0.0
    %1454 = vmatprep.subr.mxu0 0.0
    %1455 = vmatpush1.msra.mxu0 0.0
    %1456 = vmatprep.subr.mxu0 0.0
    %1457 = vmatpush1.msra.mxu0 0.0
    %1458 = vmatprep.subr.mxu0 0.0
    %1459 = vmatpush1.msra.mxu0 0.0
    %1460 = vmatprep.subr.mxu0 0.0
    %1461 = vmatpush1.msra.mxu0 0.0
    %1462 = vmatprep.subr.mxu0 0.0
    %1463 = vmatpush1.msra.mxu0 0.0
    %1464 = vmatprep.subr.mxu0 0.0
    %1465 = vmatpush1.msra.mxu0 0.0
    %1466 = vmatprep.subr.mxu0 0.0
    %1467 = vmatpush1.msra.mxu0 0.0
    %1468 = vmatprep.subr.mxu0 0.0
    %1469 = vmatpush1.msra.mxu0 0.0
    %1470 = vmatprep.subr.mxu0 0.0
    %1471 = vmatpush1.msra.mxu0 0.0
    %1472 = vmatprep.subr.mxu0 0.0
    %1473 = vmatpush1.msra.mxu0 0.0
    %1474 = vmatprep.subr.mxu0 0.0
    %1475 = vmatpush1.msra.mxu0 0.0
    %1476 = vmatprep.subr.mxu0 0.0
    %1477 = vmatpush1.msra.mxu0 0.0
    %1478 = vmatprep.subr.mxu0 0.0
    %1479 = vmatpush1.msra.mxu0 0.0
    %1480 = vmatprep.subr.mxu0 0.0
    %1481 = vmatpush1.msra.mxu0 0.0
    %1482 = vmatprep.subr.mxu0 0.0
    %1483 = vmatpush1.msra.mxu0 0.0
    %1484 = vmatprep.mubr.f32.mxu0 0.0
    %1485 = vmatmul.mubr.f32.gmra.mrb[0].mxu0 %v1339
    %v1486 = vpop.f32.mrb[0].mxu0
    %v1487 = vadd.f32 %v1171, %v1486
    %v1488 = vpop.f32.mrb[0].mxu0
    %v1489 = vadd.f32 %v1181, %v1488
    %1490 = vdwg.mxu0
    %v1491 = vmul.f32 %v1416, %v1416
    %v1492 = vmul.f32 %v1418, %v1418
    %v1493 = vmul.f32 %v1487, %v1487
    %v1494 = vmul.f32 %v1489, %v1489
    %v1495 = vsel %vm378, %v1491, 0.0
    %v1496 = vsel %vm378, %v1492, 0.0
    %v1497 = vadd.f32 %v1495, %v1496
    %v1498 = vsel %vm378, %v1493, 0.0
    %v1499 = vadd.f32 %v1497, %v1498
    %v1500 = vsel %vm378, %v1494, 0.0
    %v1501 = vadd.f32 %v1499, %v1500
    %1502 = vadd.xlane.f32.xlu0 %v1501
    %v1503 = vpop.xlane.xlu0 %1502
    %v1504 = vadd.f32 %v1503, 1e-08
    %v1505 = vrsqrt.pop %v1504
    %v1506 = vmul.f32 %v1416, %v1505
    %v1507 = vmul.f32 %v1418, %v1505
    %v1508 = vmul.f32 %v1487, %v1505
    %v1509 = vmul.f32 %v1489, %v1505
    %v1510 = vrot.slane %v74, 3
    %v1511 = vrot.slane %v78, 2
    %v1512 = vsel %vm349, %v1511, %v1510
    %v1513 = vrot.slane %v82, 1
    %v1514 = vsel %vm351, %v1513, %v1512
    %v1515 = vsel %vm353, %v86, %v1514
    %v1516 = vrot.slane %v90, 7
    %v1517 = vsel %vm355, %v1516, %v1515
    %v1518 = vrot.slane %v94, 6
    %v1519 = vsel %vm357, %v1518, %v1517
    %v1520 = vrot.slane %v75, 3
    %v1521 = vrot.slane %v79, 2
    %v1522 = vsel %vm349, %v1521, %v1520
    %v1523 = vrot.slane %v83, 1
    %v1524 = vsel %vm351, %v1523, %v1522
    %v1525 = vsel %vm353, %v87, %v1524
    %v1526 = vrot.slane %v91, 7
    %v1527 = vsel %vm355, %v1526, %v1525
    %v1528 = vrot.slane %v95, 6
    %v1529 = vsel %vm357, %v1528, %v1527
    %v1530 = vrot.slane %v76, 3
    %v1531 = vrot.slane %v80, 2
    %v1532 = vsel %vm349, %v1531, %v1530
    %v1533 = vrot.slane %v84, 1
    %v1534 = vsel %vm351, %v1533, %v1532
    %v1535 = vsel %vm353, %v88, %v1534
    %v1536 = vrot.slane %v92, 7
    %v1537 = vsel %vm355, %v1536, %v1535
    %v1538 = vrot.slane %v96, 6
    %v1539 = vsel %vm357, %v1538, %v1537
    %v1540 = vrot.slane %v77, 3
    %v1541 = vrot.slane %v81, 2
    %v1542 = vsel %vm349, %v1541, %v1540
    %v1543 = vrot.slane %v85, 1
    %v1544 = vsel %vm351, %v1543, %v1542
    %v1545 = vsel %vm353, %v89, %v1544
    %v1546 = vrot.slane %v93, 7
    %v1547 = vsel %vm355, %v1546, %v1545
    %v1548 = vrot.slane %v97, 6
    %v1549 = vsel %vm357, %v1548, %v1547
    %1554 = vmatprep.subr.mxu0 %v1529
    %1555 = vmatpush1.xpose.msra.mxu0 %v1519
    %1556 = vmatprep.subr.mxu0 0.0
    %1557 = vmatpush1.xpose.msra.mxu0 0.0
    %1558 = vmatprep.subr.mxu0 0.0
    %1559 = vmatpush1.xpose.msra.mxu0 0.0
    %1560 = vmatprep.subr.mxu0 0.0
    %1561 = vmatpush1.xpose.msra.mxu0 0.0
    %1562 = vmatprep.subr.mxu0 0.0
    %1563 = vmatpush1.xpose.msra.mxu0 0.0
    %1564 = vmatprep.subr.mxu0 0.0
    %1565 = vmatpush1.xpose.msra.mxu0 0.0
    %1566 = vmatprep.subr.mxu0 0.0
    %1567 = vmatpush1.xpose.msra.mxu0 0.0
    %1568 = vmatprep.subr.mxu0 0.0
    %1569 = vmatpush1.xpose.msra.mxu0 0.0
    %1570 = vmatprep.subr.mxu0 0.0
    %1571 = vmatpush1.xpose.msra.mxu0 0.0
    %1572 = vmatprep.subr.mxu0 0.0
    %1573 = vmatpush1.xpose.msra.mxu0 0.0
    %1574 = vmatprep.subr.mxu0 0.0
    %1575 = vmatpush1.xpose.msra.mxu0 0.0
    %1576 = vmatprep.subr.mxu0 0.0
    %1577 = vmatpush1.xpose.msra.mxu0 0.0
    %1578 = vmatprep.subr.mxu0 0.0
    %1579 = vmatpush1.xpose.msra.mxu0 0.0
    %1580 = vmatprep.subr.mxu0 0.0
    %1581 = vmatpush1.xpose.msra.mxu0 0.0
    %1582 = vmatprep.subr.mxu0 0.0
    %1583 = vmatpush1.xpose.msra.mxu0 0.0
    %1584 = vmatprep.subr.mxu0 0.0
    %1585 = vmatpush1.xpose.msra.mxu0 0.0
    %1586 = vmatprep.subr.mxu0 0.0
    %1587 = vmatpush1.xpose.msra.mxu0 0.0
    %1588 = vmatprep.subr.mxu0 0.0
    %1589 = vmatpush1.xpose.msra.mxu0 0.0
    %1590 = vmatprep.subr.mxu0 0.0
    %1591 = vmatpush1.xpose.msra.mxu0 0.0
    %1592 = vmatprep.subr.mxu0 0.0
    %1593 = vmatpush1.xpose.msra.mxu0 0.0
    %1594 = vmatprep.subr.mxu0 0.0
    %1595 = vmatpush1.xpose.msra.mxu0 0.0
    %1596 = vmatprep.subr.mxu0 0.0
    %1597 = vmatpush1.xpose.msra.mxu0 0.0
    %1598 = vmatprep.subr.mxu0 0.0
    %1599 = vmatpush1.xpose.msra.mxu0 0.0
    %1600 = vmatprep.subr.mxu0 0.0
    %1601 = vmatpush1.xpose.msra.mxu0 0.0
    %1602 = vmatprep.subr.mxu0 0.0
    %1603 = vmatpush1.xpose.msra.mxu0 0.0
    %1604 = vmatprep.subr.mxu0 0.0
    %1605 = vmatpush1.xpose.msra.mxu0 0.0
    %1606 = vmatprep.subr.mxu0 0.0
    %1607 = vmatpush1.xpose.msra.mxu0 0.0
    %1608 = vmatprep.subr.mxu0 0.0
    %1609 = vmatpush1.xpose.msra.mxu0 0.0
    %1610 = vmatprep.subr.mxu0 0.0
    %1611 = vmatpush1.xpose.msra.mxu0 0.0
    %1612 = vmatprep.subr.mxu0 0.0
    %1613 = vmatpush1.xpose.msra.mxu0 0.0
    %1614 = vmatprep.subr.mxu0 0.0
    %1615 = vmatpush1.xpose.msra.mxu0 0.0
    %1616 = vmatprep.subr.mxu0 0.0
    %1617 = vmatpush1.xpose.msra.mxu0 0.0
    %1618 = vmatprep.mubr.f32.mxu0 %v1161
    %1619 = vmatmul.mubr.f32.gmra.mrb[0].mxu0 %v1151
    %v1620 = vpop.f32.mrb[0].mxu0
    %v1621 = vadd.f32 0.0, %v1620
    %v1622 = vpop.f32.mrb[0].mxu0
    %1623 = vdwg.mxu0
    %1624 = vmatprep.subr.mxu0 %v1549
    %1625 = vmatpush1.xpose.msra.mxu0 %v1539
    %1626 = vmatprep.subr.mxu0 0.0
    %1627 = vmatpush1.xpose.msra.mxu0 0.0
    %1628 = vmatprep.subr.mxu0 0.0
    %1629 = vmatpush1.xpose.msra.mxu0 0.0
    %1630 = vmatprep.subr.mxu0 0.0
    %1631 = vmatpush1.xpose.msra.mxu0 0.0
    %1632 = vmatprep.subr.mxu0 0.0
    %1633 = vmatpush1.xpose.msra.mxu0 0.0
    %1634 = vmatprep.subr.mxu0 0.0
    %1635 = vmatpush1.xpose.msra.mxu0 0.0
    %1636 = vmatprep.subr.mxu0 0.0
    %1637 = vmatpush1.xpose.msra.mxu0 0.0
    %1638 = vmatprep.subr.mxu0 0.0
    %1639 = vmatpush1.xpose.msra.mxu0 0.0
    %1640 = vmatprep.subr.mxu0 0.0
    %1641 = vmatpush1.xpose.msra.mxu0 0.0
    %1642 = vmatprep.subr.mxu0 0.0
    %1643 = vmatpush1.xpose.msra.mxu0 0.0
    %1644 = vmatprep.subr.mxu0 0.0
    %1645 = vmatpush1.xpose.msra.mxu0 0.0
    %1646 = vmatprep.subr.mxu0 0.0
    %1647 = vmatpush1.xpose.msra.mxu0 0.0
    %1648 = vmatprep.subr.mxu0 0.0
    %1649 = vmatpush1.xpose.msra.mxu0 0.0
    %1650 = vmatprep.subr.mxu0 0.0
    %1651 = vmatpush1.xpose.msra.mxu0 0.0
    %1652 = vmatprep.subr.mxu0 0.0
    %1653 = vmatpush1.xpose.msra.mxu0 0.0
    %1654 = vmatprep.subr.mxu0 0.0
    %1655 = vmatpush1.xpose.msra.mxu0 0.0
    %1656 = vmatprep.subr.mxu0 0.0
    %1657 = vmatpush1.xpose.msra.mxu0 0.0
    %1658 = vmatprep.subr.mxu0 0.0
    %1659 = vmatpush1.xpose.msra.mxu0 0.0
    %1660 = vmatprep.subr.mxu0 0.0
    %1661 = vmatpush1.xpose.msra.mxu0 0.0
    %1662 = vmatprep.subr.mxu0 0.0
    %1663 = vmatpush1.xpose.msra.mxu0 0.0
    %1664 = vmatprep.subr.mxu0 0.0
    %1665 = vmatpush1.xpose.msra.mxu0 0.0
    %1666 = vmatprep.subr.mxu0 0.0
    %1667 = vmatpush1.xpose.msra.mxu0 0.0
    %1668 = vmatprep.subr.mxu0 0.0
    %1669 = vmatpush1.xpose.msra.mxu0 0.0
    %1670 = vmatprep.subr.mxu0 0.0
    %1671 = vmatpush1.xpose.msra.mxu0 0.0
    %1672 = vmatprep.subr.mxu0 0.0
    %1673 = vmatpush1.xpose.msra.mxu0 0.0
    %1674 = vmatprep.subr.mxu0 0.0
    %1675 = vmatpush1.xpose.msra.mxu0 0.0
    %1676 = vmatprep.subr.mxu0 0.0
    %1677 = vmatpush1.xpose.msra.mxu0 0.0
    %1678 = vmatprep.subr.mxu0 0.0
    %1679 = vmatpush1.xpose.msra.mxu0 0.0
    %1680 = vmatprep.subr.mxu0 0.0
    %1681 = vmatpush1.xpose.msra.mxu0 0.0
    %1682 = vmatprep.subr.mxu0 0.0
    %1683 = vmatpush1.xpose.msra.mxu0 0.0
    %1684 = vmatprep.subr.mxu0 0.0
    %1685 = vmatpush1.xpose.msra.mxu0 0.0
    %1686 = vmatprep.subr.mxu0 0.0
    %1687 = vmatpush1.xpose.msra.mxu0 0.0
    %1688 = vmatprep.mubr.f32.mxu0 %v1181
    %1689 = vmatmul.mubr.f32.gmra.mrb[0].mxu0 %v1171
    %v1690 = vpop.f32.mrb[0].mxu0
    %v1691 = vadd.f32 %v1621, %v1690
    %v1692 = vpop.f32.mrb[0].mxu0
    %1693 = vdwg.mxu0
    %v1694 = vmul.f32 %v1691, 0.044194173
    %v1695 = vsel %vm957, %v1694, -inf
    %1696 = vmax.xlane.f32.xlu0 %v1695
    %v1697 = vpop.xlane.xlu0 %1696
    %v1698 = vsub.f32 %v1694, %v1697
    %v1699 = vmul.f32 %v1698, 1.442695
    %v1700 = vpow.pop %v1699
    %v1701 = vsel %vm957, %v1700, 0.0
    %1702 = vadd.xlane.f32.xlu0 %v1701
    %v1703 = vpop.xlane.xlu0 %1702
    %v1704 = vrcp.pop %v1703
    %v1705 = vmul.f32 %v1700, %v1704
    %v1707 = vsel %vm969, %v1705, 0
    %v1709 = vsel %vm378, %v1519, 0
    %v1711 = vsel %vm378, %v1529, 0
    %v1713 = vsel %vm378, %v1539, 0
    %v1715 = vsel %vm378, %v1549, 0
    %1717 = vmatprep.subr.mxu0 %v1711
    %1718 = vmatpush1.msra.mxu0 %v1709
    %1719 = vmatprep.subr.mxu0 0.0
    %1720 = vmatpush1.msra.mxu0 0.0
    %1721 = vmatprep.subr.mxu0 0.0
    %1722 = vmatpush1.msra.mxu0 0.0
    %1723 = vmatprep.subr.mxu0 0.0
    %1724 = vmatpush1.msra.mxu0 0.0
    %1725 = vmatprep.subr.mxu0 0.0
    %1726 = vmatpush1.msra.mxu0 0.0
    %1727 = vmatprep.subr.mxu0 0.0
    %1728 = vmatpush1.msra.mxu0 0.0
    %1729 = vmatprep.subr.mxu0 0.0
    %1730 = vmatpush1.msra.mxu0 0.0
    %1731 = vmatprep.subr.mxu0 0.0
    %1732 = vmatpush1.msra.mxu0 0.0
    %1733 = vmatprep.subr.mxu0 0.0
    %1734 = vmatpush1.msra.mxu0 0.0
    %1735 = vmatprep.subr.mxu0 0.0
    %1736 = vmatpush1.msra.mxu0 0.0
    %1737 = vmatprep.subr.mxu0 0.0
    %1738 = vmatpush1.msra.mxu0 0.0
    %1739 = vmatprep.subr.mxu0 0.0
    %1740 = vmatpush1.msra.mxu0 0.0
    %1741 = vmatprep.subr.mxu0 0.0
    %1742 = vmatpush1.msra.mxu0 0.0
    %1743 = vmatprep.subr.mxu0 0.0
    %1744 = vmatpush1.msra.mxu0 0.0
    %1745 = vmatprep.subr.mxu0 0.0
    %1746 = vmatpush1.msra.mxu0 0.0
    %1747 = vmatprep.subr.mxu0 0.0
    %1748 = vmatpush1.msra.mxu0 0.0
    %1749 = vmatprep.subr.mxu0 0.0
    %1750 = vmatpush1.msra.mxu0 0.0
    %1751 = vmatprep.subr.mxu0 0.0
    %1752 = vmatpush1.msra.mxu0 0.0
    %1753 = vmatprep.subr.mxu0 0.0
    %1754 = vmatpush1.msra.mxu0 0.0
    %1755 = vmatprep.subr.mxu0 0.0
    %1756 = vmatpush1.msra.mxu0 0.0
    %1757 = vmatprep.subr.mxu0 0.0
    %1758 = vmatpush1.msra.mxu0 0.0
    %1759 = vmatprep.subr.mxu0 0.0
    %1760 = vmatpush1.msra.mxu0 0.0
    %1761 = vmatprep.subr.mxu0 0.0
    %1762 = vmatpush1.msra.mxu0 0.0
    %1763 = vmatprep.subr.mxu0 0.0
    %1764 = vmatpush1.msra.mxu0 0.0
    %1765 = vmatprep.subr.mxu0 0.0
    %1766 = vmatpush1.msra.mxu0 0.0
    %1767 = vmatprep.subr.mxu0 0.0
    %1768 = vmatpush1.msra.mxu0 0.0
    %1769 = vmatprep.subr.mxu0 0.0
    %1770 = vmatpush1.msra.mxu0 0.0
    %1771 = vmatprep.subr.mxu0 0.0
    %1772 = vmatpush1.msra.mxu0 0.0
    %1773 = vmatprep.subr.mxu0 0.0
    %1774 = vmatpush1.msra.mxu0 0.0
    %1775 = vmatprep.subr.mxu0 0.0
    %1776 = vmatpush1.msra.mxu0 0.0
    %1777 = vmatprep.subr.mxu0 0.0
    %1778 = vmatpush1.msra.mxu0 0.0
    %1779 = vmatprep.subr.mxu0 0.0
    %1780 = vmatpush1.msra.mxu0 0.0
    %1781 = vmatprep.mubr.f32.mxu0 0.0
    %1782 = vmatmul.mubr.f32.gmra.mrb[0].mxu0 %v1707
    %v1783 = vpop.f32.mrb[0].mxu0
    %v1784 = vadd.f32 %v1519, %v1783
    %v1785 = vpop.f32.mrb[0].mxu0
    %v1786 = vadd.f32 %v1529, %v1785
    %1787 = vdwg.mxu0
    %1788 = vmatprep.subr.mxu0 %v1715
    %1789 = vmatpush1.msra.mxu0 %v1713
    %1790 = vmatprep.subr.mxu0 0.0
    %1791 = vmatpush1.msra.mxu0 0.0
    %1792 = vmatprep.subr.mxu0 0.0
    %1793 = vmatpush1.msra.mxu0 0.0
    %1794 = vmatprep.subr.mxu0 0.0
    %1795 = vmatpush1.msra.mxu0 0.0
    %1796 = vmatprep.subr.mxu0 0.0
    %1797 = vmatpush1.msra.mxu0 0.0
    %1798 = vmatprep.subr.mxu0 0.0
    %1799 = vmatpush1.msra.mxu0 0.0
    %1800 = vmatprep.subr.mxu0 0.0
    %1801 = vmatpush1.msra.mxu0 0.0
    %1802 = vmatprep.subr.mxu0 0.0
    %1803 = vmatpush1.msra.mxu0 0.0
    %1804 = vmatprep.subr.mxu0 0.0
    %1805 = vmatpush1.msra.mxu0 0.0
    %1806 = vmatprep.subr.mxu0 0.0
    %1807 = vmatpush1.msra.mxu0 0.0
    %1808 = vmatprep.subr.mxu0 0.0
    %1809 = vmatpush1.msra.mxu0 0.0
    %1810 = vmatprep.subr.mxu0 0.0
    %1811 = vmatpush1.msra.mxu0 0.0
    %1812 = vmatprep.subr.mxu0 0.0
    %1813 = vmatpush1.msra.mxu0 0.0
    %1814 = vmatprep.subr.mxu0 0.0
    %1815 = vmatpush1.msra.mxu0 0.0
    %1816 = vmatprep.subr.mxu0 0.0
    %1817 = vmatpush1.msra.mxu0 0.0
    %1818 = vmatprep.subr.mxu0 0.0
    %1819 = vmatpush1.msra.mxu0 0.0
    %1820 = vmatprep.subr.mxu0 0.0
    %1821 = vmatpush1.msra.mxu0 0.0
    %1822 = vmatprep.subr.mxu0 0.0
    %1823 = vmatpush1.msra.mxu0 0.0
    %1824 = vmatprep.subr.mxu0 0.0
    %1825 = vmatpush1.msra.mxu0 0.0
    %1826 = vmatprep.subr.mxu0 0.0
    %1827 = vmatpush1.msra.mxu0 0.0
    %1828 = vmatprep.subr.mxu0 0.0
    %1829 = vmatpush1.msra.mxu0 0.0
    %1830 = vmatprep.subr.mxu0 0.0
    %1831 = vmatpush1.msra.mxu0 0.0
    %1832 = vmatprep.subr.mxu0 0.0
    %1833 = vmatpush1.msra.mxu0 0.0
    %1834 = vmatprep.subr.mxu0 0.0
    %1835 = vmatpush1.msra.mxu0 0.0
    %1836 = vmatprep.subr.mxu0 0.0
    %1837 = vmatpush1.msra.mxu0 0.0
    %1838 = vmatprep.subr.mxu0 0.0
    %1839 = vmatpush1.msra.mxu0 0.0
    %1840 = vmatprep.subr.mxu0 0.0
    %1841 = vmatpush1.msra.mxu0 0.0
    %1842 = vmatprep.subr.mxu0 0.0
    %1843 = vmatpush1.msra.mxu0 0.0
    %1844 = vmatprep.subr.mxu0 0.0
    %1845 = vmatpush1.msra.mxu0 0.0
    %1846 = vmatprep.subr.mxu0 0.0
    %1847 = vmatpush1.msra.mxu0 0.0
    %1848 = vmatprep.subr.mxu0 0.0
    %1849 = vmatpush1.msra.mxu0 0.0
    %1850 = vmatprep.subr.mxu0 0.0
    %1851 = vmatpush1.msra.mxu0 0.0
    %1852 = vmatprep.mubr.f32.mxu0 0.0
    %1853 = vmatmul.mubr.f32.gmra.mrb[0].mxu0 %v1707
    %v1854 = vpop.f32.mrb[0].mxu0
    %v1855 = vadd.f32 %v1539, %v1854
    %v1856 = vpop.f32.mrb[0].mxu0
    %v1857 = vadd.f32 %v1549, %v1856
    %1858 = vdwg.mxu0
    %v1859 = vmul.f32 %v1784, %v1784
    %v1860 = vmul.f32 %v1786, %v1786
    %v1861 = vmul.f32 %v1855, %v1855
    %v1862 = vmul.f32 %v1857, %v1857
    %v1863 = vsel %vm378, %v1859, 0.0
    %v1864 = vsel %vm378, %v1860, 0.0
    %v1865 = vadd.f32 %v1863, %v1864
    %v1866 = vsel %vm378, %v1861, 0.0
    %v1867 = vadd.f32 %v1865, %v1866
    %v1868 = vsel %vm378, %v1862, 0.0
    %v1869 = vadd.f32 %v1867, %v1868
    %1870 = vadd.xlane.f32.xlu0 %v1869
    %v1871 = vpop.xlane.xlu0 %1870
    %v1872 = vadd.f32 %v1871, 1e-08
    %v1873 = vrsqrt.pop %v1872
    %v1874 = vmul.f32 %v1784, %v1873
    %v1875 = vmul.f32 %v1786, %v1873
    %v1876 = vmul.f32 %v1855, %v1873
    %v1877 = vmul.f32 %v1857, %v1873
    %v1878 = vrot.slane %v74, 4
    %v1879 = vrot.slane %v78, 3
    %v1880 = vsel %vm349, %v1879, %v1878
    %v1881 = vrot.slane %v82, 2
    %v1882 = vsel %vm351, %v1881, %v1880
    %v1883 = vrot.slane %v86, 1
    %v1884 = vsel %vm353, %v1883, %v1882
    %v1885 = vsel %vm355, %v90, %v1884
    %v1886 = vrot.slane %v94, 7
    %v1887 = vsel %vm357, %v1886, %v1885
    %v1888 = vrot.slane %v75, 4
    %v1889 = vrot.slane %v79, 3
    %v1890 = vsel %vm349, %v1889, %v1888
    %v1891 = vrot.slane %v83, 2
    %v1892 = vsel %vm351, %v1891, %v1890
    %v1893 = vrot.slane %v87, 1
    %v1894 = vsel %vm353, %v1893, %v1892
    %v1895 = vsel %vm355, %v91, %v1894
    %v1896 = vrot.slane %v95, 7
    %v1897 = vsel %vm357, %v1896, %v1895
    %v1898 = vrot.slane %v76, 4
    %v1899 = vrot.slane %v80, 3
    %v1900 = vsel %vm349, %v1899, %v1898
    %v1901 = vrot.slane %v84, 2
    %v1902 = vsel %vm351, %v1901, %v1900
    %v1903 = vrot.slane %v88, 1
    %v1904 = vsel %vm353, %v1903, %v1902
    %v1905 = vsel %vm355, %v92, %v1904
    %v1906 = vrot.slane %v96, 7
    %v1907 = vsel %vm357, %v1906, %v1905
    %v1908 = vrot.slane %v77, 4
    %v1909 = vrot.slane %v81, 3
    %v1910 = vsel %vm349, %v1909, %v1908
    %v1911 = vrot.slane %v85, 2
    %v1912 = vsel %vm351, %v1911, %v1910
    %v1913 = vrot.slane %v89, 1
    %v1914 = vsel %vm353, %v1913, %v1912
    %v1915 = vsel %vm355, %v93, %v1914
    %v1916 = vrot.slane %v97, 7
    %v1917 = vsel %vm357, %v1916, %v1915
    %1922 = vmatprep.subr.mxu0 %v1897
    %1923 = vmatpush1.xpose.msra.mxu0 %v1887
    %1924 = vmatprep.subr.mxu0 0.0
    %1925 = vmatpush1.xpose.msra.mxu0 0.0
    %1926 = vmatprep.subr.mxu0 0.0
    %1927 = vmatpush1.xpose.msra.mxu0 0.0
    %1928 = vmatprep.subr.mxu0 0.0
    %1929 = vmatpush1.xpose.msra.mxu0 0.0
    %1930 = vmatprep.subr.mxu0 0.0
    %1931 = vmatpush1.xpose.msra.mxu0 0.0
    %1932 = vmatprep.subr.mxu0 0.0
    %1933 = vmatpush1.xpose.msra.mxu0 0.0
    %1934 = vmatprep.subr.mxu0 0.0
    %1935 = vmatpush1.xpose.msra.mxu0 0.0
    %1936 = vmatprep.subr.mxu0 0.0
    %1937 = vmatpush1.xpose.msra.mxu0 0.0
    %1938 = vmatprep.subr.mxu0 0.0
    %1939 = vmatpush1.xpose.msra.mxu0 0.0
    %1940 = vmatprep.subr.mxu0 0.0
    %1941 = vmatpush1.xpose.msra.mxu0 0.0
    %1942 = vmatprep.subr.mxu0 0.0
    %1943 = vmatpush1.xpose.msra.mxu0 0.0
    %1944 = vmatprep.subr.mxu0 0.0
    %1945 = vmatpush1.xpose.msra.mxu0 0.0
    %1946 = vmatprep.subr.mxu0 0.0
    %1947 = vmatpush1.xpose.msra.mxu0 0.0
    %1948 = vmatprep.subr.mxu0 0.0
    %1949 = vmatpush1.xpose.msra.mxu0 0.0
    %1950 = vmatprep.subr.mxu0 0.0
    %1951 = vmatpush1.xpose.msra.mxu0 0.0
    %1952 = vmatprep.subr.mxu0 0.0
    %1953 = vmatpush1.xpose.msra.mxu0 0.0
    %1954 = vmatprep.subr.mxu0 0.0
    %1955 = vmatpush1.xpose.msra.mxu0 0.0
    %1956 = vmatprep.subr.mxu0 0.0
    %1957 = vmatpush1.xpose.msra.mxu0 0.0
    %1958 = vmatprep.subr.mxu0 0.0
    %1959 = vmatpush1.xpose.msra.mxu0 0.0
    %1960 = vmatprep.subr.mxu0 0.0
    %1961 = vmatpush1.xpose.msra.mxu0 0.0
    %1962 = vmatprep.subr.mxu0 0.0
    %1963 = vmatpush1.xpose.msra.mxu0 0.0
    %1964 = vmatprep.subr.mxu0 0.0
    %1965 = vmatpush1.xpose.msra.mxu0 0.0
    %1966 = vmatprep.subr.mxu0 0.0
    %1967 = vmatpush1.xpose.msra.mxu0 0.0
    %1968 = vmatprep.subr.mxu0 0.0
    %1969 = vmatpush1.xpose.msra.mxu0 0.0
    %1970 = vmatprep.subr.mxu0 0.0
    %1971 = vmatpush1.xpose.msra.mxu0 0.0
    %1972 = vmatprep.subr.mxu0 0.0
    %1973 = vmatpush1.xpose.msra.mxu0 0.0
    %1974 = vmatprep.subr.mxu0 0.0
    %1975 = vmatpush1.xpose.msra.mxu0 0.0
    %1976 = vmatprep.subr.mxu0 0.0
    %1977 = vmatpush1.xpose.msra.mxu0 0.0
    %1978 = vmatprep.subr.mxu0 0.0
    %1979 = vmatpush1.xpose.msra.mxu0 0.0
    %1980 = vmatprep.subr.mxu0 0.0
    %1981 = vmatpush1.xpose.msra.mxu0 0.0
    %1982 = vmatprep.subr.mxu0 0.0
    %1983 = vmatpush1.xpose.msra.mxu0 0.0
    %1984 = vmatprep.subr.mxu0 0.0
    %1985 = vmatpush1.xpose.msra.mxu0 0.0
    %1986 = vmatprep.mubr.f32.mxu0 %v1529
    %1987 = vmatmul.mubr.f32.gmra.mrb[0].mxu0 %v1519
    %v1988 = vpop.f32.mrb[0].mxu0
    %v1989 = vadd.f32 0.0, %v1988
    %v1990 = vpop.f32.mrb[0].mxu0
    %1991 = vdwg.mxu0
    %1992 = vmatprep.subr.mxu0 %v1917
    %1993 = vmatpush1.xpose.msra.mxu0 %v1907
    %1994 = vmatprep.subr.mxu0 0.0
    %1995 = vmatpush1.xpose.msra.mxu0 0.0
    %1996 = vmatprep.subr.mxu0 0.0
    %1997 = vmatpush1.xpose.msra.mxu0 0.0
    %1998 = vmatprep.subr.mxu0 0.0
    %1999 = vmatpush1.xpose.msra.mxu0 0.0
    %2000 = vmatprep.subr.mxu0 0.0
    %2001 = vmatpush1.xpose.msra.mxu0 0.0
    %2002 = vmatprep.subr.mxu0 0.0
    %2003 = vmatpush1.xpose.msra.mxu0 0.0
    %2004 = vmatprep.subr.mxu0 0.0
    %2005 = vmatpush1.xpose.msra.mxu0 0.0
    %2006 = vmatprep.subr.mxu0 0.0
    %2007 = vmatpush1.xpose.msra.mxu0 0.0
    %2008 = vmatprep.subr.mxu0 0.0
    %2009 = vmatpush1.xpose.msra.mxu0 0.0
    %2010 = vmatprep.subr.mxu0 0.0
    %2011 = vmatpush1.xpose.msra.mxu0 0.0
    %2012 = vmatprep.subr.mxu0 0.0
    %2013 = vmatpush1.xpose.msra.mxu0 0.0
    %2014 = vmatprep.subr.mxu0 0.0
    %2015 = vmatpush1.xpose.msra.mxu0 0.0
    %2016 = vmatprep.subr.mxu0 0.0
    %2017 = vmatpush1.xpose.msra.mxu0 0.0
    %2018 = vmatprep.subr.mxu0 0.0
    %2019 = vmatpush1.xpose.msra.mxu0 0.0
    %2020 = vmatprep.subr.mxu0 0.0
    %2021 = vmatpush1.xpose.msra.mxu0 0.0
    %2022 = vmatprep.subr.mxu0 0.0
    %2023 = vmatpush1.xpose.msra.mxu0 0.0
    %2024 = vmatprep.subr.mxu0 0.0
    %2025 = vmatpush1.xpose.msra.mxu0 0.0
    %2026 = vmatprep.subr.mxu0 0.0
    %2027 = vmatpush1.xpose.msra.mxu0 0.0
    %2028 = vmatprep.subr.mxu0 0.0
    %2029 = vmatpush1.xpose.msra.mxu0 0.0
    %2030 = vmatprep.subr.mxu0 0.0
    %2031 = vmatpush1.xpose.msra.mxu0 0.0
    %2032 = vmatprep.subr.mxu0 0.0
    %2033 = vmatpush1.xpose.msra.mxu0 0.0
    %2034 = vmatprep.subr.mxu0 0.0
    %2035 = vmatpush1.xpose.msra.mxu0 0.0
    %2036 = vmatprep.subr.mxu0 0.0
    %2037 = vmatpush1.xpose.msra.mxu0 0.0
    %2038 = vmatprep.subr.mxu0 0.0
    %2039 = vmatpush1.xpose.msra.mxu0 0.0
    %2040 = vmatprep.subr.mxu0 0.0
    %2041 = vmatpush1.xpose.msra.mxu0 0.0
    %2042 = vmatprep.subr.mxu0 0.0
    %2043 = vmatpush1.xpose.msra.mxu0 0.0
    %2044 = vmatprep.subr.mxu0 0.0
    %2045 = vmatpush1.xpose.msra.mxu0 0.0
    %2046 = vmatprep.subr.mxu0 0.0
    %2047 = vmatpush1.xpose.msra.mxu0 0.0
    %2048 = vmatprep.subr.mxu0 0.0
    %2049 = vmatpush1.xpose.msra.mxu0 0.0
    %2050 = vmatprep.subr.mxu0 0.0
    %2051 = vmatpush1.xpose.msra.mxu0 0.0
    %2052 = vmatprep.subr.mxu0 0.0
    %2053 = vmatpush1.xpose.msra.mxu0 0.0
    %2054 = vmatprep.subr.mxu0 0.0
    %2055 = vmatpush1.xpose.msra.mxu0 0.0
    %2056 = vmatprep.mubr.f32.mxu0 %v1549
    %2057 = vmatmul.mubr.f32.gmra.mrb[0].mxu0 %v1539
    %v2058 = vpop.f32.mrb[0].mxu0
    %v2059 = vadd.f32 %v1989, %v2058
    %v2060 = vpop.f32.mrb[0].mxu0
    %2061 = vdwg.mxu0
    %v2062 = vmul.f32 %v2059, 0.044194173
    %v2063 = vsel %vm957, %v2062, -inf
    %2064 = vmax.xlane.f32.xlu0 %v2063
    %v2065 = vpop.xlane.xlu0 %2064
    %v2066 = vsub.f32 %v2062, %v2065
    %v2067 = vmul.f32 %v2066, 1.442695
    %v2068 = vpow.pop %v2067
    %v2069 = vsel %vm957, %v2068, 0.0
    %2070 = vadd.xlane.f32.xlu0 %v2069
    %v2071 = vpop.xlane.xlu0 %2070
    %v2072 = vrcp.pop %v2071
    %v2073 = vmul.f32 %v2068, %v2072
    %v2075 = vsel %vm969, %v2073, 0
    %v2077 = vsel %vm378, %v1887, 0
    %v2079 = vsel %vm378, %v1897, 0
    %v2081 = vsel %vm378, %v1907, 0
    %v2083 = vsel %vm378, %v1917, 0
    %2085 = vmatprep.subr.mxu0 %v2079
    %2086 = vmatpush1.msra.mxu0 %v2077
    %2087 = vmatprep.subr.mxu0 0.0
    %2088 = vmatpush1.msra.mxu0 0.0
    %2089 = vmatprep.subr.mxu0 0.0
    %2090 = vmatpush1.msra.mxu0 0.0
    %2091 = vmatprep.subr.mxu0 0.0
    %2092 = vmatpush1.msra.mxu0 0.0
    %2093 = vmatprep.subr.mxu0 0.0
    %2094 = vmatpush1.msra.mxu0 0.0
    %2095 = vmatprep.subr.mxu0 0.0
    %2096 = vmatpush1.msra.mxu0 0.0
    %2097 = vmatprep.subr.mxu0 0.0
    %2098 = vmatpush1.msra.mxu0 0.0
    %2099 = vmatprep.subr.mxu0 0.0
    %2100 = vmatpush1.msra.mxu0 0.0
    %2101 = vmatprep.subr.mxu0 0.0
    %2102 = vmatpush1.msra.mxu0 0.0
    %2103 = vmatprep.subr.mxu0 0.0
    %2104 = vmatpush1.msra.mxu0 0.0
    %2105 = vmatprep.subr.mxu0 0.0
    %2106 = vmatpush1.msra.mxu0 0.0
    %2107 = vmatprep.subr.mxu0 0.0
    %2108 = vmatpush1.msra.mxu0 0.0
    %2109 = vmatprep.subr.mxu0 0.0
    %2110 = vmatpush1.msra.mxu0 0.0
    %2111 = vmatprep.subr.mxu0 0.0
    %2112 = vmatpush1.msra.mxu0 0.0
    %2113 = vmatprep.subr.mxu0 0.0
    %2114 = vmatpush1.msra.mxu0 0.0
    %2115 = vmatprep.subr.mxu0 0.0
    %2116 = vmatpush1.msra.mxu0 0.0
    %2117 = vmatprep.subr.mxu0 0.0
    %2118 = vmatpush1.msra.mxu0 0.0
    %2119 = vmatprep.subr.mxu0 0.0
    %2120 = vmatpush1.msra.mxu0 0.0
    %2121 = vmatprep.subr.mxu0 0.0
    %2122 = vmatpush1.msra.mxu0 0.0
    %2123 = vmatprep.subr.mxu0 0.0
    %2124 = vmatpush1.msra.mxu0 0.0
    %2125 = vmatprep.subr.mxu0 0.0
    %2126 = vmatpush1.msra.mxu0 0.0
    %2127 = vmatprep.subr.mxu0 0.0
    %2128 = vmatpush1.msra.mxu0 0.0
    %2129 = vmatprep.subr.mxu0 0.0
    %2130 = vmatpush1.msra.mxu0 0.0
    %2131 = vmatprep.subr.mxu0 0.0
    %2132 = vmatpush1.msra.mxu0 0.0
    %2133 = vmatprep.subr.mxu0 0.0
    %2134 = vmatpush1.msra.mxu0 0.0
    %2135 = vmatprep.subr.mxu0 0.0
    %2136 = vmatpush1.msra.mxu0 0.0
    %2137 = vmatprep.subr.mxu0 0.0
    %2138 = vmatpush1.msra.mxu0 0.0
    %2139 = vmatprep.subr.mxu0 0.0
    %2140 = vmatpush1.msra.mxu0 0.0
    %2141 = vmatprep.subr.mxu0 0.0
    %2142 = vmatpush1.msra.mxu0 0.0
    %2143 = vmatprep.subr.mxu0 0.0
    %2144 = vmatpush1.msra.mxu0 0.0
    %2145 = vmatprep.subr.mxu0 0.0
    %2146 = vmatpush1.msra.mxu0 0.0
    %2147 = vmatprep.subr.mxu0 0.0
    %2148 = vmatpush1.msra.mxu0 0.0
    %2149 = vmatprep.mubr.f32.mxu0 0.0
    %2150 = vmatmul.mubr.f32.gmra.mrb[0].mxu0 %v2075
    %v2151 = vpop.f32.mrb[0].mxu0
    %v2152 = vadd.f32 %v1887, %v2151
    %v2153 = vpop.f32.mrb[0].mxu0
    %v2154 = vadd.f32 %v1897, %v2153
    %2155 = vdwg.mxu0
    %2156 = vmatprep.subr.mxu0 %v2083
    %2157 = vmatpush1.msra.mxu0 %v2081
    %2158 = vmatprep.subr.mxu0 0.0
    %2159 = vmatpush1.msra.mxu0 0.0
    %2160 = vmatprep.subr.mxu0 0.0
    %2161 = vmatpush1.msra.mxu0 0.0
    %2162 = vmatprep.subr.mxu0 0.0
    %2163 = vmatpush1.msra.mxu0 0.0
    %2164 = vmatprep.subr.mxu0 0.0
    %2165 = vmatpush1.msra.mxu0 0.0
    %2166 = vmatprep.subr.mxu0 0.0
    %2167 = vmatpush1.msra.mxu0 0.0
    %2168 = vmatprep.subr.mxu0 0.0
    %2169 = vmatpush1.msra.mxu0 0.0
    %2170 = vmatprep.subr.mxu0 0.0
    %2171 = vmatpush1.msra.mxu0 0.0
    %2172 = vmatprep.subr.mxu0 0.0
    %2173 = vmatpush1.msra.mxu0 0.0
    %2174 = vmatprep.subr.mxu0 0.0
    %2175 = vmatpush1.msra.mxu0 0.0
    %2176 = vmatprep.subr.mxu0 0.0
    %2177 = vmatpush1.msra.mxu0 0.0
    %2178 = vmatprep.subr.mxu0 0.0
    %2179 = vmatpush1.msra.mxu0 0.0
    %2180 = vmatprep.subr.mxu0 0.0
    %2181 = vmatpush1.msra.mxu0 0.0
    %2182 = vmatprep.subr.mxu0 0.0
    %2183 = vmatpush1.msra.mxu0 0.0
    %2184 = vmatprep.subr.mxu0 0.0
    %2185 = vmatpush1.msra.mxu0 0.0
    %2186 = vmatprep.subr.mxu0 0.0
    %2187 = vmatpush1.msra.mxu0 0.0
    %2188 = vmatprep.subr.mxu0 0.0
    %2189 = vmatpush1.msra.mxu0 0.0
    %2190 = vmatprep.subr.mxu0 0.0
    %2191 = vmatpush1.msra.mxu0 0.0
    %2192 = vmatprep.subr.mxu0 0.0
    %2193 = vmatpush1.msra.mxu0 0.0
    %2194 = vmatprep.subr.mxu0 0.0
    %2195 = vmatpush1.msra.mxu0 0.0
    %2196 = vmatprep.subr.mxu0 0.0
    %2197 = vmatpush1.msra.mxu0 0.0
    %2198 = vmatprep.subr.mxu0 0.0
    %2199 = vmatpush1.msra.mxu0 0.0
    %2200 = vmatprep.subr.mxu0 0.0
    %2201 = vmatpush1.msra.mxu0 0.0
    %2202 = vmatprep.subr.mxu0 0.0
    %2203 = vmatpush1.msra.mxu0 0.0
    %2204 = vmatprep.subr.mxu0 0.0
    %2205 = vmatpush1.msra.mxu0 0.0
    %2206 = vmatprep.subr.mxu0 0.0
    %2207 = vmatpush1.msra.mxu0 0.0
    %2208 = vmatprep.subr.mxu0 0.0
    %2209 = vmatpush1.msra.mxu0 0.0
    %2210 = vmatprep.subr.mxu0 0.0
    %2211 = vmatpush1.msra.mxu0 0.0
    %2212 = vmatprep.subr.mxu0 0.0
    %2213 = vmatpush1.msra.mxu0 0.0
    %2214 = vmatprep.subr.mxu0 0.0
    %2215 = vmatpush1.msra.mxu0 0.0
    %2216 = vmatprep.subr.mxu0 0.0
    %2217 = vmatpush1.msra.mxu0 0.0
    %2218 = vmatprep.subr.mxu0 0.0
    %2219 = vmatpush1.msra.mxu0 0.0
    %2220 = vmatprep.mubr.f32.mxu0 0.0
    %2221 = vmatmul.mubr.f32.gmra.mrb[0].mxu0 %v2075
    %v2222 = vpop.f32.mrb[0].mxu0
    %v2223 = vadd.f32 %v1907, %v2222
    %v2224 = vpop.f32.mrb[0].mxu0
    %v2225 = vadd.f32 %v1917, %v2224
    %2226 = vdwg.mxu0
    %v2227 = vmul.f32 %v2152, %v2152
    %v2228 = vmul.f32 %v2154, %v2154
    %v2229 = vmul.f32 %v2223, %v2223
    %v2230 = vmul.f32 %v2225, %v2225
    %v2231 = vsel %vm378, %v2227, 0.0
    %v2232 = vsel %vm378, %v2228, 0.0
    %v2233 = vadd.f32 %v2231, %v2232
    %v2234 = vsel %vm378, %v2229, 0.0
    %v2235 = vadd.f32 %v2233, %v2234
    %v2236 = vsel %vm378, %v2230, 0.0
    %v2237 = vadd.f32 %v2235, %v2236
    %2238 = vadd.xlane.f32.xlu0 %v2237
    %v2239 = vpop.xlane.xlu0 %2238
    %v2240 = vadd.f32 %v2239, 1e-08
    %v2241 = vrsqrt.pop %v2240
    %v2242 = vmul.f32 %v2152, %v2241
    %v2243 = vmul.f32 %v2154, %v2241
    %v2244 = vmul.f32 %v2223, %v2241
    %v2245 = vmul.f32 %v2225, %v2241
    %v2246 = vrot.slane %v74, 5
    %v2247 = vrot.slane %v78, 4
    %v2248 = vsel %vm349, %v2247, %v2246
    %v2249 = vrot.slane %v82, 3
    %v2250 = vsel %vm351, %v2249, %v2248
    %v2251 = vrot.slane %v86, 2
    %v2252 = vsel %vm353, %v2251, %v2250
    %v2253 = vrot.slane %v90, 1
    %v2254 = vsel %vm355, %v2253, %v2252
    %v2255 = vsel %vm357, %v94, %v2254
    %v2256 = vrot.slane %v75, 5
    %v2257 = vrot.slane %v79, 4
    %v2258 = vsel %vm349, %v2257, %v2256
    %v2259 = vrot.slane %v83, 3
    %v2260 = vsel %vm351, %v2259, %v2258
    %v2261 = vrot.slane %v87, 2
    %v2262 = vsel %vm353, %v2261, %v2260
    %v2263 = vrot.slane %v91, 1
    %v2264 = vsel %vm355, %v2263, %v2262
    %v2265 = vsel %vm357, %v95, %v2264
    %v2266 = vrot.slane %v76, 5
    %v2267 = vrot.slane %v80, 4
    %v2268 = vsel %vm349, %v2267, %v2266
    %v2269 = vrot.slane %v84, 3
    %v2270 = vsel %vm351, %v2269, %v2268
    %v2271 = vrot.slane %v88, 2
    %v2272 = vsel %vm353, %v2271, %v2270
    %v2273 = vrot.slane %v92, 1
    %v2274 = vsel %vm355, %v2273, %v2272
    %v2275 = vsel %vm357, %v96, %v2274
    %v2276 = vrot.slane %v77, 5
    %v2277 = vrot.slane %v81, 4
    %v2278 = vsel %vm349, %v2277, %v2276
    %v2279 = vrot.slane %v85, 3
    %v2280 = vsel %vm351, %v2279, %v2278
    %v2281 = vrot.slane %v89, 2
    %v2282 = vsel %vm353, %v2281, %v2280
    %v2283 = vrot.slane %v93, 1
    %v2284 = vsel %vm355, %v2283, %v2282
    %v2285 = vsel %vm357, %v97, %v2284
    %2290 = vmatprep.subr.mxu0 %v2265
    %2291 = vmatpush1.xpose.msra.mxu0 %v2255
    %2292 = vmatprep.subr.mxu0 0.0
    %2293 = vmatpush1.xpose.msra.mxu0 0.0
    %2294 = vmatprep.subr.mxu0 0.0
    %2295 = vmatpush1.xpose.msra.mxu0 0.0
    %2296 = vmatprep.subr.mxu0 0.0
    %2297 = vmatpush1.xpose.msra.mxu0 0.0
    %2298 = vmatprep.subr.mxu0 0.0
    %2299 = vmatpush1.xpose.msra.mxu0 0.0
    %2300 = vmatprep.subr.mxu0 0.0
    %2301 = vmatpush1.xpose.msra.mxu0 0.0
    %2302 = vmatprep.subr.mxu0 0.0
    %2303 = vmatpush1.xpose.msra.mxu0 0.0
    %2304 = vmatprep.subr.mxu0 0.0
    %2305 = vmatpush1.xpose.msra.mxu0 0.0
    %2306 = vmatprep.subr.mxu0 0.0
    %2307 = vmatpush1.xpose.msra.mxu0 0.0
    %2308 = vmatprep.subr.mxu0 0.0
    %2309 = vmatpush1.xpose.msra.mxu0 0.0
    %2310 = vmatprep.subr.mxu0 0.0
    %2311 = vmatpush1.xpose.msra.mxu0 0.0
    %2312 = vmatprep.subr.mxu0 0.0
    %2313 = vmatpush1.xpose.msra.mxu0 0.0
    %2314 = vmatprep.subr.mxu0 0.0
    %2315 = vmatpush1.xpose.msra.mxu0 0.0
    %2316 = vmatprep.subr.mxu0 0.0
    %2317 = vmatpush1.xpose.msra.mxu0 0.0
    %2318 = vmatprep.subr.mxu0 0.0
    %2319 = vmatpush1.xpose.msra.mxu0 0.0
    %2320 = vmatprep.subr.mxu0 0.0
    %2321 = vmatpush1.xpose.msra.mxu0 0.0
    %2322 = vmatprep.subr.mxu0 0.0
    %2323 = vmatpush1.xpose.msra.mxu0 0.0
    %2324 = vmatprep.subr.mxu0 0.0
    %2325 = vmatpush1.xpose.msra.mxu0 0.0
    %2326 = vmatprep.subr.mxu0 0.0
    %2327 = vmatpush1.xpose.msra.mxu0 0.0
    %2328 = vmatprep.subr.mxu0 0.0
    %2329 = vmatpush1.xpose.msra.mxu0 0.0
    %2330 = vmatprep.subr.mxu0 0.0
    %2331 = vmatpush1.xpose.msra.mxu0 0.0
    %2332 = vmatprep.subr.mxu0 0.0
    %2333 = vmatpush1.xpose.msra.mxu0 0.0
    %2334 = vmatprep.subr.mxu0 0.0
    %2335 = vmatpush1.xpose.msra.mxu0 0.0
    %2336 = vmatprep.subr.mxu0 0.0
    %2337 = vmatpush1.xpose.msra.mxu0 0.0
    %2338 = vmatprep.subr.mxu0 0.0
    %2339 = vmatpush1.xpose.msra.mxu0 0.0
    %2340 = vmatprep.subr.mxu0 0.0
    %2341 = vmatpush1.xpose.msra.mxu0 0.0
    %2342 = vmatprep.subr.mxu0 0.0
    %2343 = vmatpush1.xpose.msra.mxu0 0.0
    %2344 = vmatprep.subr.mxu0 0.0
    %2345 = vmatpush1.xpose.msra.mxu0 0.0
    %2346 = vmatprep.subr.mxu0 0.0
    %2347 = vmatpush1.xpose.msra.mxu0 0.0
    %2348 = vmatprep.subr.mxu0 0.0
    %2349 = vmatpush1.xpose.msra.mxu0 0.0
    %2350 = vmatprep.subr.mxu0 0.0
    %2351 = vmatpush1.xpose.msra.mxu0 0.0
    %2352 = vmatprep.subr.mxu0 0.0
    %2353 = vmatpush1.xpose.msra.mxu0 0.0
    %2354 = vmatprep.mubr.f32.mxu0 %v1897
    %2355 = vmatmul.mubr.f32.gmra.mrb[0].mxu0 %v1887
    %v2356 = vpop.f32.mrb[0].mxu0
    %v2357 = vadd.f32 0.0, %v2356
    %v2358 = vpop.f32.mrb[0].mxu0
    %2359 = vdwg.mxu0
    %2360 = vmatprep.subr.mxu0 %v2285
    %2361 = vmatpush1.xpose.msra.mxu0 %v2275
    %2362 = vmatprep.subr.mxu0 0.0
    %2363 = vmatpush1.xpose.msra.mxu0 0.0
    %2364 = vmatprep.subr.mxu0 0.0
    %2365 = vmatpush1.xpose.msra.mxu0 0.0
    %2366 = vmatprep.subr.mxu0 0.0
    %2367 = vmatpush1.xpose.msra.mxu0 0.0
    %2368 = vmatprep.subr.mxu0 0.0
    %2369 = vmatpush1.xpose.msra.mxu0 0.0
    %2370 = vmatprep.subr.mxu0 0.0
    %2371 = vmatpush1.xpose.msra.mxu0 0.0
    %2372 = vmatprep.subr.mxu0 0.0
    %2373 = vmatpush1.xpose.msra.mxu0 0.0
    %2374 = vmatprep.subr.mxu0 0.0
    %2375 = vmatpush1.xpose.msra.mxu0 0.0
    %2376 = vmatprep.subr.mxu0 0.0
    %2377 = vmatpush1.xpose.msra.mxu0 0.0
    %2378 = vmatprep.subr.mxu0 0.0
    %2379 = vmatpush1.xpose.msra.mxu0 0.0
    %2380 = vmatprep.subr.mxu0 0.0
    %2381 = vmatpush1.xpose.msra.mxu0 0.0
    %2382 = vmatprep.subr.mxu0 0.0
    %2383 = vmatpush1.xpose.msra.mxu0 0.0
    %2384 = vmatprep.subr.mxu0 0.0
    %2385 = vmatpush1.xpose.msra.mxu0 0.0
    %2386 = vmatprep.subr.mxu0 0.0
    %2387 = vmatpush1.xpose.msra.mxu0 0.0
    %2388 = vmatprep.subr.mxu0 0.0
    %2389 = vmatpush1.xpose.msra.mxu0 0.0
    %2390 = vmatprep.subr.mxu0 0.0
    %2391 = vmatpush1.xpose.msra.mxu0 0.0
    %2392 = vmatprep.subr.mxu0 0.0
    %2393 = vmatpush1.xpose.msra.mxu0 0.0
    %2394 = vmatprep.subr.mxu0 0.0
    %2395 = vmatpush1.xpose.msra.mxu0 0.0
    %2396 = vmatprep.subr.mxu0 0.0
    %2397 = vmatpush1.xpose.msra.mxu0 0.0
    %2398 = vmatprep.subr.mxu0 0.0
    %2399 = vmatpush1.xpose.msra.mxu0 0.0
    %2400 = vmatprep.subr.mxu0 0.0
    %2401 = vmatpush1.xpose.msra.mxu0 0.0
    %2402 = vmatprep.subr.mxu0 0.0
    %2403 = vmatpush1.xpose.msra.mxu0 0.0
    %2404 = vmatprep.subr.mxu0 0.0
    %2405 = vmatpush1.xpose.msra.mxu0 0.0
    %2406 = vmatprep.subr.mxu0 0.0
    %2407 = vmatpush1.xpose.msra.mxu0 0.0
    %2408 = vmatprep.subr.mxu0 0.0
    %2409 = vmatpush1.xpose.msra.mxu0 0.0
    %2410 = vmatprep.subr.mxu0 0.0
    %2411 = vmatpush1.xpose.msra.mxu0 0.0
    %2412 = vmatprep.subr.mxu0 0.0
    %2413 = vmatpush1.xpose.msra.mxu0 0.0
    %2414 = vmatprep.subr.mxu0 0.0
    %2415 = vmatpush1.xpose.msra.mxu0 0.0
    %2416 = vmatprep.subr.mxu0 0.0
    %2417 = vmatpush1.xpose.msra.mxu0 0.0
    %2418 = vmatprep.subr.mxu0 0.0
    %2419 = vmatpush1.xpose.msra.mxu0 0.0
    %2420 = vmatprep.subr.mxu0 0.0
    %2421 = vmatpush1.xpose.msra.mxu0 0.0
    %2422 = vmatprep.subr.mxu0 0.0
    %2423 = vmatpush1.xpose.msra.mxu0 0.0
    %2424 = vmatprep.mubr.f32.mxu0 %v1917
    %2425 = vmatmul.mubr.f32.gmra.mrb[0].mxu0 %v1907
    %v2426 = vpop.f32.mrb[0].mxu0
    %v2427 = vadd.f32 %v2357, %v2426
    %v2428 = vpop.f32.mrb[0].mxu0
    %2429 = vdwg.mxu0
    %v2430 = vmul.f32 %v2427, 0.044194173
    %v2431 = vsel %vm957, %v2430, -inf
    %2432 = vmax.xlane.f32.xlu0 %v2431
    %v2433 = vpop.xlane.xlu0 %2432
    %v2434 = vsub.f32 %v2430, %v2433
    %v2435 = vmul.f32 %v2434, 1.442695
    %v2436 = vpow.pop %v2435
    %v2437 = vsel %vm957, %v2436, 0.0
    %2438 = vadd.xlane.f32.xlu0 %v2437
    %v2439 = vpop.xlane.xlu0 %2438
    %v2440 = vrcp.pop %v2439
    %v2441 = vmul.f32 %v2436, %v2440
    %v2443 = vsel %vm969, %v2441, 0
    %v2445 = vsel %vm378, %v2255, 0
    %v2447 = vsel %vm378, %v2265, 0
    %v2449 = vsel %vm378, %v2275, 0
    %v2451 = vsel %vm378, %v2285, 0
    %2453 = vmatprep.subr.mxu0 %v2447
    %2454 = vmatpush1.msra.mxu0 %v2445
    %2455 = vmatprep.subr.mxu0 0.0
    %2456 = vmatpush1.msra.mxu0 0.0
    %2457 = vmatprep.subr.mxu0 0.0
    %2458 = vmatpush1.msra.mxu0 0.0
    %2459 = vmatprep.subr.mxu0 0.0
    %2460 = vmatpush1.msra.mxu0 0.0
    %2461 = vmatprep.subr.mxu0 0.0
    %2462 = vmatpush1.msra.mxu0 0.0
    %2463 = vmatprep.subr.mxu0 0.0
    %2464 = vmatpush1.msra.mxu0 0.0
    %2465 = vmatprep.subr.mxu0 0.0
    %2466 = vmatpush1.msra.mxu0 0.0
    %2467 = vmatprep.subr.mxu0 0.0
    %2468 = vmatpush1.msra.mxu0 0.0
    %2469 = vmatprep.subr.mxu0 0.0
    %2470 = vmatpush1.msra.mxu0 0.0
    %2471 = vmatprep.subr.mxu0 0.0
    %2472 = vmatpush1.msra.mxu0 0.0
    %2473 = vmatprep.subr.mxu0 0.0
    %2474 = vmatpush1.msra.mxu0 0.0
    %2475 = vmatprep.subr.mxu0 0.0
    %2476 = vmatpush1.msra.mxu0 0.0
    %2477 = vmatprep.subr.mxu0 0.0
    %2478 = vmatpush1.msra.mxu0 0.0
    %2479 = vmatprep.subr.mxu0 0.0
    %2480 = vmatpush1.msra.mxu0 0.0
    %2481 = vmatprep.subr.mxu0 0.0
    %2482 = vmatpush1.msra.mxu0 0.0
    %2483 = vmatprep.subr.mxu0 0.0
    %2484 = vmatpush1.msra.mxu0 0.0
    %2485 = vmatprep.subr.mxu0 0.0
    %2486 = vmatpush1.msra.mxu0 0.0
    %2487 = vmatprep.subr.mxu0 0.0
    %2488 = vmatpush1.msra.mxu0 0.0
    %2489 = vmatprep.subr.mxu0 0.0
    %2490 = vmatpush1.msra.mxu0 0.0
    %2491 = vmatprep.subr.mxu0 0.0
    %2492 = vmatpush1.msra.mxu0 0.0
    %2493 = vmatprep.subr.mxu0 0.0
    %2494 = vmatpush1.msra.mxu0 0.0
    %2495 = vmatprep.subr.mxu0 0.0
    %2496 = vmatpush1.msra.mxu0 0.0
    %2497 = vmatprep.subr.mxu0 0.0
    %2498 = vmatpush1.msra.mxu0 0.0
    %2499 = vmatprep.subr.mxu0 0.0
    %2500 = vmatpush1.msra.mxu0 0.0
    %2501 = vmatprep.subr.mxu0 0.0
    %2502 = vmatpush1.msra.mxu0 0.0
    %2503 = vmatprep.subr.mxu0 0.0
    %2504 = vmatpush1.msra.mxu0 0.0
    %2505 = vmatprep.subr.mxu0 0.0
    %2506 = vmatpush1.msra.mxu0 0.0
    %2507 = vmatprep.subr.mxu0 0.0
    %2508 = vmatpush1.msra.mxu0 0.0
    %2509 = vmatprep.subr.mxu0 0.0
    %2510 = vmatpush1.msra.mxu0 0.0
    %2511 = vmatprep.subr.mxu0 0.0
    %2512 = vmatpush1.msra.mxu0 0.0
    %2513 = vmatprep.subr.mxu0 0.0
    %2514 = vmatpush1.msra.mxu0 0.0
    %2515 = vmatprep.subr.mxu0 0.0
    %2516 = vmatpush1.msra.mxu0 0.0
    %2517 = vmatprep.mubr.f32.mxu0 0.0
    %2518 = vmatmul.mubr.f32.gmra.mrb[0].mxu0 %v2443
    %v2519 = vpop.f32.mrb[0].mxu0
    %v2520 = vadd.f32 %v2255, %v2519
    %v2521 = vpop.f32.mrb[0].mxu0
    %v2522 = vadd.f32 %v2265, %v2521
    %2523 = vdwg.mxu0
    %2524 = vmatprep.subr.mxu0 %v2451
    %2525 = vmatpush1.msra.mxu0 %v2449
    %2526 = vmatprep.subr.mxu0 0.0
    %2527 = vmatpush1.msra.mxu0 0.0
    %2528 = vmatprep.subr.mxu0 0.0
    %2529 = vmatpush1.msra.mxu0 0.0
    %2530 = vmatprep.subr.mxu0 0.0
    %2531 = vmatpush1.msra.mxu0 0.0
    %2532 = vmatprep.subr.mxu0 0.0
    %2533 = vmatpush1.msra.mxu0 0.0
    %2534 = vmatprep.subr.mxu0 0.0
    %2535 = vmatpush1.msra.mxu0 0.0
    %2536 = vmatprep.subr.mxu0 0.0
    %2537 = vmatpush1.msra.mxu0 0.0
    %2538 = vmatprep.subr.mxu0 0.0
    %2539 = vmatpush1.msra.mxu0 0.0
    %2540 = vmatprep.subr.mxu0 0.0
    %2541 = vmatpush1.msra.mxu0 0.0
    %2542 = vmatprep.subr.mxu0 0.0
    %2543 = vmatpush1.msra.mxu0 0.0
    %2544 = vmatprep.subr.mxu0 0.0
    %2545 = vmatpush1.msra.mxu0 0.0
    %2546 = vmatprep.subr.mxu0 0.0
    %2547 = vmatpush1.msra.mxu0 0.0
    %2548 = vmatprep.subr.mxu0 0.0
    %2549 = vmatpush1.msra.mxu0 0.0
    %2550 = vmatprep.subr.mxu0 0.0
    %2551 = vmatpush1.msra.mxu0 0.0
    %2552 = vmatprep.subr.mxu0 0.0
    %2553 = vmatpush1.msra.mxu0 0.0
    %2554 = vmatprep.subr.mxu0 0.0
    %2555 = vmatpush1.msra.mxu0 0.0
    %2556 = vmatprep.subr.mxu0 0.0
    %2557 = vmatpush1.msra.mxu0 0.0
    %2558 = vmatprep.subr.mxu0 0.0
    %2559 = vmatpush1.msra.mxu0 0.0
    %2560 = vmatprep.subr.mxu0 0.0
    %2561 = vmatpush1.msra.mxu0 0.0
    %2562 = vmatprep.subr.mxu0 0.0
    %2563 = vmatpush1.msra.mxu0 0.0
    %2564 = vmatprep.subr.mxu0 0.0
    %2565 = vmatpush1.msra.mxu0 0.0
    %2566 = vmatprep.subr.mxu0 0.0
    %2567 = vmatpush1.msra.mxu0 0.0
    %2568 = vmatprep.subr.mxu0 0.0
    %2569 = vmatpush1.msra.mxu0 0.0
    %2570 = vmatprep.subr.mxu0 0.0
    %2571 = vmatpush1.msra.mxu0 0.0
    %2572 = vmatprep.subr.mxu0 0.0
    %2573 = vmatpush1.msra.mxu0 0.0
    %2574 = vmatprep.subr.mxu0 0.0
    %2575 = vmatpush1.msra.mxu0 0.0
    %2576 = vmatprep.subr.mxu0 0.0
    %2577 = vmatpush1.msra.mxu0 0.0
    %2578 = vmatprep.subr.mxu0 0.0
    %2579 = vmatpush1.msra.mxu0 0.0
    %2580 = vmatprep.subr.mxu0 0.0
    %2581 = vmatpush1.msra.mxu0 0.0
    %2582 = vmatprep.subr.mxu0 0.0
    %2583 = vmatpush1.msra.mxu0 0.0
    %2584 = vmatprep.subr.mxu0 0.0
    %2585 = vmatpush1.msra.mxu0 0.0
    %2586 = vmatprep.subr.mxu0 0.0
    %2587 = vmatpush1.msra.mxu0 0.0
    %2588 = vmatprep.mubr.f32.mxu0 0.0
    %2589 = vmatmul.mubr.f32.gmra.mrb[0].mxu0 %v2443
    %v2590 = vpop.f32.mrb[0].mxu0
    %v2591 = vadd.f32 %v2275, %v2590
    %v2592 = vpop.f32.mrb[0].mxu0
    %v2593 = vadd.f32 %v2285, %v2592
    %2594 = vdwg.mxu0
    %v2595 = vmul.f32 %v2520, %v2520
    %v2596 = vmul.f32 %v2522, %v2522
    %v2597 = vmul.f32 %v2591, %v2591
    %v2598 = vmul.f32 %v2593, %v2593
    %v2599 = vsel %vm378, %v2595, 0.0
    %v2600 = vsel %vm378, %v2596, 0.0
    %v2601 = vadd.f32 %v2599, %v2600
    %v2602 = vsel %vm378, %v2597, 0.0
    %v2603 = vadd.f32 %v2601, %v2602
    %v2604 = vsel %vm378, %v2598, 0.0
    %v2605 = vadd.f32 %v2603, %v2604
    %2606 = vadd.xlane.f32.xlu0 %v2605
    %v2607 = vpop.xlane.xlu0 %2606
    %v2608 = vadd.f32 %v2607, 1e-08
    %v2609 = vrsqrt.pop %v2608
    %v2610 = vmul.f32 %v2520, %v2609
    %v2611 = vmul.f32 %v2522, %v2609
    %v2612 = vmul.f32 %v2591, %v2609
    %v2613 = vmul.f32 %v2593, %v2609
    %v2614 = vrot.slane %v74, 6
    %v2615 = vrot.slane %v78, 5
    %v2616 = vsel %vm349, %v2615, %v2614
    %v2617 = vrot.slane %v82, 4
    %v2618 = vsel %vm351, %v2617, %v2616
    %v2619 = vrot.slane %v86, 3
    %v2620 = vsel %vm353, %v2619, %v2618
    %v2621 = vrot.slane %v90, 2
    %v2622 = vsel %vm355, %v2621, %v2620
    %v2623 = vrot.slane %v94, 1
    %v2624 = vsel %vm357, %v2623, %v2622
    %v2625 = vrot.slane %v75, 6
    %v2626 = vrot.slane %v79, 5
    %v2627 = vsel %vm349, %v2626, %v2625
    %v2628 = vrot.slane %v83, 4
    %v2629 = vsel %vm351, %v2628, %v2627
    %v2630 = vrot.slane %v87, 3
    %v2631 = vsel %vm353, %v2630, %v2629
    %v2632 = vrot.slane %v91, 2
    %v2633 = vsel %vm355, %v2632, %v2631
    %v2634 = vrot.slane %v95, 1
    %v2635 = vsel %vm357, %v2634, %v2633
    %v2636 = vrot.slane %v76, 6
    %v2637 = vrot.slane %v80, 5
    %v2638 = vsel %vm349, %v2637, %v2636
    %v2639 = vrot.slane %v84, 4
    %v2640 = vsel %vm351, %v2639, %v2638
    %v2641 = vrot.slane %v88, 3
    %v2642 = vsel %vm353, %v2641, %v2640
    %v2643 = vrot.slane %v92, 2
    %v2644 = vsel %vm355, %v2643, %v2642
    %v2645 = vrot.slane %v96, 1
    %v2646 = vsel %vm357, %v2645, %v2644
    %v2647 = vrot.slane %v77, 6
    %v2648 = vrot.slane %v81, 5
    %v2649 = vsel %vm349, %v2648, %v2647
    %v2650 = vrot.slane %v85, 4
    %v2651 = vsel %vm351, %v2650, %v2649
    %v2652 = vrot.slane %v89, 3
    %v2653 = vsel %vm353, %v2652, %v2651
    %v2654 = vrot.slane %v93, 2
    %v2655 = vsel %vm355, %v2654, %v2653
    %v2656 = vrot.slane %v97, 1
    %v2657 = vsel %vm357, %v2656, %v2655
    %2662 = vmatprep.subr.mxu0 %v2635
    %2663 = vmatpush1.xpose.msra.mxu0 %v2624
    %2664 = vmatprep.subr.mxu0 0.0
    %2665 = vmatpush1.xpose.msra.mxu0 0.0
    %2666 = vmatprep.subr.mxu0 0.0
    %2667 = vmatpush1.xpose.msra.mxu0 0.0
    %2668 = vmatprep.subr.mxu0 0.0
    %2669 = vmatpush1.xpose.msra.mxu0 0.0
    %2670 = vmatprep.subr.mxu0 0.0
    %2671 = vmatpush1.xpose.msra.mxu0 0.0
    %2672 = vmatprep.subr.mxu0 0.0
    %2673 = vmatpush1.xpose.msra.mxu0 0.0
    %2674 = vmatprep.subr.mxu0 0.0
    %2675 = vmatpush1.xpose.msra.mxu0 0.0
    %2676 = vmatprep.subr.mxu0 0.0
    %2677 = vmatpush1.xpose.msra.mxu0 0.0
    %2678 = vmatprep.subr.mxu0 0.0
    %2679 = vmatpush1.xpose.msra.mxu0 0.0
    %2680 = vmatprep.subr.mxu0 0.0
    %2681 = vmatpush1.xpose.msra.mxu0 0.0
    %2682 = vmatprep.subr.mxu0 0.0
    %2683 = vmatpush1.xpose.msra.mxu0 0.0
    %2684 = vmatprep.subr.mxu0 0.0
    %2685 = vmatpush1.xpose.msra.mxu0 0.0
    %2686 = vmatprep.subr.mxu0 0.0
    %2687 = vmatpush1.xpose.msra.mxu0 0.0
    %2688 = vmatprep.subr.mxu0 0.0
    %2689 = vmatpush1.xpose.msra.mxu0 0.0
    %2690 = vmatprep.subr.mxu0 0.0
    %2691 = vmatpush1.xpose.msra.mxu0 0.0
    %2692 = vmatprep.subr.mxu0 0.0
    %2693 = vmatpush1.xpose.msra.mxu0 0.0
    %2694 = vmatprep.subr.mxu0 0.0
    %2695 = vmatpush1.xpose.msra.mxu0 0.0
    %2696 = vmatprep.subr.mxu0 0.0
    %2697 = vmatpush1.xpose.msra.mxu0 0.0
    %2698 = vmatprep.subr.mxu0 0.0
    %2699 = vmatpush1.xpose.msra.mxu0 0.0
    %2700 = vmatprep.subr.mxu0 0.0
    %2701 = vmatpush1.xpose.msra.mxu0 0.0
    %2702 = vmatprep.subr.mxu0 0.0
    %2703 = vmatpush1.xpose.msra.mxu0 0.0
    %2704 = vmatprep.subr.mxu0 0.0
    %2705 = vmatpush1.xpose.msra.mxu0 0.0
    %2706 = vmatprep.subr.mxu0 0.0
    %2707 = vmatpush1.xpose.msra.mxu0 0.0
    %2708 = vmatprep.subr.mxu0 0.0
    %2709 = vmatpush1.xpose.msra.mxu0 0.0
    %2710 = vmatprep.subr.mxu0 0.0
    %2711 = vmatpush1.xpose.msra.mxu0 0.0
    %2712 = vmatprep.subr.mxu0 0.0
    %2713 = vmatpush1.xpose.msra.mxu0 0.0
    %2714 = vmatprep.subr.mxu0 0.0
    %2715 = vmatpush1.xpose.msra.mxu0 0.0
    %2716 = vmatprep.subr.mxu0 0.0
    %2717 = vmatpush1.xpose.msra.mxu0 0.0
    %2718 = vmatprep.subr.mxu0 0.0
    %2719 = vmatpush1.xpose.msra.mxu0 0.0
    %2720 = vmatprep.subr.mxu0 0.0
    %2721 = vmatpush1.xpose.msra.mxu0 0.0
    %2722 = vmatprep.subr.mxu0 0.0
    %2723 = vmatpush1.xpose.msra.mxu0 0.0
    %2724 = vmatprep.subr.mxu0 0.0
    %2725 = vmatpush1.xpose.msra.mxu0 0.0
    %2726 = vmatprep.mubr.f32.mxu0 %v2265
    %2727 = vmatmul.mubr.f32.gmra.mrb[0].mxu0 %v2255
    %v2728 = vpop.f32.mrb[0].mxu0
    %v2729 = vadd.f32 0.0, %v2728
    %v2730 = vpop.f32.mrb[0].mxu0
    %2731 = vdwg.mxu0
    %2732 = vmatprep.subr.mxu0 %v2657
    %2733 = vmatpush1.xpose.msra.mxu0 %v2646
    %2734 = vmatprep.subr.mxu0 0.0
    %2735 = vmatpush1.xpose.msra.mxu0 0.0
    %2736 = vmatprep.subr.mxu0 0.0
    %2737 = vmatpush1.xpose.msra.mxu0 0.0
    %2738 = vmatprep.subr.mxu0 0.0
    %2739 = vmatpush1.xpose.msra.mxu0 0.0
    %2740 = vmatprep.subr.mxu0 0.0
    %2741 = vmatpush1.xpose.msra.mxu0 0.0
    %2742 = vmatprep.subr.mxu0 0.0
    %2743 = vmatpush1.xpose.msra.mxu0 0.0
    %2744 = vmatprep.subr.mxu0 0.0
    %2745 = vmatpush1.xpose.msra.mxu0 0.0
    %2746 = vmatprep.subr.mxu0 0.0
    %2747 = vmatpush1.xpose.msra.mxu0 0.0
    %2748 = vmatprep.subr.mxu0 0.0
    %2749 = vmatpush1.xpose.msra.mxu0 0.0
    %2750 = vmatprep.subr.mxu0 0.0
    %2751 = vmatpush1.xpose.msra.mxu0 0.0
    %2752 = vmatprep.subr.mxu0 0.0
    %2753 = vmatpush1.xpose.msra.mxu0 0.0
    %2754 = vmatprep.subr.mxu0 0.0
    %2755 = vmatpush1.xpose.msra.mxu0 0.0
    %2756 = vmatprep.subr.mxu0 0.0
    %2757 = vmatpush1.xpose.msra.mxu0 0.0
    %2758 = vmatprep.subr.mxu0 0.0
    %2759 = vmatpush1.xpose.msra.mxu0 0.0
    %2760 = vmatprep.subr.mxu0 0.0
    %2761 = vmatpush1.xpose.msra.mxu0 0.0
    %2762 = vmatprep.subr.mxu0 0.0
    %2763 = vmatpush1.xpose.msra.mxu0 0.0
    %2764 = vmatprep.subr.mxu0 0.0
    %2765 = vmatpush1.xpose.msra.mxu0 0.0
    %2766 = vmatprep.subr.mxu0 0.0
    %2767 = vmatpush1.xpose.msra.mxu0 0.0
    %2768 = vmatprep.subr.mxu0 0.0
    %2769 = vmatpush1.xpose.msra.mxu0 0.0
    %2770 = vmatprep.subr.mxu0 0.0
    %2771 = vmatpush1.xpose.msra.mxu0 0.0
    %2772 = vmatprep.subr.mxu0 0.0
    %2773 = vmatpush1.xpose.msra.mxu0 0.0
    %2774 = vmatprep.subr.mxu0 0.0
    %2775 = vmatpush1.xpose.msra.mxu0 0.0
    %2776 = vmatprep.subr.mxu0 0.0
    %2777 = vmatpush1.xpose.msra.mxu0 0.0
    %2778 = vmatprep.subr.mxu0 0.0
    %2779 = vmatpush1.xpose.msra.mxu0 0.0
    %2780 = vmatprep.subr.mxu0 0.0
    %2781 = vmatpush1.xpose.msra.mxu0 0.0
    %2782 = vmatprep.subr.mxu0 0.0
    %2783 = vmatpush1.xpose.msra.mxu0 0.0
    %2784 = vmatprep.subr.mxu0 0.0
    %2785 = vmatpush1.xpose.msra.mxu0 0.0
    %2786 = vmatprep.subr.mxu0 0.0
    %2787 = vmatpush1.xpose.msra.mxu0 0.0
    %2788 = vmatprep.subr.mxu0 0.0
    %2789 = vmatpush1.xpose.msra.mxu0 0.0
    %2790 = vmatprep.subr.mxu0 0.0
    %2791 = vmatpush1.xpose.msra.mxu0 0.0
    %2792 = vmatprep.subr.mxu0 0.0
    %2793 = vmatpush1.xpose.msra.mxu0 0.0
    %2794 = vmatprep.subr.mxu0 0.0
    %2795 = vmatpush1.xpose.msra.mxu0 0.0
    %2796 = vmatprep.mubr.f32.mxu0 %v2285
    %2797 = vmatmul.mubr.f32.gmra.mrb[0].mxu0 %v2275
    %v2798 = vpop.f32.mrb[0].mxu0
    %v2799 = vadd.f32 %v2729, %v2798
    %v2800 = vpop.f32.mrb[0].mxu0
    %2801 = vdwg.mxu0
    %v2802 = vmul.f32 %v2799, 0.044194173
    %v2803 = vsel %vm957, %v2802, -inf
    %2804 = vmax.xlane.f32.xlu0 %v2803
    %v2805 = vpop.xlane.xlu0 %2804
    %v2806 = vsub.f32 %v2802, %v2805
    %v2807 = vmul.f32 %v2806, 1.442695
    %v2808 = vpow.pop %v2807
    %v2809 = vsel %vm957, %v2808, 0.0
    %2810 = vadd.xlane.f32.xlu0 %v2809
    %v2811 = vpop.xlane.xlu0 %2810
    %v2812 = vrcp.pop %v2811
    %v2813 = vmul.f32 %v2808, %v2812
    %v2815 = vsel %vm969, %v2813, 0
    %v2817 = vsel %vm378, %v2624, 0
    %v2819 = vsel %vm378, %v2635, 0
    %v2821 = vsel %vm378, %v2646, 0
    %v2823 = vsel %vm378, %v2657, 0
    %2825 = vmatprep.subr.mxu0 %v2819
    %2826 = vmatpush1.msra.mxu0 %v2817
    %2827 = vmatprep.subr.mxu0 0.0
    %2828 = vmatpush1.msra.mxu0 0.0
    %2829 = vmatprep.subr.mxu0 0.0
    %2830 = vmatpush1.msra.mxu0 0.0
    %2831 = vmatprep.subr.mxu0 0.0
    %2832 = vmatpush1.msra.mxu0 0.0
    %2833 = vmatprep.subr.mxu0 0.0
    %2834 = vmatpush1.msra.mxu0 0.0
    %2835 = vmatprep.subr.mxu0 0.0
    %2836 = vmatpush1.msra.mxu0 0.0
    %2837 = vmatprep.subr.mxu0 0.0
    %2838 = vmatpush1.msra.mxu0 0.0
    %2839 = vmatprep.subr.mxu0 0.0
    %2840 = vmatpush1.msra.mxu0 0.0
    %2841 = vmatprep.subr.mxu0 0.0
    %2842 = vmatpush1.msra.mxu0 0.0
    %2843 = vmatprep.subr.mxu0 0.0
    %2844 = vmatpush1.msra.mxu0 0.0
    %2845 = vmatprep.subr.mxu0 0.0
    %2846 = vmatpush1.msra.mxu0 0.0
    %2847 = vmatprep.subr.mxu0 0.0
    %2848 = vmatpush1.msra.mxu0 0.0
    %2849 = vmatprep.subr.mxu0 0.0
    %2850 = vmatpush1.msra.mxu0 0.0
    %2851 = vmatprep.subr.mxu0 0.0
    %2852 = vmatpush1.msra.mxu0 0.0
    %2853 = vmatprep.subr.mxu0 0.0
    %2854 = vmatpush1.msra.mxu0 0.0
    %2855 = vmatprep.subr.mxu0 0.0
    %2856 = vmatpush1.msra.mxu0 0.0
    %2857 = vmatprep.subr.mxu0 0.0
    %2858 = vmatpush1.msra.mxu0 0.0
    %2859 = vmatprep.subr.mxu0 0.0
    %2860 = vmatpush1.msra.mxu0 0.0
    %2861 = vmatprep.subr.mxu0 0.0
    %2862 = vmatpush1.msra.mxu0 0.0
    %2863 = vmatprep.subr.mxu0 0.0
    %2864 = vmatpush1.msra.mxu0 0.0
    %2865 = vmatprep.subr.mxu0 0.0
    %2866 = vmatpush1.msra.mxu0 0.0
    %2867 = vmatprep.subr.mxu0 0.0
    %2868 = vmatpush1.msra.mxu0 0.0
    %2869 = vmatprep.subr.mxu0 0.0
    %2870 = vmatpush1.msra.mxu0 0.0
    %2871 = vmatprep.subr.mxu0 0.0
    %2872 = vmatpush1.msra.mxu0 0.0
    %2873 = vmatprep.subr.mxu0 0.0
    %2874 = vmatpush1.msra.mxu0 0.0
    %2875 = vmatprep.subr.mxu0 0.0
    %2876 = vmatpush1.msra.mxu0 0.0
    %2877 = vmatprep.subr.mxu0 0.0
    %2878 = vmatpush1.msra.mxu0 0.0
    %2879 = vmatprep.subr.mxu0 0.0
    %2880 = vmatpush1.msra.mxu0 0.0
    %2881 = vmatprep.subr.mxu0 0.0
    %2882 = vmatpush1.msra.mxu0 0.0
    %2883 = vmatprep.subr.mxu0 0.0
    %2884 = vmatpush1.msra.mxu0 0.0
    %2885 = vmatprep.subr.mxu0 0.0
    %2886 = vmatpush1.msra.mxu0 0.0
    %2887 = vmatprep.subr.mxu0 0.0
    %2888 = vmatpush1.msra.mxu0 0.0
    %2889 = vmatprep.mubr.f32.mxu0 0.0
    %2890 = vmatmul.mubr.f32.gmra.mrb[0].mxu0 %v2815
    %v2891 = vpop.f32.mrb[0].mxu0
    %v2892 = vadd.f32 %v2624, %v2891
    %v2893 = vpop.f32.mrb[0].mxu0
    %v2894 = vadd.f32 %v2635, %v2893
    %2895 = vdwg.mxu0
    %2896 = vmatprep.subr.mxu0 %v2823
    %2897 = vmatpush1.msra.mxu0 %v2821
    %2898 = vmatprep.subr.mxu0 0.0
    %2899 = vmatpush1.msra.mxu0 0.0
    %2900 = vmatprep.subr.mxu0 0.0
    %2901 = vmatpush1.msra.mxu0 0.0
    %2902 = vmatprep.subr.mxu0 0.0
    %2903 = vmatpush1.msra.mxu0 0.0
    %2904 = vmatprep.subr.mxu0 0.0
    %2905 = vmatpush1.msra.mxu0 0.0
    %2906 = vmatprep.subr.mxu0 0.0
    %2907 = vmatpush1.msra.mxu0 0.0
    %2908 = vmatprep.subr.mxu0 0.0
    %2909 = vmatpush1.msra.mxu0 0.0
    %2910 = vmatprep.subr.mxu0 0.0
    %2911 = vmatpush1.msra.mxu0 0.0
    %2912 = vmatprep.subr.mxu0 0.0
    %2913 = vmatpush1.msra.mxu0 0.0
    %2914 = vmatprep.subr.mxu0 0.0
    %2915 = vmatpush1.msra.mxu0 0.0
    %2916 = vmatprep.subr.mxu0 0.0
    %2917 = vmatpush1.msra.mxu0 0.0
    %2918 = vmatprep.subr.mxu0 0.0
    %2919 = vmatpush1.msra.mxu0 0.0
    %2920 = vmatprep.subr.mxu0 0.0
    %2921 = vmatpush1.msra.mxu0 0.0
    %2922 = vmatprep.subr.mxu0 0.0
    %2923 = vmatpush1.msra.mxu0 0.0
    %2924 = vmatprep.subr.mxu0 0.0
    %2925 = vmatpush1.msra.mxu0 0.0
    %2926 = vmatprep.subr.mxu0 0.0
    %2927 = vmatpush1.msra.mxu0 0.0
    %2928 = vmatprep.subr.mxu0 0.0
    %2929 = vmatpush1.msra.mxu0 0.0
    %2930 = vmatprep.subr.mxu0 0.0
    %2931 = vmatpush1.msra.mxu0 0.0
    %2932 = vmatprep.subr.mxu0 0.0
    %2933 = vmatpush1.msra.mxu0 0.0
    %2934 = vmatprep.subr.mxu0 0.0
    %2935 = vmatpush1.msra.mxu0 0.0
    %2936 = vmatprep.subr.mxu0 0.0
    %2937 = vmatpush1.msra.mxu0 0.0
    %2938 = vmatprep.subr.mxu0 0.0
    %2939 = vmatpush1.msra.mxu0 0.0
    %2940 = vmatprep.subr.mxu0 0.0
    %2941 = vmatpush1.msra.mxu0 0.0
    %2942 = vmatprep.subr.mxu0 0.0
    %2943 = vmatpush1.msra.mxu0 0.0
    %2944 = vmatprep.subr.mxu0 0.0
    %2945 = vmatpush1.msra.mxu0 0.0
    %2946 = vmatprep.subr.mxu0 0.0
    %2947 = vmatpush1.msra.mxu0 0.0
    %2948 = vmatprep.subr.mxu0 0.0
    %2949 = vmatpush1.msra.mxu0 0.0
    %2950 = vmatprep.subr.mxu0 0.0
    %2951 = vmatpush1.msra.mxu0 0.0
    %2952 = vmatprep.subr.mxu0 0.0
    %2953 = vmatpush1.msra.mxu0 0.0
    %2954 = vmatprep.subr.mxu0 0.0
    %2955 = vmatpush1.msra.mxu0 0.0
    %2956 = vmatprep.subr.mxu0 0.0
    %2957 = vmatpush1.msra.mxu0 0.0
    %2958 = vmatprep.subr.mxu0 0.0
    %2959 = vmatpush1.msra.mxu0 0.0
    %2960 = vmatprep.mubr.f32.mxu0 0.0
    %2961 = vmatmul.mubr.f32.gmra.mrb[0].mxu0 %v2815
    %v2962 = vpop.f32.mrb[0].mxu0
    %v2963 = vadd.f32 %v2646, %v2962
    %v2964 = vpop.f32.mrb[0].mxu0
    %v2965 = vadd.f32 %v2657, %v2964
    %2966 = vdwg.mxu0
    %v2967 = vmul.f32 %v2892, %v2892
    %v2968 = vmul.f32 %v2894, %v2894
    %v2969 = vmul.f32 %v2963, %v2963
    %v2970 = vmul.f32 %v2965, %v2965
    %v2971 = vsel %vm378, %v2967, 0.0
    %v2972 = vsel %vm378, %v2968, 0.0
    %v2973 = vadd.f32 %v2971, %v2972
    %v2974 = vsel %vm378, %v2969, 0.0
    %v2975 = vadd.f32 %v2973, %v2974
    %v2976 = vsel %vm378, %v2970, 0.0
    %v2977 = vadd.f32 %v2975, %v2976
    %2978 = vadd.xlane.f32.xlu0 %v2977
    %v2979 = vpop.xlane.xlu0 %2978
    %v2980 = vadd.f32 %v2979, 1e-08
    %v2981 = vrsqrt.pop %v2980
    %v2982 = vmul.f32 %v2892, %v2981
    %v2983 = vmul.f32 %v2894, %v2981
    %v2984 = vmul.f32 %v2963, %v2981
    %v2985 = vmul.f32 %v2965, %v2981
    %v2986 = vrot.slane %v74, 7
    %v2987 = vrot.slane %v78, 6
    %v2988 = vsel %vm349, %v2987, %v2986
    %v2989 = vrot.slane %v82, 5
    %v2990 = vsel %vm351, %v2989, %v2988
    %v2991 = vrot.slane %v86, 4
    %v2992 = vsel %vm353, %v2991, %v2990
    %v2993 = vrot.slane %v90, 3
    %v2994 = vsel %vm355, %v2993, %v2992
    %v2995 = vrot.slane %v94, 2
    %v2996 = vsel %vm357, %v2995, %v2994
    %v2997 = vrot.slane %v75, 7
    %v2998 = vrot.slane %v79, 6
    %v2999 = vsel %vm349, %v2998, %v2997
    %v3000 = vrot.slane %v83, 5
    %v3001 = vsel %vm351, %v3000, %v2999
    %v3002 = vrot.slane %v87, 4
    %v3003 = vsel %vm353, %v3002, %v3001
    %v3004 = vrot.slane %v91, 3
    %v3005 = vsel %vm355, %v3004, %v3003
    %v3006 = vrot.slane %v95, 2
    %v3007 = vsel %vm357, %v3006, %v3005
    %v3008 = vrot.slane %v76, 7
    %v3009 = vrot.slane %v80, 6
    %v3010 = vsel %vm349, %v3009, %v3008
    %v3011 = vrot.slane %v84, 5
    %v3012 = vsel %vm351, %v3011, %v3010
    %v3013 = vrot.slane %v88, 4
    %v3014 = vsel %vm353, %v3013, %v3012
    %v3015 = vrot.slane %v92, 3
    %v3016 = vsel %vm355, %v3015, %v3014
    %v3017 = vrot.slane %v96, 2
    %v3018 = vsel %vm357, %v3017, %v3016
    %v3019 = vrot.slane %v77, 7
    %v3020 = vrot.slane %v81, 6
    %v3021 = vsel %vm349, %v3020, %v3019
    %v3022 = vrot.slane %v85, 5
    %v3023 = vsel %vm351, %v3022, %v3021
    %v3024 = vrot.slane %v89, 4
    %v3025 = vsel %vm353, %v3024, %v3023
    %v3026 = vrot.slane %v93, 3
    %v3027 = vsel %vm355, %v3026, %v3025
    %v3028 = vrot.slane %v97, 2
    %v3029 = vsel %vm357, %v3028, %v3027
    %3034 = vmatprep.subr.mxu0 %v3007
    %3035 = vmatpush1.xpose.msra.mxu0 %v2996
    %3036 = vmatprep.subr.mxu0 0.0
    %3037 = vmatpush1.xpose.msra.mxu0 0.0
    %3038 = vmatprep.subr.mxu0 0.0
    %3039 = vmatpush1.xpose.msra.mxu0 0.0
    %3040 = vmatprep.subr.mxu0 0.0
    %3041 = vmatpush1.xpose.msra.mxu0 0.0
    %3042 = vmatprep.subr.mxu0 0.0
    %3043 = vmatpush1.xpose.msra.mxu0 0.0
    %3044 = vmatprep.subr.mxu0 0.0
    %3045 = vmatpush1.xpose.msra.mxu0 0.0
    %3046 = vmatprep.subr.mxu0 0.0
    %3047 = vmatpush1.xpose.msra.mxu0 0.0
    %3048 = vmatprep.subr.mxu0 0.0
    %3049 = vmatpush1.xpose.msra.mxu0 0.0
    %3050 = vmatprep.subr.mxu0 0.0
    %3051 = vmatpush1.xpose.msra.mxu0 0.0
    %3052 = vmatprep.subr.mxu0 0.0
    %3053 = vmatpush1.xpose.msra.mxu0 0.0
    %3054 = vmatprep.subr.mxu0 0.0
    %3055 = vmatpush1.xpose.msra.mxu0 0.0
    %3056 = vmatprep.subr.mxu0 0.0
    %3057 = vmatpush1.xpose.msra.mxu0 0.0
    %3058 = vmatprep.subr.mxu0 0.0
    %3059 = vmatpush1.xpose.msra.mxu0 0.0
    %3060 = vmatprep.subr.mxu0 0.0
    %3061 = vmatpush1.xpose.msra.mxu0 0.0
    %3062 = vmatprep.subr.mxu0 0.0
    %3063 = vmatpush1.xpose.msra.mxu0 0.0
    %3064 = vmatprep.subr.mxu0 0.0
    %3065 = vmatpush1.xpose.msra.mxu0 0.0
    %3066 = vmatprep.subr.mxu0 0.0
    %3067 = vmatpush1.xpose.msra.mxu0 0.0
    %3068 = vmatprep.subr.mxu0 0.0
    %3069 = vmatpush1.xpose.msra.mxu0 0.0
    %3070 = vmatprep.subr.mxu0 0.0
    %3071 = vmatpush1.xpose.msra.mxu0 0.0
    %3072 = vmatprep.subr.mxu0 0.0
    %3073 = vmatpush1.xpose.msra.mxu0 0.0
    %3074 = vmatprep.subr.mxu0 0.0
    %3075 = vmatpush1.xpose.msra.mxu0 0.0
    %3076 = vmatprep.subr.mxu0 0.0
    %3077 = vmatpush1.xpose.msra.mxu0 0.0
    %3078 = vmatprep.subr.mxu0 0.0
    %3079 = vmatpush1.xpose.msra.mxu0 0.0
    %3080 = vmatprep.subr.mxu0 0.0
    %3081 = vmatpush1.xpose.msra.mxu0 0.0
    %3082 = vmatprep.subr.mxu0 0.0
    %3083 = vmatpush1.xpose.msra.mxu0 0.0
    %3084 = vmatprep.subr.mxu0 0.0
    %3085 = vmatpush1.xpose.msra.mxu0 0.0
    %3086 = vmatprep.subr.mxu0 0.0
    %3087 = vmatpush1.xpose.msra.mxu0 0.0
    %3088 = vmatprep.subr.mxu0 0.0
    %3089 = vmatpush1.xpose.msra.mxu0 0.0
    %3090 = vmatprep.subr.mxu0 0.0
    %3091 = vmatpush1.xpose.msra.mxu0 0.0
    %3092 = vmatprep.subr.mxu0 0.0
    %3093 = vmatpush1.xpose.msra.mxu0 0.0
    %3094 = vmatprep.subr.mxu0 0.0
    %3095 = vmatpush1.xpose.msra.mxu0 0.0
    %3096 = vmatprep.subr.mxu0 0.0
    %3097 = vmatpush1.xpose.msra.mxu0 0.0
    %3098 = vmatprep.mubr.f32.mxu0 %v2635
    %3099 = vmatmul.mubr.f32.gmra.mrb[0].mxu0 %v2624
    %v3100 = vpop.f32.mrb[0].mxu0
    %v3101 = vadd.f32 0.0, %v3100
    %v3102 = vpop.f32.mrb[0].mxu0
    %3103 = vdwg.mxu0
    %3104 = vmatprep.subr.mxu0 %v3029
    %3105 = vmatpush1.xpose.msra.mxu0 %v3018
    %3106 = vmatprep.subr.mxu0 0.0
    %3107 = vmatpush1.xpose.msra.mxu0 0.0
    %3108 = vmatprep.subr.mxu0 0.0
    %3109 = vmatpush1.xpose.msra.mxu0 0.0
    %3110 = vmatprep.subr.mxu0 0.0
    %3111 = vmatpush1.xpose.msra.mxu0 0.0
    %3112 = vmatprep.subr.mxu0 0.0
    %3113 = vmatpush1.xpose.msra.mxu0 0.0
    %3114 = vmatprep.subr.mxu0 0.0
    %3115 = vmatpush1.xpose.msra.mxu0 0.0
    %3116 = vmatprep.subr.mxu0 0.0
    %3117 = vmatpush1.xpose.msra.mxu0 0.0
    %3118 = vmatprep.subr.mxu0 0.0
    %3119 = vmatpush1.xpose.msra.mxu0 0.0
    %3120 = vmatprep.subr.mxu0 0.0
    %3121 = vmatpush1.xpose.msra.mxu0 0.0
    %3122 = vmatprep.subr.mxu0 0.0
    %3123 = vmatpush1.xpose.msra.mxu0 0.0
    %3124 = vmatprep.subr.mxu0 0.0
    %3125 = vmatpush1.xpose.msra.mxu0 0.0
    %3126 = vmatprep.subr.mxu0 0.0
    %3127 = vmatpush1.xpose.msra.mxu0 0.0
    %3128 = vmatprep.subr.mxu0 0.0
    %3129 = vmatpush1.xpose.msra.mxu0 0.0
    %3130 = vmatprep.subr.mxu0 0.0
    %3131 = vmatpush1.xpose.msra.mxu0 0.0
    %3132 = vmatprep.subr.mxu0 0.0
    %3133 = vmatpush1.xpose.msra.mxu0 0.0
    %3134 = vmatprep.subr.mxu0 0.0
    %3135 = vmatpush1.xpose.msra.mxu0 0.0
    %3136 = vmatprep.subr.mxu0 0.0
    %3137 = vmatpush1.xpose.msra.mxu0 0.0
    %3138 = vmatprep.subr.mxu0 0.0
    %3139 = vmatpush1.xpose.msra.mxu0 0.0
    %3140 = vmatprep.subr.mxu0 0.0
    %3141 = vmatpush1.xpose.msra.mxu0 0.0
    %3142 = vmatprep.subr.mxu0 0.0
    %3143 = vmatpush1.xpose.msra.mxu0 0.0
    %3144 = vmatprep.subr.mxu0 0.0
    %3145 = vmatpush1.xpose.msra.mxu0 0.0
    %3146 = vmatprep.subr.mxu0 0.0
    %3147 = vmatpush1.xpose.msra.mxu0 0.0
    %3148 = vmatprep.subr.mxu0 0.0
    %3149 = vmatpush1.xpose.msra.mxu0 0.0
    %3150 = vmatprep.subr.mxu0 0.0
    %3151 = vmatpush1.xpose.msra.mxu0 0.0
    %3152 = vmatprep.subr.mxu0 0.0
    %3153 = vmatpush1.xpose.msra.mxu0 0.0
    %3154 = vmatprep.subr.mxu0 0.0
    %3155 = vmatpush1.xpose.msra.mxu0 0.0
    %3156 = vmatprep.subr.mxu0 0.0
    %3157 = vmatpush1.xpose.msra.mxu0 0.0
    %3158 = vmatprep.subr.mxu0 0.0
    %3159 = vmatpush1.xpose.msra.mxu0 0.0
    %3160 = vmatprep.subr.mxu0 0.0
    %3161 = vmatpush1.xpose.msra.mxu0 0.0
    %3162 = vmatprep.subr.mxu0 0.0
    %3163 = vmatpush1.xpose.msra.mxu0 0.0
    %3164 = vmatprep.subr.mxu0 0.0
    %3165 = vmatpush1.xpose.msra.mxu0 0.0
    %3166 = vmatprep.subr.mxu0 0.0
    %3167 = vmatpush1.xpose.msra.mxu0 0.0
    %3168 = vmatprep.mubr.f32.mxu0 %v2657
    %3169 = vmatmul.mubr.f32.gmra.mrb[0].mxu0 %v2646
    %v3170 = vpop.f32.mrb[0].mxu0
    %v3171 = vadd.f32 %v3101, %v3170
    %v3172 = vpop.f32.mrb[0].mxu0
    %3173 = vdwg.mxu0
    %v3174 = vmul.f32 %v3171, 0.044194173
    %v3175 = vsel %vm957, %v3174, -inf
    %3176 = vmax.xlane.f32.xlu0 %v3175
    %v3177 = vpop.xlane.xlu0 %3176
    %v3178 = vsub.f32 %v3174, %v3177
    %v3179 = vmul.f32 %v3178, 1.442695
    %v3180 = vpow.pop %v3179
    %v3181 = vsel %vm957, %v3180, 0.0
    %3182 = vadd.xlane.f32.xlu0 %v3181
    %v3183 = vpop.xlane.xlu0 %3182
    %v3184 = vrcp.pop %v3183
    %v3185 = vmul.f32 %v3180, %v3184
    %v3187 = vsel %vm969, %v3185, 0
    %v3189 = vsel %vm378, %v2996, 0
    %v3191 = vsel %vm378, %v3007, 0
    %v3193 = vsel %vm378, %v3018, 0
    %v3195 = vsel %vm378, %v3029, 0
    %3197 = vmatprep.subr.mxu0 %v3191
    %3198 = vmatpush1.msra.mxu0 %v3189
    %3199 = vmatprep.subr.mxu0 0.0
    %3200 = vmatpush1.msra.mxu0 0.0
    %3201 = vmatprep.subr.mxu0 0.0
    %3202 = vmatpush1.msra.mxu0 0.0
    %3203 = vmatprep.subr.mxu0 0.0
    %3204 = vmatpush1.msra.mxu0 0.0
    %3205 = vmatprep.subr.mxu0 0.0
    %3206 = vmatpush1.msra.mxu0 0.0
    %3207 = vmatprep.subr.mxu0 0.0
    %3208 = vmatpush1.msra.mxu0 0.0
    %3209 = vmatprep.subr.mxu0 0.0
    %3210 = vmatpush1.msra.mxu0 0.0
    %3211 = vmatprep.subr.mxu0 0.0
    %3212 = vmatpush1.msra.mxu0 0.0
    %3213 = vmatprep.subr.mxu0 0.0
    %3214 = vmatpush1.msra.mxu0 0.0
    %3215 = vmatprep.subr.mxu0 0.0
    %3216 = vmatpush1.msra.mxu0 0.0
    %3217 = vmatprep.subr.mxu0 0.0
    %3218 = vmatpush1.msra.mxu0 0.0
    %3219 = vmatprep.subr.mxu0 0.0
    %3220 = vmatpush1.msra.mxu0 0.0
    %3221 = vmatprep.subr.mxu0 0.0
    %3222 = vmatpush1.msra.mxu0 0.0
    %3223 = vmatprep.subr.mxu0 0.0
    %3224 = vmatpush1.msra.mxu0 0.0
    %3225 = vmatprep.subr.mxu0 0.0
    %3226 = vmatpush1.msra.mxu0 0.0
    %3227 = vmatprep.subr.mxu0 0.0
    %3228 = vmatpush1.msra.mxu0 0.0
    %3229 = vmatprep.subr.mxu0 0.0
    %3230 = vmatpush1.msra.mxu0 0.0
    %3231 = vmatprep.subr.mxu0 0.0
    %3232 = vmatpush1.msra.mxu0 0.0
    %3233 = vmatprep.subr.mxu0 0.0
    %3234 = vmatpush1.msra.mxu0 0.0
    %3235 = vmatprep.subr.mxu0 0.0
    %3236 = vmatpush1.msra.mxu0 0.0
    %3237 = vmatprep.subr.mxu0 0.0
    %3238 = vmatpush1.msra.mxu0 0.0
    %3239 = vmatprep.subr.mxu0 0.0
    %3240 = vmatpush1.msra.mxu0 0.0
    %3241 = vmatprep.subr.mxu0 0.0
    %3242 = vmatpush1.msra.mxu0 0.0
    %3243 = vmatprep.subr.mxu0 0.0
    %3244 = vmatpush1.msra.mxu0 0.0
    %3245 = vmatprep.subr.mxu0 0.0
    %3246 = vmatpush1.msra.mxu0 0.0
    %3247 = vmatprep.subr.mxu0 0.0
    %3248 = vmatpush1.msra.mxu0 0.0
    %3249 = vmatprep.subr.mxu0 0.0
    %3250 = vmatpush1.msra.mxu0 0.0
    %3251 = vmatprep.subr.mxu0 0.0
    %3252 = vmatpush1.msra.mxu0 0.0
    %3253 = vmatprep.subr.mxu0 0.0
    %3254 = vmatpush1.msra.mxu0 0.0
    %3255 = vmatprep.subr.mxu0 0.0
    %3256 = vmatpush1.msra.mxu0 0.0
    %3257 = vmatprep.subr.mxu0 0.0
    %3258 = vmatpush1.msra.mxu0 0.0
    %3259 = vmatprep.subr.mxu0 0.0
    %3260 = vmatpush1.msra.mxu0 0.0
    %3261 = vmatprep.mubr.f32.mxu0 0.0
    %3262 = vmatmul.mubr.f32.gmra.mrb[0].mxu0 %v3187
    %v3263 = vpop.f32.mrb[0].mxu0
    %v3264 = vadd.f32 %v2996, %v3263
    %v3265 = vpop.f32.mrb[0].mxu0
    %v3266 = vadd.f32 %v3007, %v3265
    %3267 = vdwg.mxu0
    %3268 = vmatprep.subr.mxu0 %v3195
    %3269 = vmatpush1.msra.mxu0 %v3193
    %3270 = vmatprep.subr.mxu0 0.0
    %3271 = vmatpush1.msra.mxu0 0.0
    %3272 = vmatprep.subr.mxu0 0.0
    %3273 = vmatpush1.msra.mxu0 0.0
    %3274 = vmatprep.subr.mxu0 0.0
    %3275 = vmatpush1.msra.mxu0 0.0
    %3276 = vmatprep.subr.mxu0 0.0
    %3277 = vmatpush1.msra.mxu0 0.0
    %3278 = vmatprep.subr.mxu0 0.0
    %3279 = vmatpush1.msra.mxu0 0.0
    %3280 = vmatprep.subr.mxu0 0.0
    %3281 = vmatpush1.msra.mxu0 0.0
    %3282 = vmatprep.subr.mxu0 0.0
    %3283 = vmatpush1.msra.mxu0 0.0
    %3284 = vmatprep.subr.mxu0 0.0
    %3285 = vmatpush1.msra.mxu0 0.0
    %3286 = vmatprep.subr.mxu0 0.0
    %3287 = vmatpush1.msra.mxu0 0.0
    %3288 = vmatprep.subr.mxu0 0.0
    %3289 = vmatpush1.msra.mxu0 0.0
    %3290 = vmatprep.subr.mxu0 0.0
    %3291 = vmatpush1.msra.mxu0 0.0
    %3292 = vmatprep.subr.mxu0 0.0
    %3293 = vmatpush1.msra.mxu0 0.0
    %3294 = vmatprep.subr.mxu0 0.0
    %3295 = vmatpush1.msra.mxu0 0.0
    %3296 = vmatprep.subr.mxu0 0.0
    %3297 = vmatpush1.msra.mxu0 0.0
    %3298 = vmatprep.subr.mxu0 0.0
    %3299 = vmatpush1.msra.mxu0 0.0
    %3300 = vmatprep.subr.mxu0 0.0
    %3301 = vmatpush1.msra.mxu0 0.0
    %3302 = vmatprep.subr.mxu0 0.0
    %3303 = vmatpush1.msra.mxu0 0.0
    %3304 = vmatprep.subr.mxu0 0.0
    %3305 = vmatpush1.msra.mxu0 0.0
    %3306 = vmatprep.subr.mxu0 0.0
    %3307 = vmatpush1.msra.mxu0 0.0
    %3308 = vmatprep.subr.mxu0 0.0
    %3309 = vmatpush1.msra.mxu0 0.0
    %3310 = vmatprep.subr.mxu0 0.0
    %3311 = vmatpush1.msra.mxu0 0.0
    %3312 = vmatprep.subr.mxu0 0.0
    %3313 = vmatpush1.msra.mxu0 0.0
    %3314 = vmatprep.subr.mxu0 0.0
    %3315 = vmatpush1.msra.mxu0 0.0
    %3316 = vmatprep.subr.mxu0 0.0
    %3317 = vmatpush1.msra.mxu0 0.0
    %3318 = vmatprep.subr.mxu0 0.0
    %3319 = vmatpush1.msra.mxu0 0.0
    %3320 = vmatprep.subr.mxu0 0.0
    %3321 = vmatpush1.msra.mxu0 0.0
    %3322 = vmatprep.subr.mxu0 0.0
    %3323 = vmatpush1.msra.mxu0 0.0
    %3324 = vmatprep.subr.mxu0 0.0
    %3325 = vmatpush1.msra.mxu0 0.0
    %3326 = vmatprep.subr.mxu0 0.0
    %3327 = vmatpush1.msra.mxu0 0.0
    %3328 = vmatprep.subr.mxu0 0.0
    %3329 = vmatpush1.msra.mxu0 0.0
    %3330 = vmatprep.subr.mxu0 0.0
    %3331 = vmatpush1.msra.mxu0 0.0
    %3332 = vmatprep.mubr.f32.mxu0 0.0
    %3333 = vmatmul.mubr.f32.gmra.mrb[0].mxu0 %v3187
    %v3334 = vpop.f32.mrb[0].mxu0
    %v3335 = vadd.f32 %v3018, %v3334
    %v3336 = vpop.f32.mrb[0].mxu0
    %v3337 = vadd.f32 %v3029, %v3336
    %3338 = vdwg.mxu0
    %v3339 = vmul.f32 %v3264, %v3264
    %v3340 = vmul.f32 %v3266, %v3266
    %v3341 = vmul.f32 %v3335, %v3335
    %v3342 = vmul.f32 %v3337, %v3337
    %v3343 = vsel %vm378, %v3339, 0.0
    %v3344 = vsel %vm378, %v3340, 0.0
    %v3345 = vadd.f32 %v3343, %v3344
    %v3346 = vsel %vm378, %v3341, 0.0
    %v3347 = vadd.f32 %v3345, %v3346
    %v3348 = vsel %vm378, %v3342, 0.0
    %v3349 = vadd.f32 %v3347, %v3348
    %3350 = vadd.xlane.f32.xlu0 %v3349
    %v3351 = vpop.xlane.xlu0 %3350
    %v3352 = vadd.f32 %v3351, 1e-08
    %v3353 = vrsqrt.pop %v3352
    %v3354 = vmul.f32 %v3264, %v3353
    %v3355 = vmul.f32 %v3266, %v3353
    %v3356 = vmul.f32 %v3335, %v3353
    %v3357 = vmul.f32 %v3337, %v3353
    %v3358 = vmul.f32 %v98, %v98
    %v3360 = vcombine.high %v3358, %v3358
    %v3362 = vunpack.c.l.s4 1983009808
    %v3363 = vunpack.c.0.s8 %v3362
    %v3364 = vlaneseq
    %v3365 = vshrl.u32 %v3364, 7
    %v3366 = vsub.s32 %v3363, %v3365
    %v3367 = vrot.slane %v3358, %v3366
    %v3369 = vunpack.c.l.s4 1983009808
    %v3370 = vunpack.c.0.s8 %v3369
    %v3371 = vlaneseq
    %v3372 = vshrl.u32 %v3371, 7
    %v3373 = vsub.s32 %v3370, %v3372
    %v3374 = vrot.slane %v3360, %v3373
    %v3375 = vcombine.high %v3367, %v3367
    %v3376 = vcombine.high %v3374, %v3374
    %v3381 = vsel %vm450, %v3367, 0.0
    %v3382 = vsel %vm450, %v3375, 0.0
    %v3383 = vadd.f32 %v3381, %v3382
    %v3384 = vsel %vm450, %v3374, 0.0
    %v3385 = vadd.f32 %v3383, %v3384
    %v3386 = vsel %vm450, %v3376, 0.0
    %v3387 = vadd.f32 %v3385, %v3386
    %3388 = vadd.xlane.f32.xlu0 %v3387
    %v3389 = vpop.xlane.xlu0 %3388
    %v3390 = vadd.f32 %v3389, 1e-08
    %v3391 = vrsqrt.pop %v3390
    %v3394 = vunpack.c.l.s4 269488144
    %v3395 = vunpack.c.0.s8 %v3394
    %v3396 = vlaneseq
    %v3397 = vshrl.u32 %v3396, 7
    %v3398 = vsub.s32 %v3395, %v3397
    %v3399 = vrot.slane %v3391, %v3398
    %v3401 = vmul.f32 %v98, %v3399
    %v3402 = vmul.f32 %v99, %v99
    %v3404 = vcombine.high %v3402, %v3402
    %v3406 = vunpack.c.l.s4 1983009808
    %v3407 = vunpack.c.0.s8 %v3406
    %v3408 = vlaneseq
    %v3409 = vshrl.u32 %v3408, 7
    %v3410 = vsub.s32 %v3407, %v3409
    %v3411 = vrot.slane %v3402, %v3410
    %v3413 = vunpack.c.l.s4 1983009808
    %v3414 = vunpack.c.0.s8 %v3413
    %v3415 = vlaneseq
    %v3416 = vshrl.u32 %v3415, 7
    %v3417 = vsub.s32 %v3414, %v3416
    %v3418 = vrot.slane %v3404, %v3417
    %v3419 = vcombine.high %v3411, %v3411
    %v3420 = vcombine.high %v3418, %v3418
    %v3425 = vsel %vm450, %v3411, 0.0
    %v3426 = vsel %vm450, %v3419, 0.0
    %v3427 = vadd.f32 %v3425, %v3426
    %v3428 = vsel %vm450, %v3418, 0.0
    %v3429 = vadd.f32 %v3427, %v3428
    %v3430 = vsel %vm450, %v3420, 0.0
    %v3431 = vadd.f32 %v3429, %v3430
    %3432 = vadd.xlane.f32.xlu0 %v3431
    %v3433 = vpop.xlane.xlu0 %3432
    %v3434 = vadd.f32 %v3433, 1e-08
    %v3435 = vrsqrt.pop %v3434
    %v3438 = vunpack.c.l.s4 269488144
    %v3439 = vunpack.c.0.s8 %v3438
    %v3440 = vlaneseq
    %v3441 = vshrl.u32 %v3440, 7
    %v3442 = vsub.s32 %v3439, %v3441
    %v3443 = vrot.slane %v3435, %v3442
    %v3445 = vmul.f32 %v99, %v3443
    %v3446 = vmul.f32 %v100, %v100
    %v3448 = vcombine.high %v3446, %v3446
    %v3450 = vunpack.c.l.s4 1983009808
    %v3451 = vunpack.c.0.s8 %v3450
    %v3452 = vlaneseq
    %v3453 = vshrl.u32 %v3452, 7
    %v3454 = vsub.s32 %v3451, %v3453
    %v3455 = vrot.slane %v3446, %v3454
    %v3457 = vunpack.c.l.s4 1983009808
    %v3458 = vunpack.c.0.s8 %v3457
    %v3459 = vlaneseq
    %v3460 = vshrl.u32 %v3459, 7
    %v3461 = vsub.s32 %v3458, %v3460
    %v3462 = vrot.slane %v3448, %v3461
    %v3463 = vcombine.high %v3455, %v3455
    %v3464 = vcombine.high %v3462, %v3462
    %v3469 = vsel %vm450, %v3455, 0.0
    %v3470 = vsel %vm450, %v3463, 0.0
    %v3471 = vadd.f32 %v3469, %v3470
    %v3472 = vsel %vm450, %v3462, 0.0
    %v3473 = vadd.f32 %v3471, %v3472
    %v3474 = vsel %vm450, %v3464, 0.0
    %v3475 = vadd.f32 %v3473, %v3474
    %3476 = vadd.xlane.f32.xlu0 %v3475
    %v3477 = vpop.xlane.xlu0 %3476
    %v3478 = vadd.f32 %v3477, 1e-08
    %v3479 = vrsqrt.pop %v3478
    %v3482 = vunpack.c.l.s4 269488144
    %v3483 = vunpack.c.0.s8 %v3482
    %v3484 = vlaneseq
    %v3485 = vshrl.u32 %v3484, 7
    %v3486 = vsub.s32 %v3483, %v3485
    %v3487 = vrot.slane %v3479, %v3486
    %v3489 = vmul.f32 %v100, %v3487
    %v3491 = vcombine.high %v3401, %v3401
    %v3493 = vunpack.c.l.s4 1983009808
    %v3494 = vunpack.c.0.s8 %v3493
    %v3495 = vlaneseq
    %v3496 = vshrl.u32 %v3495, 7
    %v3497 = vsub.s32 %v3494, %v3496
    %v3498 = vrot.slane %v3401, %v3497
    %v3500 = vunpack.c.l.s4 1983009808
    %v3501 = vunpack.c.0.s8 %v3500
    %v3502 = vlaneseq
    %v3503 = vshrl.u32 %v3502, 7
    %v3504 = vsub.s32 %v3501, %v3503
    %v3505 = vrot.slane %v3491, %v3504
    %v3506 = vcombine.high %v3498, %v3498
    %v3507 = vcombine.high %v3505, %v3505
    %v3513 = vcombine.high %v3445, %v3445
    %v3515 = vunpack.c.l.s4 1983009808
    %v3516 = vunpack.c.0.s8 %v3515
    %v3517 = vlaneseq
    %v3518 = vshrl.u32 %v3517, 7
    %v3519 = vsub.s32 %v3516, %v3518
    %v3520 = vrot.slane %v3445, %v3519
    %v3522 = vunpack.c.l.s4 1983009808
    %v3523 = vunpack.c.0.s8 %v3522
    %v3524 = vlaneseq
    %v3525 = vshrl.u32 %v3524, 7
    %v3526 = vsub.s32 %v3523, %v3525
    %v3527 = vrot.slane %v3513, %v3526
    %v3528 = vcombine.high %v3520, %v3520
    %v3529 = vcombine.high %v3527, %v3527
    %v3535 = vcombine.high %v3489, %v3489
    %v3537 = vunpack.c.l.s4 1983009808
    %v3538 = vunpack.c.0.s8 %v3537
    %v3539 = vlaneseq
    %v3540 = vshrl.u32 %v3539, 7
    %v3541 = vsub.s32 %v3538, %v3540
    %v3542 = vrot.slane %v3489, %v3541
    %v3544 = vunpack.c.l.s4 1983009808
    %v3545 = vunpack.c.0.s8 %v3544
    %v3546 = vlaneseq
    %v3547 = vshrl.u32 %v3546, 7
    %v3548 = vsub.s32 %v3545, %v3547
    %v3549 = vrot.slane %v3535, %v3548
    %v3550 = vcombine.high %v3542, %v3542
    %v3551 = vcombine.high %v3549, %v3549
    %3556 = vmatprep.subr.mxu0 %v1139
    %3557 = vmatpush1.xpose.msra.mxu0 %v1138
    %3558 = vmatprep.subr.mxu0 0.0
    %3559 = vmatpush1.xpose.msra.mxu0 0.0
    %3560 = vmatprep.subr.mxu0 0.0
    %3561 = vmatpush1.xpose.msra.mxu0 0.0
    %3562 = vmatprep.subr.mxu0 0.0
    %3563 = vmatpush1.xpose.msra.mxu0 0.0
    %3564 = vmatprep.subr.mxu0 0.0
    %3565 = vmatpush1.xpose.msra.mxu0 0.0
    %3566 = vmatprep.subr.mxu0 0.0
    %3567 = vmatpush1.xpose.msra.mxu0 0.0
    %3568 = vmatprep.subr.mxu0 0.0
    %3569 = vmatpush1.xpose.msra.mxu0 0.0
    %3570 = vmatprep.subr.mxu0 0.0
    %3571 = vmatpush1.xpose.msra.mxu0 0.0
    %3572 = vmatprep.subr.mxu0 0.0
    %3573 = vmatpush1.xpose.msra.mxu0 0.0
    %3574 = vmatprep.subr.mxu0 0.0
    %3575 = vmatpush1.xpose.msra.mxu0 0.0
    %3576 = vmatprep.subr.mxu0 0.0
    %3577 = vmatpush1.xpose.msra.mxu0 0.0
    %3578 = vmatprep.subr.mxu0 0.0
    %3579 = vmatpush1.xpose.msra.mxu0 0.0
    %3580 = vmatprep.subr.mxu0 0.0
    %3581 = vmatpush1.xpose.msra.mxu0 0.0
    %3582 = vmatprep.subr.mxu0 0.0
    %3583 = vmatpush1.xpose.msra.mxu0 0.0
    %3584 = vmatprep.subr.mxu0 0.0
    %3585 = vmatpush1.xpose.msra.mxu0 0.0
    %3586 = vmatprep.subr.mxu0 0.0
    %3587 = vmatpush1.xpose.msra.mxu0 0.0
    %3588 = vmatprep.subr.mxu0 0.0
    %3589 = vmatpush1.xpose.msra.mxu0 0.0
    %3590 = vmatprep.subr.mxu0 0.0
    %3591 = vmatpush1.xpose.msra.mxu0 0.0
    %3592 = vmatprep.subr.mxu0 0.0
    %3593 = vmatpush1.xpose.msra.mxu0 0.0
    %3594 = vmatprep.subr.mxu0 0.0
    %3595 = vmatpush1.xpose.msra.mxu0 0.0
    %3596 = vmatprep.subr.mxu0 0.0
    %3597 = vmatpush1.xpose.msra.mxu0 0.0
    %3598 = vmatprep.subr.mxu0 0.0
    %3599 = vmatpush1.xpose.msra.mxu0 0.0
    %3600 = vmatprep.subr.mxu0 0.0
    %3601 = vmatpush1.xpose.msra.mxu0 0.0
    %3602 = vmatprep.subr.mxu0 0.0
    %3603 = vmatpush1.xpose.msra.mxu0 0.0
    %3604 = vmatprep.subr.mxu0 0.0
    %3605 = vmatpush1.xpose.msra.mxu0 0.0
    %3606 = vmatprep.subr.mxu0 0.0
    %3607 = vmatpush1.xpose.msra.mxu0 0.0
    %3608 = vmatprep.subr.mxu0 0.0
    %3609 = vmatpush1.xpose.msra.mxu0 0.0
    %3610 = vmatprep.subr.mxu0 0.0
    %3611 = vmatpush1.xpose.msra.mxu0 0.0
    %3612 = vmatprep.subr.mxu0 0.0
    %3613 = vmatpush1.xpose.msra.mxu0 0.0
    %3614 = vmatprep.subr.mxu0 0.0
    %3615 = vmatpush1.xpose.msra.mxu0 0.0
    %3616 = vmatprep.subr.mxu0 0.0
    %3617 = vmatpush1.xpose.msra.mxu0 0.0
    %3618 = vmatprep.subr.mxu0 0.0
    %3619 = vmatpush1.xpose.msra.mxu0 0.0
    %3620 = vmatprep.mubr.f32.mxu0 %v3506
    %3621 = vmatmul.mubr.f32.gmra.mrb[0].mxu0 %v3498
    %v3622 = vpop.f32.mrb[0].mxu0
    %v3623 = vadd.f32 0.0, %v3622
    %v3624 = vpop.f32.mrb[0].mxu0
    %3625 = vdwg.mxu0
    %3626 = vmatprep.subr.mxu0 %v1141
    %3627 = vmatpush1.xpose.msra.mxu0 %v1140
    %3628 = vmatprep.subr.mxu0 0.0
    %3629 = vmatpush1.xpose.msra.mxu0 0.0
    %3630 = vmatprep.subr.mxu0 0.0
    %3631 = vmatpush1.xpose.msra.mxu0 0.0
    %3632 = vmatprep.subr.mxu0 0.0
    %3633 = vmatpush1.xpose.msra.mxu0 0.0
    %3634 = vmatprep.subr.mxu0 0.0
    %3635 = vmatpush1.xpose.msra.mxu0 0.0
    %3636 = vmatprep.subr.mxu0 0.0
    %3637 = vmatpush1.xpose.msra.mxu0 0.0
    %3638 = vmatprep.subr.mxu0 0.0
    %3639 = vmatpush1.xpose.msra.mxu0 0.0
    %3640 = vmatprep.subr.mxu0 0.0
    %3641 = vmatpush1.xpose.msra.mxu0 0.0
    %3642 = vmatprep.subr.mxu0 0.0
    %3643 = vmatpush1.xpose.msra.mxu0 0.0
    %3644 = vmatprep.subr.mxu0 0.0
    %3645 = vmatpush1.xpose.msra.mxu0 0.0
    %3646 = vmatprep.subr.mxu0 0.0
    %3647 = vmatpush1.xpose.msra.mxu0 0.0
    %3648 = vmatprep.subr.mxu0 0.0
    %3649 = vmatpush1.xpose.msra.mxu0 0.0
    %3650 = vmatprep.subr.mxu0 0.0
    %3651 = vmatpush1.xpose.msra.mxu0 0.0
    %3652 = vmatprep.subr.mxu0 0.0
    %3653 = vmatpush1.xpose.msra.mxu0 0.0
    %3654 = vmatprep.subr.mxu0 0.0
    %3655 = vmatpush1.xpose.msra.mxu0 0.0
    %3656 = vmatprep.subr.mxu0 0.0
    %3657 = vmatpush1.xpose.msra.mxu0 0.0
    %3658 = vmatprep.subr.mxu0 0.0
    %3659 = vmatpush1.xpose.msra.mxu0 0.0
    %3660 = vmatprep.subr.mxu0 0.0
    %3661 = vmatpush1.xpose.msra.mxu0 0.0
    %3662 = vmatprep.subr.mxu0 0.0
    %3663 = vmatpush1.xpose.msra.mxu0 0.0
    %3664 = vmatprep.subr.mxu0 0.0
    %3665 = vmatpush1.xpose.msra.mxu0 0.0
    %3666 = vmatprep.subr.mxu0 0.0
    %3667 = vmatpush1.xpose.msra.mxu0 0.0
    %3668 = vmatprep.subr.mxu0 0.0
    %3669 = vmatpush1.xpose.msra.mxu0 0.0
    %3670 = vmatprep.subr.mxu0 0.0
    %3671 = vmatpush1.xpose.msra.mxu0 0.0
    %3672 = vmatprep.subr.mxu0 0.0
    %3673 = vmatpush1.xpose.msra.mxu0 0.0
    %3674 = vmatprep.subr.mxu0 0.0
    %3675 = vmatpush1.xpose.msra.mxu0 0.0
    %3676 = vmatprep.subr.mxu0 0.0
    %3677 = vmatpush1.xpose.msra.mxu0 0.0
    %3678 = vmatprep.subr.mxu0 0.0
    %3679 = vmatpush1.xpose.msra.mxu0 0.0
    %3680 = vmatprep.subr.mxu0 0.0
    %3681 = vmatpush1.xpose.msra.mxu0 0.0
    %3682 = vmatprep.subr.mxu0 0.0
    %3683 = vmatpush1.xpose.msra.mxu0 0.0
    %3684 = vmatprep.subr.mxu0 0.0
    %3685 = vmatpush1.xpose.msra.mxu0 0.0
    %3686 = vmatprep.subr.mxu0 0.0
    %3687 = vmatpush1.xpose.msra.mxu0 0.0
    %3688 = vmatprep.subr.mxu0 0.0
    %3689 = vmatpush1.xpose.msra.mxu0 0.0
    %3690 = vmatprep.mubr.f32.mxu0 %v3507
    %3691 = vmatmul.mubr.f32.gmra.mrb[0].mxu0 %v3505
    %v3692 = vpop.f32.mrb[0].mxu0
    %v3693 = vadd.f32 %v3623, %v3692
    %v3694 = vpop.f32.mrb[0].mxu0
    %3695 = vdwg.mxu0
    %3696 = vmatprep.subr.mxu0 %v1507
    %3697 = vmatpush1.xpose.msra.mxu0 %v1506
    %3698 = vmatprep.subr.mxu0 0.0
    %3699 = vmatpush1.xpose.msra.mxu0 0.0
    %3700 = vmatprep.subr.mxu0 0.0
    %3701 = vmatpush1.xpose.msra.mxu0 0.0
    %3702 = vmatprep.subr.mxu0 0.0
    %3703 = vmatpush1.xpose.msra.mxu0 0.0
    %3704 = vmatprep.subr.mxu0 0.0
    %3705 = vmatpush1.xpose.msra.mxu0 0.0
    %3706 = vmatprep.subr.mxu0 0.0
    %3707 = vmatpush1.xpose.msra.mxu0 0.0
    %3708 = vmatprep.subr.mxu0 0.0
    %3709 = vmatpush1.xpose.msra.mxu0 0.0
    %3710 = vmatprep.subr.mxu0 0.0
    %3711 = vmatpush1.xpose.msra.mxu0 0.0
    %3712 = vmatprep.subr.mxu0 0.0
    %3713 = vmatpush1.xpose.msra.mxu0 0.0
    %3714 = vmatprep.subr.mxu0 0.0
    %3715 = vmatpush1.xpose.msra.mxu0 0.0
    %3716 = vmatprep.subr.mxu0 0.0
    %3717 = vmatpush1.xpose.msra.mxu0 0.0
    %3718 = vmatprep.subr.mxu0 0.0
    %3719 = vmatpush1.xpose.msra.mxu0 0.0
    %3720 = vmatprep.subr.mxu0 0.0
    %3721 = vmatpush1.xpose.msra.mxu0 0.0
    %3722 = vmatprep.subr.mxu0 0.0
    %3723 = vmatpush1.xpose.msra.mxu0 0.0
    %3724 = vmatprep.subr.mxu0 0.0
    %3725 = vmatpush1.xpose.msra.mxu0 0.0
    %3726 = vmatprep.subr.mxu0 0.0
    %3727 = vmatpush1.xpose.msra.mxu0 0.0
    %3728 = vmatprep.subr.mxu0 0.0
    %3729 = vmatpush1.xpose.msra.mxu0 0.0
    %3730 = vmatprep.subr.mxu0 0.0
    %3731 = vmatpush1.xpose.msra.mxu0 0.0
    %3732 = vmatprep.subr.mxu0 0.0
    %3733 = vmatpush1.xpose.msra.mxu0 0.0
    %3734 = vmatprep.subr.mxu0 0.0
    %3735 = vmatpush1.xpose.msra.mxu0 0.0
    %3736 = vmatprep.subr.mxu0 0.0
    %3737 = vmatpush1.xpose.msra.mxu0 0.0
    %3738 = vmatprep.subr.mxu0 0.0
    %3739 = vmatpush1.xpose.msra.mxu0 0.0
    %3740 = vmatprep.subr.mxu0 0.0
    %3741 = vmatpush1.xpose.msra.mxu0 0.0
    %3742 = vmatprep.subr.mxu0 0.0
    %3743 = vmatpush1.xpose.msra.mxu0 0.0
    %3744 = vmatprep.subr.mxu0 0.0
    %3745 = vmatpush1.xpose.msra.mxu0 0.0
    %3746 = vmatprep.subr.mxu0 0.0
    %3747 = vmatpush1.xpose.msra.mxu0 0.0
    %3748 = vmatprep.subr.mxu0 0.0
    %3749 = vmatpush1.xpose.msra.mxu0 0.0
    %3750 = vmatprep.subr.mxu0 0.0
    %3751 = vmatpush1.xpose.msra.mxu0 0.0
    %3752 = vmatprep.subr.mxu0 0.0
    %3753 = vmatpush1.xpose.msra.mxu0 0.0
    %3754 = vmatprep.subr.mxu0 0.0
    %3755 = vmatpush1.xpose.msra.mxu0 0.0
    %3756 = vmatprep.subr.mxu0 0.0
    %3757 = vmatpush1.xpose.msra.mxu0 0.0
    %3758 = vmatprep.subr.mxu0 0.0
    %3759 = vmatpush1.xpose.msra.mxu0 0.0
    %3760 = vmatprep.mubr.f32.mxu0 %v3506
    %3761 = vmatmul.mubr.f32.gmra.mrb[0].mxu0 %v3498
    %v3762 = vpop.f32.mrb[0].mxu0
    %v3763 = vadd.f32 %v3693, %v3762
    %v3764 = vpop.f32.mrb[0].mxu0
    %3765 = vdwg.mxu0
    %3766 = vmatprep.subr.mxu0 %v1509
    %3767 = vmatpush1.xpose.msra.mxu0 %v1508
    %3768 = vmatprep.subr.mxu0 0.0
    %3769 = vmatpush1.xpose.msra.mxu0 0.0
    %3770 = vmatprep.subr.mxu0 0.0
    %3771 = vmatpush1.xpose.msra.mxu0 0.0
    %3772 = vmatprep.subr.mxu0 0.0
    %3773 = vmatpush1.xpose.msra.mxu0 0.0
    %3774 = vmatprep.subr.mxu0 0.0
    %3775 = vmatpush1.xpose.msra.mxu0 0.0
    %3776 = vmatprep.subr.mxu0 0.0
    %3777 = vmatpush1.xpose.msra.mxu0 0.0
    %3778 = vmatprep.subr.mxu0 0.0
    %3779 = vmatpush1.xpose.msra.mxu0 0.0
    %3780 = vmatprep.subr.mxu0 0.0
    %3781 = vmatpush1.xpose.msra.mxu0 0.0
    %3782 = vmatprep.subr.mxu0 0.0
    %3783 = vmatpush1.xpose.msra.mxu0 0.0
    %3784 = vmatprep.subr.mxu0 0.0
    %3785 = vmatpush1.xpose.msra.mxu0 0.0
    %3786 = vmatprep.subr.mxu0 0.0
    %3787 = vmatpush1.xpose.msra.mxu0 0.0
    %3788 = vmatprep.subr.mxu0 0.0
    %3789 = vmatpush1.xpose.msra.mxu0 0.0
    %3790 = vmatprep.subr.mxu0 0.0
    %3791 = vmatpush1.xpose.msra.mxu0 0.0
    %3792 = vmatprep.subr.mxu0 0.0
    %3793 = vmatpush1.xpose.msra.mxu0 0.0
    %3794 = vmatprep.subr.mxu0 0.0
    %3795 = vmatpush1.xpose.msra.mxu0 0.0
    %3796 = vmatprep.subr.mxu0 0.0
    %3797 = vmatpush1.xpose.msra.mxu0 0.0
    %3798 = vmatprep.subr.mxu0 0.0
    %3799 = vmatpush1.xpose.msra.mxu0 0.0
    %3800 = vmatprep.subr.mxu0 0.0
    %3801 = vmatpush1.xpose.msra.mxu0 0.0
    %3802 = vmatprep.subr.mxu0 0.0
    %3803 = vmatpush1.xpose.msra.mxu0 0.0
    %3804 = vmatprep.subr.mxu0 0.0
    %3805 = vmatpush1.xpose.msra.mxu0 0.0
    %3806 = vmatprep.subr.mxu0 0.0
    %3807 = vmatpush1.xpose.msra.mxu0 0.0
    %3808 = vmatprep.subr.mxu0 0.0
    %3809 = vmatpush1.xpose.msra.mxu0 0.0
    %3810 = vmatprep.subr.mxu0 0.0
    %3811 = vmatpush1.xpose.msra.mxu0 0.0
    %3812 = vmatprep.subr.mxu0 0.0
    %3813 = vmatpush1.xpose.msra.mxu0 0.0
    %3814 = vmatprep.subr.mxu0 0.0
    %3815 = vmatpush1.xpose.msra.mxu0 0.0
    %3816 = vmatprep.subr.mxu0 0.0
    %3817 = vmatpush1.xpose.msra.mxu0 0.0
    %3818 = vmatprep.subr.mxu0 0.0
    %3819 = vmatpush1.xpose.msra.mxu0 0.0
    %3820 = vmatprep.subr.mxu0 0.0
    %3821 = vmatpush1.xpose.msra.mxu0 0.0
    %3822 = vmatprep.subr.mxu0 0.0
    %3823 = vmatpush1.xpose.msra.mxu0 0.0
    %3824 = vmatprep.subr.mxu0 0.0
    %3825 = vmatpush1.xpose.msra.mxu0 0.0
    %3826 = vmatprep.subr.mxu0 0.0
    %3827 = vmatpush1.xpose.msra.mxu0 0.0
    %3828 = vmatprep.subr.mxu0 0.0
    %3829 = vmatpush1.xpose.msra.mxu0 0.0
    %3830 = vmatprep.mubr.f32.mxu0 %v3507
    %3831 = vmatmul.mubr.f32.gmra.mrb[0].mxu0 %v3505
    %v3832 = vpop.f32.mrb[0].mxu0
    %v3833 = vadd.f32 %v3763, %v3832
    %v3834 = vpop.f32.mrb[0].mxu0
    %3835 = vdwg.mxu0
    %3836 = vmatprep.subr.mxu0 %v1875
    %3837 = vmatpush1.xpose.msra.mxu0 %v1874
    %3838 = vmatprep.subr.mxu0 0.0
    %3839 = vmatpush1.xpose.msra.mxu0 0.0
    %3840 = vmatprep.subr.mxu0 0.0
    %3841 = vmatpush1.xpose.msra.mxu0 0.0
    %3842 = vmatprep.subr.mxu0 0.0
    %3843 = vmatpush1.xpose.msra.mxu0 0.0
    %3844 = vmatprep.subr.mxu0 0.0
    %3845 = vmatpush1.xpose.msra.mxu0 0.0
    %3846 = vmatprep.subr.mxu0 0.0
    %3847 = vmatpush1.xpose.msra.mxu0 0.0
    %3848 = vmatprep.subr.mxu0 0.0
    %3849 = vmatpush1.xpose.msra.mxu0 0.0
    %3850 = vmatprep.subr.mxu0 0.0
    %3851 = vmatpush1.xpose.msra.mxu0 0.0
    %3852 = vmatprep.subr.mxu0 0.0
    %3853 = vmatpush1.xpose.msra.mxu0 0.0
    %3854 = vmatprep.subr.mxu0 0.0
    %3855 = vmatpush1.xpose.msra.mxu0 0.0
    %3856 = vmatprep.subr.mxu0 0.0
    %3857 = vmatpush1.xpose.msra.mxu0 0.0
    %3858 = vmatprep.subr.mxu0 0.0
    %3859 = vmatpush1.xpose.msra.mxu0 0.0
    %3860 = vmatprep.subr.mxu0 0.0
    %3861 = vmatpush1.xpose.msra.mxu0 0.0
    %3862 = vmatprep.subr.mxu0 0.0
    %3863 = vmatpush1.xpose.msra.mxu0 0.0
    %3864 = vmatprep.subr.mxu0 0.0
    %3865 = vmatpush1.xpose.msra.mxu0 0.0
    %3866 = vmatprep.subr.mxu0 0.0
    %3867 = vmatpush1.xpose.msra.mxu0 0.0
    %3868 = vmatprep.subr.mxu0 0.0
    %3869 = vmatpush1.xpose.msra.mxu0 0.0
    %3870 = vmatprep.subr.mxu0 0.0
    %3871 = vmatpush1.xpose.msra.mxu0 0.0
    %3872 = vmatprep.subr.mxu0 0.0
    %3873 = vmatpush1.xpose.msra.mxu0 0.0
    %3874 = vmatprep.subr.mxu0 0.0
    %3875 = vmatpush1.xpose.msra.mxu0 0.0
    %3876 = vmatprep.subr.mxu0 0.0
    %3877 = vmatpush1.xpose.msra.mxu0 0.0
    %3878 = vmatprep.subr.mxu0 0.0
    %3879 = vmatpush1.xpose.msra.mxu0 0.0
    %3880 = vmatprep.subr.mxu0 0.0
    %3881 = vmatpush1.xpose.msra.mxu0 0.0
    %3882 = vmatprep.subr.mxu0 0.0
    %3883 = vmatpush1.xpose.msra.mxu0 0.0
    %3884 = vmatprep.subr.mxu0 0.0
    %3885 = vmatpush1.xpose.msra.mxu0 0.0
    %3886 = vmatprep.subr.mxu0 0.0
    %3887 = vmatpush1.xpose.msra.mxu0 0.0
    %3888 = vmatprep.subr.mxu0 0.0
    %3889 = vmatpush1.xpose.msra.mxu0 0.0
    %3890 = vmatprep.subr.mxu0 0.0
    %3891 = vmatpush1.xpose.msra.mxu0 0.0
    %3892 = vmatprep.subr.mxu0 0.0
    %3893 = vmatpush1.xpose.msra.mxu0 0.0
    %3894 = vmatprep.subr.mxu0 0.0
    %3895 = vmatpush1.xpose.msra.mxu0 0.0
    %3896 = vmatprep.subr.mxu0 0.0
    %3897 = vmatpush1.xpose.msra.mxu0 0.0
    %3898 = vmatprep.subr.mxu0 0.0
    %3899 = vmatpush1.xpose.msra.mxu0 0.0
    %3900 = vmatprep.mubr.f32.mxu0 %v3506
    %3901 = vmatmul.mubr.f32.gmra.mrb[0].mxu0 %v3498
    %v3902 = vpop.f32.mrb[0].mxu0
    %v3903 = vadd.f32 %v3833, %v3902
    %v3904 = vpop.f32.mrb[0].mxu0
    %3905 = vdwg.mxu0
    %3906 = vmatprep.subr.mxu0 %v1877
    %3907 = vmatpush1.xpose.msra.mxu0 %v1876
    %3908 = vmatprep.subr.mxu0 0.0
    %3909 = vmatpush1.xpose.msra.mxu0 0.0
    %3910 = vmatprep.subr.mxu0 0.0
    %3911 = vmatpush1.xpose.msra.mxu0 0.0
    %3912 = vmatprep.subr.mxu0 0.0
    %3913 = vmatpush1.xpose.msra.mxu0 0.0
    %3914 = vmatprep.subr.mxu0 0.0
    %3915 = vmatpush1.xpose.msra.mxu0 0.0
    %3916 = vmatprep.subr.mxu0 0.0
    %3917 = vmatpush1.xpose.msra.mxu0 0.0
    %3918 = vmatprep.subr.mxu0 0.0
    %3919 = vmatpush1.xpose.msra.mxu0 0.0
    %3920 = vmatprep.subr.mxu0 0.0
    %3921 = vmatpush1.xpose.msra.mxu0 0.0
    %3922 = vmatprep.subr.mxu0 0.0
    %3923 = vmatpush1.xpose.msra.mxu0 0.0
    %3924 = vmatprep.subr.mxu0 0.0
    %3925 = vmatpush1.xpose.msra.mxu0 0.0
    %3926 = vmatprep.subr.mxu0 0.0
    %3927 = vmatpush1.xpose.msra.mxu0 0.0
    %3928 = vmatprep.subr.mxu0 0.0
    %3929 = vmatpush1.xpose.msra.mxu0 0.0
    %3930 = vmatprep.subr.mxu0 0.0
    %3931 = vmatpush1.xpose.msra.mxu0 0.0
    %3932 = vmatprep.subr.mxu0 0.0
    %3933 = vmatpush1.xpose.msra.mxu0 0.0
    %3934 = vmatprep.subr.mxu0 0.0
    %3935 = vmatpush1.xpose.msra.mxu0 0.0
    %3936 = vmatprep.subr.mxu0 0.0
    %3937 = vmatpush1.xpose.msra.mxu0 0.0
    %3938 = vmatprep.subr.mxu0 0.0
    %3939 = vmatpush1.xpose.msra.mxu0 0.0
    %3940 = vmatprep.subr.mxu0 0.0
    %3941 = vmatpush1.xpose.msra.mxu0 0.0
    %3942 = vmatprep.subr.mxu0 0.0
    %3943 = vmatpush1.xpose.msra.mxu0 0.0
    %3944 = vmatprep.subr.mxu0 0.0
    %3945 = vmatpush1.xpose.msra.mxu0 0.0
    %3946 = vmatprep.subr.mxu0 0.0
    %3947 = vmatpush1.xpose.msra.mxu0 0.0
    %3948 = vmatprep.subr.mxu0 0.0
    %3949 = vmatpush1.xpose.msra.mxu0 0.0
    %3950 = vmatprep.subr.mxu0 0.0
    %3951 = vmatpush1.xpose.msra.mxu0 0.0
    %3952 = vmatprep.subr.mxu0 0.0
    %3953 = vmatpush1.xpose.msra.mxu0 0.0
    %3954 = vmatprep.subr.mxu0 0.0
    %3955 = vmatpush1.xpose.msra.mxu0 0.0
    %3956 = vmatprep.subr.mxu0 0.0
    %3957 = vmatpush1.xpose.msra.mxu0 0.0
    %3958 = vmatprep.subr.mxu0 0.0
    %3959 = vmatpush1.xpose.msra.mxu0 0.0
    %3960 = vmatprep.subr.mxu0 0.0
    %3961 = vmatpush1.xpose.msra.mxu0 0.0
    %3962 = vmatprep.subr.mxu0 0.0
    %3963 = vmatpush1.xpose.msra.mxu0 0.0
    %3964 = vmatprep.subr.mxu0 0.0
    %3965 = vmatpush1.xpose.msra.mxu0 0.0
    %3966 = vmatprep.subr.mxu0 0.0
    %3967 = vmatpush1.xpose.msra.mxu0 0.0
    %3968 = vmatprep.subr.mxu0 0.0
    %3969 = vmatpush1.xpose.msra.mxu0 0.0
    %3970 = vmatprep.mubr.f32.mxu0 %v3507
    %3971 = vmatmul.mubr.f32.gmra.mrb[0].mxu0 %v3505
    %v3972 = vpop.f32.mrb[0].mxu0
    %v3973 = vadd.f32 %v3903, %v3972
    %v3974 = vpop.f32.mrb[0].mxu0
    %3975 = vdwg.mxu0
    %3976 = vmatprep.subr.mxu0 %v1875
    %3977 = vmatpush1.xpose.msra.mxu0 %v1874
    %3978 = vmatprep.subr.mxu0 0.0
    %3979 = vmatpush1.xpose.msra.mxu0 0.0
    %3980 = vmatprep.subr.mxu0 0.0
    %3981 = vmatpush1.xpose.msra.mxu0 0.0
    %3982 = vmatprep.subr.mxu0 0.0
    %3983 = vmatpush1.xpose.msra.mxu0 0.0
    %3984 = vmatprep.subr.mxu0 0.0
    %3985 = vmatpush1.xpose.msra.mxu0 0.0
    %3986 = vmatprep.subr.mxu0 0.0
    %3987 = vmatpush1.xpose.msra.mxu0 0.0
    %3988 = vmatprep.subr.mxu0 0.0
    %3989 = vmatpush1.xpose.msra.mxu0 0.0
    %3990 = vmatprep.subr.mxu0 0.0
    %3991 = vmatpush1.xpose.msra.mxu0 0.0
    %3992 = vmatprep.subr.mxu0 0.0
    %3993 = vmatpush1.xpose.msra.mxu0 0.0
    %3994 = vmatprep.subr.mxu0 0.0
    %3995 = vmatpush1.xpose.msra.mxu0 0.0
    %3996 = vmatprep.subr.mxu0 0.0
    %3997 = vmatpush1.xpose.msra.mxu0 0.0
    %3998 = vmatprep.subr.mxu0 0.0
    %3999 = vmatpush1.xpose.msra.mxu0 0.0
    %4000 = vmatprep.subr.mxu0 0.0
    %4001 = vmatpush1.xpose.msra.mxu0 0.0
    %4002 = vmatprep.subr.mxu0 0.0
    %4003 = vmatpush1.xpose.msra.mxu0 0.0
    %4004 = vmatprep.subr.mxu0 0.0
    %4005 = vmatpush1.xpose.msra.mxu0 0.0
    %4006 = vmatprep.subr.mxu0 0.0
    %4007 = vmatpush1.xpose.msra.mxu0 0.0
    %4008 = vmatprep.subr.mxu0 0.0
    %4009 = vmatpush1.xpose.msra.mxu0 0.0
    %4010 = vmatprep.subr.mxu0 0.0
    %4011 = vmatpush1.xpose.msra.mxu0 0.0
    %4012 = vmatprep.subr.mxu0 0.0
    %4013 = vmatpush1.xpose.msra.mxu0 0.0
    %4014 = vmatprep.subr.mxu0 0.0
    %4015 = vmatpush1.xpose.msra.mxu0 0.0
    %4016 = vmatprep.subr.mxu0 0.0
    %4017 = vmatpush1.xpose.msra.mxu0 0.0
    %4018 = vmatprep.subr.mxu0 0.0
    %4019 = vmatpush1.xpose.msra.mxu0 0.0
    %4020 = vmatprep.subr.mxu0 0.0
    %4021 = vmatpush1.xpose.msra.mxu0 0.0
    %4022 = vmatprep.subr.mxu0 0.0
    %4023 = vmatpush1.xpose.msra.mxu0 0.0
    %4024 = vmatprep.subr.mxu0 0.0
    %4025 = vmatpush1.xpose.msra.mxu0 0.0
    %4026 = vmatprep.subr.mxu0 0.0
    %4027 = vmatpush1.xpose.msra.mxu0 0.0
    %4028 = vmatprep.subr.mxu0 0.0
    %4029 = vmatpush1.xpose.msra.mxu0 0.0
    %4030 = vmatprep.subr.mxu0 0.0
    %4031 = vmatpush1.xpose.msra.mxu0 0.0
    %4032 = vmatprep.subr.mxu0 0.0
    %4033 = vmatpush1.xpose.msra.mxu0 0.0
    %4034 = vmatprep.subr.mxu0 0.0
    %4035 = vmatpush1.xpose.msra.mxu0 0.0
    %4036 = vmatprep.subr.mxu0 0.0
    %4037 = vmatpush1.xpose.msra.mxu0 0.0
    %4038 = vmatprep.subr.mxu0 0.0
    %4039 = vmatpush1.xpose.msra.mxu0 0.0
    %4040 = vmatprep.mubr.f32.mxu0 %v3528
    %4041 = vmatmul.mubr.f32.gmra.mrb[0].mxu0 %v3520
    %v4042 = vpop.f32.mrb[0].mxu0
    %v4043 = vadd.f32 %v3973, %v4042
    %v4044 = vpop.f32.mrb[0].mxu0
    %4045 = vdwg.mxu0
    %4046 = vmatprep.subr.mxu0 %v1877
    %4047 = vmatpush1.xpose.msra.mxu0 %v1876
    %4048 = vmatprep.subr.mxu0 0.0
    %4049 = vmatpush1.xpose.msra.mxu0 0.0
    %4050 = vmatprep.subr.mxu0 0.0
    %4051 = vmatpush1.xpose.msra.mxu0 0.0
    %4052 = vmatprep.subr.mxu0 0.0
    %4053 = vmatpush1.xpose.msra.mxu0 0.0
    %4054 = vmatprep.subr.mxu0 0.0
    %4055 = vmatpush1.xpose.msra.mxu0 0.0
    %4056 = vmatprep.subr.mxu0 0.0
    %4057 = vmatpush1.xpose.msra.mxu0 0.0
    %4058 = vmatprep.subr.mxu0 0.0
    %4059 = vmatpush1.xpose.msra.mxu0 0.0
    %4060 = vmatprep.subr.mxu0 0.0
    %4061 = vmatpush1.xpose.msra.mxu0 0.0
    %4062 = vmatprep.subr.mxu0 0.0
    %4063 = vmatpush1.xpose.msra.mxu0 0.0
    %4064 = vmatprep.subr.mxu0 0.0
    %4065 = vmatpush1.xpose.msra.mxu0 0.0
    %4066 = vmatprep.subr.mxu0 0.0
    %4067 = vmatpush1.xpose.msra.mxu0 0.0
    %4068 = vmatprep.subr.mxu0 0.0
    %4069 = vmatpush1.xpose.msra.mxu0 0.0
    %4070 = vmatprep.subr.mxu0 0.0
    %4071 = vmatpush1.xpose.msra.mxu0 0.0
    %4072 = vmatprep.subr.mxu0 0.0
    %4073 = vmatpush1.xpose.msra.mxu0 0.0
    %4074 = vmatprep.subr.mxu0 0.0
    %4075 = vmatpush1.xpose.msra.mxu0 0.0
    %4076 = vmatprep.subr.mxu0 0.0
    %4077 = vmatpush1.xpose.msra.mxu0 0.0
    %4078 = vmatprep.subr.mxu0 0.0
    %4079 = vmatpush1.xpose.msra.mxu0 0.0
    %4080 = vmatprep.subr.mxu0 0.0
    %4081 = vmatpush1.xpose.msra.mxu0 0.0
    %4082 = vmatprep.subr.mxu0 0.0
    %4083 = vmatpush1.xpose.msra.mxu0 0.0
    %4084 = vmatprep.subr.mxu0 0.0
    %4085 = vmatpush1.xpose.msra.mxu0 0.0
    %4086 = vmatprep.subr.mxu0 0.0
    %4087 = vmatpush1.xpose.msra.mxu0 0.0
    %4088 = vmatprep.subr.mxu0 0.0
    %4089 = vmatpush1.xpose.msra.mxu0 0.0
    %4090 = vmatprep.subr.mxu0 0.0
    %4091 = vmatpush1.xpose.msra.mxu0 0.0
    %4092 = vmatprep.subr.mxu0 0.0
    %4093 = vmatpush1.xpose.msra.mxu0 0.0
    %4094 = vmatprep.subr.mxu0 0.0
    %4095 = vmatpush1.xpose.msra.mxu0 0.0
    %4096 = vmatprep.subr.mxu0 0.0
    %4097 = vmatpush1.xpose.msra.mxu0 0.0
    %4098 = vmatprep.subr.mxu0 0.0
    %4099 = vmatpush1.xpose.msra.mxu0 0.0
    %4100 = vmatprep.subr.mxu0 0.0
    %4101 = vmatpush1.xpose.msra.mxu0 0.0
    %4102 = vmatprep.subr.mxu0 0.0
    %4103 = vmatpush1.xpose.msra.mxu0 0.0
    %4104 = vmatprep.subr.mxu0 0.0
    %4105 = vmatpush1.xpose.msra.mxu0 0.0
    %4106 = vmatprep.subr.mxu0 0.0
    %4107 = vmatpush1.xpose.msra.mxu0 0.0
    %4108 = vmatprep.subr.mxu0 0.0
    %4109 = vmatpush1.xpose.msra.mxu0 0.0
    %4110 = vmatprep.mubr.f32.mxu0 %v3529
    %4111 = vmatmul.mubr.f32.gmra.mrb[0].mxu0 %v3527
    %v4112 = vpop.f32.mrb[0].mxu0
    %v4113 = vadd.f32 %v4043, %v4112
    %v4114 = vpop.f32.mrb[0].mxu0
    %4115 = vdwg.mxu0
    %4116 = vmatprep.subr.mxu0 %v2243
    %4117 = vmatpush1.xpose.msra.mxu0 %v2242
    %4118 = vmatprep.subr.mxu0 0.0
    %4119 = vmatpush1.xpose.msra.mxu0 0.0
    %4120 = vmatprep.subr.mxu0 0.0
    %4121 = vmatpush1.xpose.msra.mxu0 0.0
    %4122 = vmatprep.subr.mxu0 0.0
    %4123 = vmatpush1.xpose.msra.mxu0 0.0
    %4124 = vmatprep.subr.mxu0 0.0
    %4125 = vmatpush1.xpose.msra.mxu0 0.0
    %4126 = vmatprep.subr.mxu0 0.0
    %4127 = vmatpush1.xpose.msra.mxu0 0.0
    %4128 = vmatprep.subr.mxu0 0.0
    %4129 = vmatpush1.xpose.msra.mxu0 0.0
    %4130 = vmatprep.subr.mxu0 0.0
    %4131 = vmatpush1.xpose.msra.mxu0 0.0
    %4132 = vmatprep.subr.mxu0 0.0
    %4133 = vmatpush1.xpose.msra.mxu0 0.0
    %4134 = vmatprep.subr.mxu0 0.0
    %4135 = vmatpush1.xpose.msra.mxu0 0.0
    %4136 = vmatprep.subr.mxu0 0.0
    %4137 = vmatpush1.xpose.msra.mxu0 0.0
    %4138 = vmatprep.subr.mxu0 0.0
    %4139 = vmatpush1.xpose.msra.mxu0 0.0
    %4140 = vmatprep.subr.mxu0 0.0
    %4141 = vmatpush1.xpose.msra.mxu0 0.0
    %4142 = vmatprep.subr.mxu0 0.0
    %4143 = vmatpush1.xpose.msra.mxu0 0.0
    %4144 = vmatprep.subr.mxu0 0.0
    %4145 = vmatpush1.xpose.msra.mxu0 0.0
    %4146 = vmatprep.subr.mxu0 0.0
    %4147 = vmatpush1.xpose.msra.mxu0 0.0
    %4148 = vmatprep.subr.mxu0 0.0
    %4149 = vmatpush1.xpose.msra.mxu0 0.0
    %4150 = vmatprep.subr.mxu0 0.0
    %4151 = vmatpush1.xpose.msra.mxu0 0.0
    %4152 = vmatprep.subr.mxu0 0.0
    %4153 = vmatpush1.xpose.msra.mxu0 0.0
    %4154 = vmatprep.subr.mxu0 0.0
    %4155 = vmatpush1.xpose.msra.mxu0 0.0
    %4156 = vmatprep.subr.mxu0 0.0
    %4157 = vmatpush1.xpose.msra.mxu0 0.0
    %4158 = vmatprep.subr.mxu0 0.0
    %4159 = vmatpush1.xpose.msra.mxu0 0.0
    %4160 = vmatprep.subr.mxu0 0.0
    %4161 = vmatpush1.xpose.msra.mxu0 0.0
    %4162 = vmatprep.subr.mxu0 0.0
    %4163 = vmatpush1.xpose.msra.mxu0 0.0
    %4164 = vmatprep.subr.mxu0 0.0
    %4165 = vmatpush1.xpose.msra.mxu0 0.0
    %4166 = vmatprep.subr.mxu0 0.0
    %4167 = vmatpush1.xpose.msra.mxu0 0.0
    %4168 = vmatprep.subr.mxu0 0.0
    %4169 = vmatpush1.xpose.msra.mxu0 0.0
    %4170 = vmatprep.subr.mxu0 0.0
    %4171 = vmatpush1.xpose.msra.mxu0 0.0
    %4172 = vmatprep.subr.mxu0 0.0
    %4173 = vmatpush1.xpose.msra.mxu0 0.0
    %4174 = vmatprep.subr.mxu0 0.0
    %4175 = vmatpush1.xpose.msra.mxu0 0.0
    %4176 = vmatprep.subr.mxu0 0.0
    %4177 = vmatpush1.xpose.msra.mxu0 0.0
    %4178 = vmatprep.subr.mxu0 0.0
    %4179 = vmatpush1.xpose.msra.mxu0 0.0
    %4180 = vmatprep.mubr.f32.mxu0 %v3528
    %4181 = vmatmul.mubr.f32.gmra.mrb[0].mxu0 %v3520
    %v4182 = vpop.f32.mrb[0].mxu0
    %v4183 = vadd.f32 %v4113, %v4182
    %v4184 = vpop.f32.mrb[0].mxu0
    %4185 = vdwg.mxu0
    %4186 = vmatprep.subr.mxu0 %v2245
    %4187 = vmatpush1.xpose.msra.mxu0 %v2244
    %4188 = vmatprep.subr.mxu0 0.0
    %4189 = vmatpush1.xpose.msra.mxu0 0.0
    %4190 = vmatprep.subr.mxu0 0.0
    %4191 = vmatpush1.xpose.msra.mxu0 0.0
    %4192 = vmatprep.subr.mxu0 0.0
    %4193 = vmatpush1.xpose.msra.mxu0 0.0
    %4194 = vmatprep.subr.mxu0 0.0
    %4195 = vmatpush1.xpose.msra.mxu0 0.0
    %4196 = vmatprep.subr.mxu0 0.0
    %4197 = vmatpush1.xpose.msra.mxu0 0.0
    %4198 = vmatprep.subr.mxu0 0.0
    %4199 = vmatpush1.xpose.msra.mxu0 0.0
    %4200 = vmatprep.subr.mxu0 0.0
    %4201 = vmatpush1.xpose.msra.mxu0 0.0
    %4202 = vmatprep.subr.mxu0 0.0
    %4203 = vmatpush1.xpose.msra.mxu0 0.0
    %4204 = vmatprep.subr.mxu0 0.0
    %4205 = vmatpush1.xpose.msra.mxu0 0.0
    %4206 = vmatprep.subr.mxu0 0.0
    %4207 = vmatpush1.xpose.msra.mxu0 0.0
    %4208 = vmatprep.subr.mxu0 0.0
    %4209 = vmatpush1.xpose.msra.mxu0 0.0
    %4210 = vmatprep.subr.mxu0 0.0
    %4211 = vmatpush1.xpose.msra.mxu0 0.0
    %4212 = vmatprep.subr.mxu0 0.0
    %4213 = vmatpush1.xpose.msra.mxu0 0.0
    %4214 = vmatprep.subr.mxu0 0.0
    %4215 = vmatpush1.xpose.msra.mxu0 0.0
    %4216 = vmatprep.subr.mxu0 0.0
    %4217 = vmatpush1.xpose.msra.mxu0 0.0
    %4218 = vmatprep.subr.mxu0 0.0
    %4219 = vmatpush1.xpose.msra.mxu0 0.0
    %4220 = vmatprep.subr.mxu0 0.0
    %4221 = vmatpush1.xpose.msra.mxu0 0.0
    %4222 = vmatprep.subr.mxu0 0.0
    %4223 = vmatpush1.xpose.msra.mxu0 0.0
    %4224 = vmatprep.subr.mxu0 0.0
    %4225 = vmatpush1.xpose.msra.mxu0 0.0
    %4226 = vmatprep.subr.mxu0 0.0
    %4227 = vmatpush1.xpose.msra.mxu0 0.0
    %4228 = vmatprep.subr.mxu0 0.0
    %4229 = vmatpush1.xpose.msra.mxu0 0.0
    %4230 = vmatprep.subr.mxu0 0.0
    %4231 = vmatpush1.xpose.msra.mxu0 0.0
    %4232 = vmatprep.subr.mxu0 0.0
    %4233 = vmatpush1.xpose.msra.mxu0 0.0
    %4234 = vmatprep.subr.mxu0 0.0
    %4235 = vmatpush1.xpose.msra.mxu0 0.0
    %4236 = vmatprep.subr.mxu0 0.0
    %4237 = vmatpush1.xpose.msra.mxu0 0.0
    %4238 = vmatprep.subr.mxu0 0.0
    %4239 = vmatpush1.xpose.msra.mxu0 0.0
    %4240 = vmatprep.subr.mxu0 0.0
    %4241 = vmatpush1.xpose.msra.mxu0 0.0
    %4242 = vmatprep.subr.mxu0 0.0
    %4243 = vmatpush1.xpose.msra.mxu0 0.0
    %4244 = vmatprep.subr.mxu0 0.0
    %4245 = vmatpush1.xpose.msra.mxu0 0.0
    %4246 = vmatprep.subr.mxu0 0.0
    %4247 = vmatpush1.xpose.msra.mxu0 0.0
    %4248 = vmatprep.subr.mxu0 0.0
    %4249 = vmatpush1.xpose.msra.mxu0 0.0
    %4250 = vmatprep.mubr.f32.mxu0 %v3529
    %4251 = vmatmul.mubr.f32.gmra.mrb[0].mxu0 %v3527
    %v4252 = vpop.f32.mrb[0].mxu0
    %v4253 = vadd.f32 %v4183, %v4252
    %v4254 = vpop.f32.mrb[0].mxu0
    %4255 = vdwg.mxu0
    %4256 = vmatprep.subr.mxu0 %v2611
    %4257 = vmatpush1.xpose.msra.mxu0 %v2610
    %4258 = vmatprep.subr.mxu0 0.0
    %4259 = vmatpush1.xpose.msra.mxu0 0.0
    %4260 = vmatprep.subr.mxu0 0.0
    %4261 = vmatpush1.xpose.msra.mxu0 0.0
    %4262 = vmatprep.subr.mxu0 0.0
    %4263 = vmatpush1.xpose.msra.mxu0 0.0
    %4264 = vmatprep.subr.mxu0 0.0
    %4265 = vmatpush1.xpose.msra.mxu0 0.0
    %4266 = vmatprep.subr.mxu0 0.0
    %4267 = vmatpush1.xpose.msra.mxu0 0.0
    %4268 = vmatprep.subr.mxu0 0.0
    %4269 = vmatpush1.xpose.msra.mxu0 0.0
    %4270 = vmatprep.subr.mxu0 0.0
    %4271 = vmatpush1.xpose.msra.mxu0 0.0
    %4272 = vmatprep.subr.mxu0 0.0
    %4273 = vmatpush1.xpose.msra.mxu0 0.0
    %4274 = vmatprep.subr.mxu0 0.0
    %4275 = vmatpush1.xpose.msra.mxu0 0.0
    %4276 = vmatprep.subr.mxu0 0.0
    %4277 = vmatpush1.xpose.msra.mxu0 0.0
    %4278 = vmatprep.subr.mxu0 0.0
    %4279 = vmatpush1.xpose.msra.mxu0 0.0
    %4280 = vmatprep.subr.mxu0 0.0
    %4281 = vmatpush1.xpose.msra.mxu0 0.0
    %4282 = vmatprep.subr.mxu0 0.0
    %4283 = vmatpush1.xpose.msra.mxu0 0.0
    %4284 = vmatprep.subr.mxu0 0.0
    %4285 = vmatpush1.xpose.msra.mxu0 0.0
    %4286 = vmatprep.subr.mxu0 0.0
    %4287 = vmatpush1.xpose.msra.mxu0 0.0
    %4288 = vmatprep.subr.mxu0 0.0
    %4289 = vmatpush1.xpose.msra.mxu0 0.0
    %4290 = vmatprep.subr.mxu0 0.0
    %4291 = vmatpush1.xpose.msra.mxu0 0.0
    %4292 = vmatprep.subr.mxu0 0.0
    %4293 = vmatpush1.xpose.msra.mxu0 0.0
    %4294 = vmatprep.subr.mxu0 0.0
    %4295 = vmatpush1.xpose.msra.mxu0 0.0
    %4296 = vmatprep.subr.mxu0 0.0
    %4297 = vmatpush1.xpose.msra.mxu0 0.0
    %4298 = vmatprep.subr.mxu0 0.0
    %4299 = vmatpush1.xpose.msra.mxu0 0.0
    %4300 = vmatprep.subr.mxu0 0.0
    %4301 = vmatpush1.xpose.msra.mxu0 0.0
    %4302 = vmatprep.subr.mxu0 0.0
    %4303 = vmatpush1.xpose.msra.mxu0 0.0
    %4304 = vmatprep.subr.mxu0 0.0
    %4305 = vmatpush1.xpose.msra.mxu0 0.0
    %4306 = vmatprep.subr.mxu0 0.0
    %4307 = vmatpush1.xpose.msra.mxu0 0.0
    %4308 = vmatprep.subr.mxu0 0.0
    %4309 = vmatpush1.xpose.msra.mxu0 0.0
    %4310 = vmatprep.subr.mxu0 0.0
    %4311 = vmatpush1.xpose.msra.mxu0 0.0
    %4312 = vmatprep.subr.mxu0 0.0
    %4313 = vmatpush1.xpose.msra.mxu0 0.0
    %4314 = vmatprep.subr.mxu0 0.0
    %4315 = vmatpush1.xpose.msra.mxu0 0.0
    %4316 = vmatprep.subr.mxu0 0.0
    %4317 = vmatpush1.xpose.msra.mxu0 0.0
    %4318 = vmatprep.subr.mxu0 0.0
    %4319 = vmatpush1.xpose.msra.mxu0 0.0
    %4320 = vmatprep.mubr.f32.mxu0 %v3528
    %4321 = vmatmul.mubr.f32.gmra.mrb[0].mxu0 %v3520
    %v4322 = vpop.f32.mrb[0].mxu0
    %v4323 = vadd.f32 %v4253, %v4322
    %v4324 = vpop.f32.mrb[0].mxu0
    %4325 = vdwg.mxu0
    %4326 = vmatprep.subr.mxu0 %v2613
    %4327 = vmatpush1.xpose.msra.mxu0 %v2612
    %4328 = vmatprep.subr.mxu0 0.0
    %4329 = vmatpush1.xpose.msra.mxu0 0.0
    %4330 = vmatprep.subr.mxu0 0.0
    %4331 = vmatpush1.xpose.msra.mxu0 0.0
    %4332 = vmatprep.subr.mxu0 0.0
    %4333 = vmatpush1.xpose.msra.mxu0 0.0
    %4334 = vmatprep.subr.mxu0 0.0
    %4335 = vmatpush1.xpose.msra.mxu0 0.0
    %4336 = vmatprep.subr.mxu0 0.0
    %4337 = vmatpush1.xpose.msra.mxu0 0.0
    %4338 = vmatprep.subr.mxu0 0.0
    %4339 = vmatpush1.xpose.msra.mxu0 0.0
    %4340 = vmatprep.subr.mxu0 0.0
    %4341 = vmatpush1.xpose.msra.mxu0 0.0
    %4342 = vmatprep.subr.mxu0 0.0
    %4343 = vmatpush1.xpose.msra.mxu0 0.0
    %4344 = vmatprep.subr.mxu0 0.0
    %4345 = vmatpush1.xpose.msra.mxu0 0.0
    %4346 = vmatprep.subr.mxu0 0.0
    %4347 = vmatpush1.xpose.msra.mxu0 0.0
    %4348 = vmatprep.subr.mxu0 0.0
    %4349 = vmatpush1.xpose.msra.mxu0 0.0
    %4350 = vmatprep.subr.mxu0 0.0
    %4351 = vmatpush1.xpose.msra.mxu0 0.0
    %4352 = vmatprep.subr.mxu0 0.0
    %4353 = vmatpush1.xpose.msra.mxu0 0.0
    %4354 = vmatprep.subr.mxu0 0.0
    %4355 = vmatpush1.xpose.msra.mxu0 0.0
    %4356 = vmatprep.subr.mxu0 0.0
    %4357 = vmatpush1.xpose.msra.mxu0 0.0
    %4358 = vmatprep.subr.mxu0 0.0
    %4359 = vmatpush1.xpose.msra.mxu0 0.0
    %4360 = vmatprep.subr.mxu0 0.0
    %4361 = vmatpush1.xpose.msra.mxu0 0.0
    %4362 = vmatprep.subr.mxu0 0.0
    %4363 = vmatpush1.xpose.msra.mxu0 0.0
    %4364 = vmatprep.subr.mxu0 0.0
    %4365 = vmatpush1.xpose.msra.mxu0 0.0
    %4366 = vmatprep.subr.mxu0 0.0
    %4367 = vmatpush1.xpose.msra.mxu0 0.0
    %4368 = vmatprep.subr.mxu0 0.0
    %4369 = vmatpush1.xpose.msra.mxu0 0.0
    %4370 = vmatprep.subr.mxu0 0.0
    %4371 = vmatpush1.xpose.msra.mxu0 0.0
    %4372 = vmatprep.subr.mxu0 0.0
    %4373 = vmatpush1.xpose.msra.mxu0 0.0
    %4374 = vmatprep.subr.mxu0 0.0
    %4375 = vmatpush1.xpose.msra.mxu0 0.0
    %4376 = vmatprep.subr.mxu0 0.0
    %4377 = vmatpush1.xpose.msra.mxu0 0.0
    %4378 = vmatprep.subr.mxu0 0.0
    %4379 = vmatpush1.xpose.msra.mxu0 0.0
    %4380 = vmatprep.subr.mxu0 0.0
    %4381 = vmatpush1.xpose.msra.mxu0 0.0
    %4382 = vmatprep.subr.mxu0 0.0
    %4383 = vmatpush1.xpose.msra.mxu0 0.0
    %4384 = vmatprep.subr.mxu0 0.0
    %4385 = vmatpush1.xpose.msra.mxu0 0.0
    %4386 = vmatprep.subr.mxu0 0.0
    %4387 = vmatpush1.xpose.msra.mxu0 0.0
    %4388 = vmatprep.subr.mxu0 0.0
    %4389 = vmatpush1.xpose.msra.mxu0 0.0
    %4390 = vmatprep.mubr.f32.mxu0 %v3529
    %4391 = vmatmul.mubr.f32.gmra.mrb[0].mxu0 %v3527
    %v4392 = vpop.f32.mrb[0].mxu0
    %v4393 = vadd.f32 %v4323, %v4392
    %v4394 = vpop.f32.mrb[0].mxu0
    %4395 = vdwg.mxu0
    %4396 = vmatprep.subr.mxu0 %v2611
    %4397 = vmatpush1.xpose.msra.mxu0 %v2610
    %4398 = vmatprep.subr.mxu0 0.0
    %4399 = vmatpush1.xpose.msra.mxu0 0.0
    %4400 = vmatprep.subr.mxu0 0.0
    %4401 = vmatpush1.xpose.msra.mxu0 0.0
    %4402 = vmatprep.subr.mxu0 0.0
    %4403 = vmatpush1.xpose.msra.mxu0 0.0
    %4404 = vmatprep.subr.mxu0 0.0
    %4405 = vmatpush1.xpose.msra.mxu0 0.0
    %4406 = vmatprep.subr.mxu0 0.0
    %4407 = vmatpush1.xpose.msra.mxu0 0.0
    %4408 = vmatprep.subr.mxu0 0.0
    %4409 = vmatpush1.xpose.msra.mxu0 0.0
    %4410 = vmatprep.subr.mxu0 0.0
    %4411 = vmatpush1.xpose.msra.mxu0 0.0
    %4412 = vmatprep.subr.mxu0 0.0
    %4413 = vmatpush1.xpose.msra.mxu0 0.0
    %4414 = vmatprep.subr.mxu0 0.0
    %4415 = vmatpush1.xpose.msra.mxu0 0.0
    %4416 = vmatprep.subr.mxu0 0.0
    %4417 = vmatpush1.xpose.msra.mxu0 0.0
    %4418 = vmatprep.subr.mxu0 0.0
    %4419 = vmatpush1.xpose.msra.mxu0 0.0
    %4420 = vmatprep.subr.mxu0 0.0
    %4421 = vmatpush1.xpose.msra.mxu0 0.0
    %4422 = vmatprep.subr.mxu0 0.0
    %4423 = vmatpush1.xpose.msra.mxu0 0.0
    %4424 = vmatprep.subr.mxu0 0.0
    %4425 = vmatpush1.xpose.msra.mxu0 0.0
    %4426 = vmatprep.subr.mxu0 0.0
    %4427 = vmatpush1.xpose.msra.mxu0 0.0
    %4428 = vmatprep.subr.mxu0 0.0
    %4429 = vmatpush1.xpose.msra.mxu0 0.0
    %4430 = vmatprep.subr.mxu0 0.0
    %4431 = vmatpush1.xpose.msra.mxu0 0.0
    %4432 = vmatprep.subr.mxu0 0.0
    %4433 = vmatpush1.xpose.msra.mxu0 0.0
    %4434 = vmatprep.subr.mxu0 0.0
    %4435 = vmatpush1.xpose.msra.mxu0 0.0
    %4436 = vmatprep.subr.mxu0 0.0
    %4437 = vmatpush1.xpose.msra.mxu0 0.0
    %4438 = vmatprep.subr.mxu0 0.0
    %4439 = vmatpush1.xpose.msra.mxu0 0.0
    %4440 = vmatprep.subr.mxu0 0.0
    %4441 = vmatpush1.xpose.msra.mxu0 0.0
    %4442 = vmatprep.subr.mxu0 0.0
    %4443 = vmatpush1.xpose.msra.mxu0 0.0
    %4444 = vmatprep.subr.mxu0 0.0
    %4445 = vmatpush1.xpose.msra.mxu0 0.0
    %4446 = vmatprep.subr.mxu0 0.0
    %4447 = vmatpush1.xpose.msra.mxu0 0.0
    %4448 = vmatprep.subr.mxu0 0.0
    %4449 = vmatpush1.xpose.msra.mxu0 0.0
    %4450 = vmatprep.subr.mxu0 0.0
    %4451 = vmatpush1.xpose.msra.mxu0 0.0
    %4452 = vmatprep.subr.mxu0 0.0
    %4453 = vmatpush1.xpose.msra.mxu0 0.0
    %4454 = vmatprep.subr.mxu0 0.0
    %4455 = vmatpush1.xpose.msra.mxu0 0.0
    %4456 = vmatprep.subr.mxu0 0.0
    %4457 = vmatpush1.xpose.msra.mxu0 0.0
    %4458 = vmatprep.subr.mxu0 0.0
    %4459 = vmatpush1.xpose.msra.mxu0 0.0
    %4460 = vmatprep.mubr.f32.mxu0 %v3550
    %4461 = vmatmul.mubr.f32.gmra.mrb[0].mxu0 %v3542
    %v4462 = vpop.f32.mrb[0].mxu0
    %v4463 = vadd.f32 %v4393, %v4462
    %v4464 = vpop.f32.mrb[0].mxu0
    %4465 = vdwg.mxu0
    %4466 = vmatprep.subr.mxu0 %v2613
    %4467 = vmatpush1.xpose.msra.mxu0 %v2612
    %4468 = vmatprep.subr.mxu0 0.0
    %4469 = vmatpush1.xpose.msra.mxu0 0.0
    %4470 = vmatprep.subr.mxu0 0.0
    %4471 = vmatpush1.xpose.msra.mxu0 0.0
    %4472 = vmatprep.subr.mxu0 0.0
    %4473 = vmatpush1.xpose.msra.mxu0 0.0
    %4474 = vmatprep.subr.mxu0 0.0
    %4475 = vmatpush1.xpose.msra.mxu0 0.0
    %4476 = vmatprep.subr.mxu0 0.0
    %4477 = vmatpush1.xpose.msra.mxu0 0.0
    %4478 = vmatprep.subr.mxu0 0.0
    %4479 = vmatpush1.xpose.msra.mxu0 0.0
    %4480 = vmatprep.subr.mxu0 0.0
    %4481 = vmatpush1.xpose.msra.mxu0 0.0
    %4482 = vmatprep.subr.mxu0 0.0
    %4483 = vmatpush1.xpose.msra.mxu0 0.0
    %4484 = vmatprep.subr.mxu0 0.0
    %4485 = vmatpush1.xpose.msra.mxu0 0.0
    %4486 = vmatprep.subr.mxu0 0.0
    %4487 = vmatpush1.xpose.msra.mxu0 0.0
    %4488 = vmatprep.subr.mxu0 0.0
    %4489 = vmatpush1.xpose.msra.mxu0 0.0
    %4490 = vmatprep.subr.mxu0 0.0
    %4491 = vmatpush1.xpose.msra.mxu0 0.0
    %4492 = vmatprep.subr.mxu0 0.0
    %4493 = vmatpush1.xpose.msra.mxu0 0.0
    %4494 = vmatprep.subr.mxu0 0.0
    %4495 = vmatpush1.xpose.msra.mxu0 0.0
    %4496 = vmatprep.subr.mxu0 0.0
    %4497 = vmatpush1.xpose.msra.mxu0 0.0
    %4498 = vmatprep.subr.mxu0 0.0
    %4499 = vmatpush1.xpose.msra.mxu0 0.0
    %4500 = vmatprep.subr.mxu0 0.0
    %4501 = vmatpush1.xpose.msra.mxu0 0.0
    %4502 = vmatprep.subr.mxu0 0.0
    %4503 = vmatpush1.xpose.msra.mxu0 0.0
    %4504 = vmatprep.subr.mxu0 0.0
    %4505 = vmatpush1.xpose.msra.mxu0 0.0
    %4506 = vmatprep.subr.mxu0 0.0
    %4507 = vmatpush1.xpose.msra.mxu0 0.0
    %4508 = vmatprep.subr.mxu0 0.0
    %4509 = vmatpush1.xpose.msra.mxu0 0.0
    %4510 = vmatprep.subr.mxu0 0.0
    %4511 = vmatpush1.xpose.msra.mxu0 0.0
    %4512 = vmatprep.subr.mxu0 0.0
    %4513 = vmatpush1.xpose.msra.mxu0 0.0
    %4514 = vmatprep.subr.mxu0 0.0
    %4515 = vmatpush1.xpose.msra.mxu0 0.0
    %4516 = vmatprep.subr.mxu0 0.0
    %4517 = vmatpush1.xpose.msra.mxu0 0.0
    %4518 = vmatprep.subr.mxu0 0.0
    %4519 = vmatpush1.xpose.msra.mxu0 0.0
    %4520 = vmatprep.subr.mxu0 0.0
    %4521 = vmatpush1.xpose.msra.mxu0 0.0
    %4522 = vmatprep.subr.mxu0 0.0
    %4523 = vmatpush1.xpose.msra.mxu0 0.0
    %4524 = vmatprep.subr.mxu0 0.0
    %4525 = vmatpush1.xpose.msra.mxu0 0.0
    %4526 = vmatprep.subr.mxu0 0.0
    %4527 = vmatpush1.xpose.msra.mxu0 0.0
    %4528 = vmatprep.subr.mxu0 0.0
    %4529 = vmatpush1.xpose.msra.mxu0 0.0
    %4530 = vmatprep.mubr.f32.mxu0 %v3551
    %4531 = vmatmul.mubr.f32.gmra.mrb[0].mxu0 %v3549
    %v4532 = vpop.f32.mrb[0].mxu0
    %v4533 = vadd.f32 %v4463, %v4532
    %v4534 = vpop.f32.mrb[0].mxu0
    %4535 = vdwg.mxu0
    %4536 = vmatprep.subr.mxu0 %v2983
    %4537 = vmatpush1.xpose.msra.mxu0 %v2982
    %4538 = vmatprep.subr.mxu0 0.0
    %4539 = vmatpush1.xpose.msra.mxu0 0.0
    %4540 = vmatprep.subr.mxu0 0.0
    %4541 = vmatpush1.xpose.msra.mxu0 0.0
    %4542 = vmatprep.subr.mxu0 0.0
    %4543 = vmatpush1.xpose.msra.mxu0 0.0
    %4544 = vmatprep.subr.mxu0 0.0
    %4545 = vmatpush1.xpose.msra.mxu0 0.0
    %4546 = vmatprep.subr.mxu0 0.0
    %4547 = vmatpush1.xpose.msra.mxu0 0.0
    %4548 = vmatprep.subr.mxu0 0.0
    %4549 = vmatpush1.xpose.msra.mxu0 0.0
    %4550 = vmatprep.subr.mxu0 0.0
    %4551 = vmatpush1.xpose.msra.mxu0 0.0
    %4552 = vmatprep.subr.mxu0 0.0
    %4553 = vmatpush1.xpose.msra.mxu0 0.0
    %4554 = vmatprep.subr.mxu0 0.0
    %4555 = vmatpush1.xpose.msra.mxu0 0.0
    %4556 = vmatprep.subr.mxu0 0.0
    %4557 = vmatpush1.xpose.msra.mxu0 0.0
    %4558 = vmatprep.subr.mxu0 0.0
    %4559 = vmatpush1.xpose.msra.mxu0 0.0
    %4560 = vmatprep.subr.mxu0 0.0
    %4561 = vmatpush1.xpose.msra.mxu0 0.0
    %4562 = vmatprep.subr.mxu0 0.0
    %4563 = vmatpush1.xpose.msra.mxu0 0.0
    %4564 = vmatprep.subr.mxu0 0.0
    %4565 = vmatpush1.xpose.msra.mxu0 0.0
    %4566 = vmatprep.subr.mxu0 0.0
    %4567 = vmatpush1.xpose.msra.mxu0 0.0
    %4568 = vmatprep.subr.mxu0 0.0
    %4569 = vmatpush1.xpose.msra.mxu0 0.0
    %4570 = vmatprep.subr.mxu0 0.0
    %4571 = vmatpush1.xpose.msra.mxu0 0.0
    %4572 = vmatprep.subr.mxu0 0.0
    %4573 = vmatpush1.xpose.msra.mxu0 0.0
    %4574 = vmatprep.subr.mxu0 0.0
    %4575 = vmatpush1.xpose.msra.mxu0 0.0
    %4576 = vmatprep.subr.mxu0 0.0
    %4577 = vmatpush1.xpose.msra.mxu0 0.0
    %4578 = vmatprep.subr.mxu0 0.0
    %4579 = vmatpush1.xpose.msra.mxu0 0.0
    %4580 = vmatprep.subr.mxu0 0.0
    %4581 = vmatpush1.xpose.msra.mxu0 0.0
    %4582 = vmatprep.subr.mxu0 0.0
    %4583 = vmatpush1.xpose.msra.mxu0 0.0
    %4584 = vmatprep.subr.mxu0 0.0
    %4585 = vmatpush1.xpose.msra.mxu0 0.0
    %4586 = vmatprep.subr.mxu0 0.0
    %4587 = vmatpush1.xpose.msra.mxu0 0.0
    %4588 = vmatprep.subr.mxu0 0.0
    %4589 = vmatpush1.xpose.msra.mxu0 0.0
    %4590 = vmatprep.subr.mxu0 0.0
    %4591 = vmatpush1.xpose.msra.mxu0 0.0
    %4592 = vmatprep.subr.mxu0 0.0
    %4593 = vmatpush1.xpose.msra.mxu0 0.0
    %4594 = vmatprep.subr.mxu0 0.0
    %4595 = vmatpush1.xpose.msra.mxu0 0.0
    %4596 = vmatprep.subr.mxu0 0.0
    %4597 = vmatpush1.xpose.msra.mxu0 0.0
    %4598 = vmatprep.subr.mxu0 0.0
    %4599 = vmatpush1.xpose.msra.mxu0 0.0
    %4600 = vmatprep.mubr.f32.mxu0 %v3550
    %4601 = vmatmul.mubr.f32.gmra.mrb[0].mxu0 %v3542
    %v4602 = vpop.f32.mrb[0].mxu0
    %v4603 = vadd.f32 %v4533, %v4602
    %v4604 = vpop.f32.mrb[0].mxu0
    %4605 = vdwg.mxu0
    %4606 = vmatprep.subr.mxu0 %v2985
    %4607 = vmatpush1.xpose.msra.mxu0 %v2984
    %4608 = vmatprep.subr.mxu0 0.0
    %4609 = vmatpush1.xpose.msra.mxu0 0.0
    %4610 = vmatprep.subr.mxu0 0.0
    %4611 = vmatpush1.xpose.msra.mxu0 0.0
    %4612 = vmatprep.subr.mxu0 0.0
    %4613 = vmatpush1.xpose.msra.mxu0 0.0
    %4614 = vmatprep.subr.mxu0 0.0
    %4615 = vmatpush1.xpose.msra.mxu0 0.0
    %4616 = vmatprep.subr.mxu0 0.0
    %4617 = vmatpush1.xpose.msra.mxu0 0.0
    %4618 = vmatprep.subr.mxu0 0.0
    %4619 = vmatpush1.xpose.msra.mxu0 0.0
    %4620 = vmatprep.subr.mxu0 0.0
    %4621 = vmatpush1.xpose.msra.mxu0 0.0
    %4622 = vmatprep.subr.mxu0 0.0
    %4623 = vmatpush1.xpose.msra.mxu0 0.0
    %4624 = vmatprep.subr.mxu0 0.0
    %4625 = vmatpush1.xpose.msra.mxu0 0.0
    %4626 = vmatprep.subr.mxu0 0.0
    %4627 = vmatpush1.xpose.msra.mxu0 0.0
    %4628 = vmatprep.subr.mxu0 0.0
    %4629 = vmatpush1.xpose.msra.mxu0 0.0
    %4630 = vmatprep.subr.mxu0 0.0
    %4631 = vmatpush1.xpose.msra.mxu0 0.0
    %4632 = vmatprep.subr.mxu0 0.0
    %4633 = vmatpush1.xpose.msra.mxu0 0.0
    %4634 = vmatprep.subr.mxu0 0.0
    %4635 = vmatpush1.xpose.msra.mxu0 0.0
    %4636 = vmatprep.subr.mxu0 0.0
    %4637 = vmatpush1.xpose.msra.mxu0 0.0
    %4638 = vmatprep.subr.mxu0 0.0
    %4639 = vmatpush1.xpose.msra.mxu0 0.0
    %4640 = vmatprep.subr.mxu0 0.0
    %4641 = vmatpush1.xpose.msra.mxu0 0.0
    %4642 = vmatprep.subr.mxu0 0.0
    %4643 = vmatpush1.xpose.msra.mxu0 0.0
    %4644 = vmatprep.subr.mxu0 0.0
    %4645 = vmatpush1.xpose.msra.mxu0 0.0
    %4646 = vmatprep.subr.mxu0 0.0
    %4647 = vmatpush1.xpose.msra.mxu0 0.0
    %4648 = vmatprep.subr.mxu0 0.0
    %4649 = vmatpush1.xpose.msra.mxu0 0.0
    %4650 = vmatprep.subr.mxu0 0.0
    %4651 = vmatpush1.xpose.msra.mxu0 0.0
    %4652 = vmatprep.subr.mxu0 0.0
    %4653 = vmatpush1.xpose.msra.mxu0 0.0
    %4654 = vmatprep.subr.mxu0 0.0
    %4655 = vmatpush1.xpose.msra.mxu0 0.0
    %4656 = vmatprep.subr.mxu0 0.0
    %4657 = vmatpush1.xpose.msra.mxu0 0.0
    %4658 = vmatprep.subr.mxu0 0.0
    %4659 = vmatpush1.xpose.msra.mxu0 0.0
    %4660 = vmatprep.subr.mxu0 0.0
    %4661 = vmatpush1.xpose.msra.mxu0 0.0
    %4662 = vmatprep.subr.mxu0 0.0
    %4663 = vmatpush1.xpose.msra.mxu0 0.0
    %4664 = vmatprep.subr.mxu0 0.0
    %4665 = vmatpush1.xpose.msra.mxu0 0.0
    %4666 = vmatprep.subr.mxu0 0.0
    %4667 = vmatpush1.xpose.msra.mxu0 0.0
    %4668 = vmatprep.subr.mxu0 0.0
    %4669 = vmatpush1.xpose.msra.mxu0 0.0
    %4670 = vmatprep.mubr.f32.mxu0 %v3551
    %4671 = vmatmul.mubr.f32.gmra.mrb[0].mxu0 %v3549
    %v4672 = vpop.f32.mrb[0].mxu0
    %v4673 = vadd.f32 %v4603, %v4672
    %v4674 = vpop.f32.mrb[0].mxu0
    %4675 = vdwg.mxu0
    %4676 = vmatprep.subr.mxu0 %v3355
    %4677 = vmatpush1.xpose.msra.mxu0 %v3354
    %4678 = vmatprep.subr.mxu0 0.0
    %4679 = vmatpush1.xpose.msra.mxu0 0.0
    %4680 = vmatprep.subr.mxu0 0.0
    %4681 = vmatpush1.xpose.msra.mxu0 0.0
    %4682 = vmatprep.subr.mxu0 0.0
    %4683 = vmatpush1.xpose.msra.mxu0 0.0
    %4684 = vmatprep.subr.mxu0 0.0
    %4685 = vmatpush1.xpose.msra.mxu0 0.0
    %4686 = vmatprep.subr.mxu0 0.0
    %4687 = vmatpush1.xpose.msra.mxu0 0.0
    %4688 = vmatprep.subr.mxu0 0.0
    %4689 = vmatpush1.xpose.msra.mxu0 0.0
    %4690 = vmatprep.subr.mxu0 0.0
    %4691 = vmatpush1.xpose.msra.mxu0 0.0
    %4692 = vmatprep.subr.mxu0 0.0
    %4693 = vmatpush1.xpose.msra.mxu0 0.0
    %4694 = vmatprep.subr.mxu0 0.0
    %4695 = vmatpush1.xpose.msra.mxu0 0.0
    %4696 = vmatprep.subr.mxu0 0.0
    %4697 = vmatpush1.xpose.msra.mxu0 0.0
    %4698 = vmatprep.subr.mxu0 0.0
    %4699 = vmatpush1.xpose.msra.mxu0 0.0
    %4700 = vmatprep.subr.mxu0 0.0
    %4701 = vmatpush1.xpose.msra.mxu0 0.0
    %4702 = vmatprep.subr.mxu0 0.0
    %4703 = vmatpush1.xpose.msra.mxu0 0.0
    %4704 = vmatprep.subr.mxu0 0.0
    %4705 = vmatpush1.xpose.msra.mxu0 0.0
    %4706 = vmatprep.subr.mxu0 0.0
    %4707 = vmatpush1.xpose.msra.mxu0 0.0
    %4708 = vmatprep.subr.mxu0 0.0
    %4709 = vmatpush1.xpose.msra.mxu0 0.0
    %4710 = vmatprep.subr.mxu0 0.0
    %4711 = vmatpush1.xpose.msra.mxu0 0.0
    %4712 = vmatprep.subr.mxu0 0.0
    %4713 = vmatpush1.xpose.msra.mxu0 0.0
    %4714 = vmatprep.subr.mxu0 0.0
    %4715 = vmatpush1.xpose.msra.mxu0 0.0
    %4716 = vmatprep.subr.mxu0 0.0
    %4717 = vmatpush1.xpose.msra.mxu0 0.0
    %4718 = vmatprep.subr.mxu0 0.0
    %4719 = vmatpush1.xpose.msra.mxu0 0.0
    %4720 = vmatprep.subr.mxu0 0.0
    %4721 = vmatpush1.xpose.msra.mxu0 0.0
    %4722 = vmatprep.subr.mxu0 0.0
    %4723 = vmatpush1.xpose.msra.mxu0 0.0
    %4724 = vmatprep.subr.mxu0 0.0
    %4725 = vmatpush1.xpose.msra.mxu0 0.0
    %4726 = vmatprep.subr.mxu0 0.0
    %4727 = vmatpush1.xpose.msra.mxu0 0.0
    %4728 = vmatprep.subr.mxu0 0.0
    %4729 = vmatpush1.xpose.msra.mxu0 0.0
    %4730 = vmatprep.subr.mxu0 0.0
    %4731 = vmatpush1.xpose.msra.mxu0 0.0
    %4732 = vmatprep.subr.mxu0 0.0
    %4733 = vmatpush1.xpose.msra.mxu0 0.0
    %4734 = vmatprep.subr.mxu0 0.0
    %4735 = vmatpush1.xpose.msra.mxu0 0.0
    %4736 = vmatprep.subr.mxu0 0.0
    %4737 = vmatpush1.xpose.msra.mxu0 0.0
    %4738 = vmatprep.subr.mxu0 0.0
    %4739 = vmatpush1.xpose.msra.mxu0 0.0
    %4740 = vmatprep.mubr.f32.mxu0 %v3550
    %4741 = vmatmul.mubr.f32.gmra.mrb[0].mxu0 %v3542
    %v4742 = vpop.f32.mrb[0].mxu0
    %v4743 = vadd.f32 %v4673, %v4742
    %v4744 = vpop.f32.mrb[0].mxu0
    %4745 = vdwg.mxu0
    %4746 = vmatprep.subr.mxu0 %v3357
    %4747 = vmatpush1.xpose.msra.mxu0 %v3356
    %4748 = vmatprep.subr.mxu0 0.0
    %4749 = vmatpush1.xpose.msra.mxu0 0.0
    %4750 = vmatprep.subr.mxu0 0.0
    %4751 = vmatpush1.xpose.msra.mxu0 0.0
    %4752 = vmatprep.subr.mxu0 0.0
    %4753 = vmatpush1.xpose.msra.mxu0 0.0
    %4754 = vmatprep.subr.mxu0 0.0
    %4755 = vmatpush1.xpose.msra.mxu0 0.0
    %4756 = vmatprep.subr.mxu0 0.0
    %4757 = vmatpush1.xpose.msra.mxu0 0.0
    %4758 = vmatprep.subr.mxu0 0.0
    %4759 = vmatpush1.xpose.msra.mxu0 0.0
    %4760 = vmatprep.subr.mxu0 0.0
    %4761 = vmatpush1.xpose.msra.mxu0 0.0
    %4762 = vmatprep.subr.mxu0 0.0
    %4763 = vmatpush1.xpose.msra.mxu0 0.0
    %4764 = vmatprep.subr.mxu0 0.0
    %4765 = vmatpush1.xpose.msra.mxu0 0.0
    %4766 = vmatprep.subr.mxu0 0.0
    %4767 = vmatpush1.xpose.msra.mxu0 0.0
    %4768 = vmatprep.subr.mxu0 0.0
    %4769 = vmatpush1.xpose.msra.mxu0 0.0
    %4770 = vmatprep.subr.mxu0 0.0
    %4771 = vmatpush1.xpose.msra.mxu0 0.0
    %4772 = vmatprep.subr.mxu0 0.0
    %4773 = vmatpush1.xpose.msra.mxu0 0.0
    %4774 = vmatprep.subr.mxu0 0.0
    %4775 = vmatpush1.xpose.msra.mxu0 0.0
    %4776 = vmatprep.subr.mxu0 0.0
    %4777 = vmatpush1.xpose.msra.mxu0 0.0
    %4778 = vmatprep.subr.mxu0 0.0
    %4779 = vmatpush1.xpose.msra.mxu0 0.0
    %4780 = vmatprep.subr.mxu0 0.0
    %4781 = vmatpush1.xpose.msra.mxu0 0.0
    %4782 = vmatprep.subr.mxu0 0.0
    %4783 = vmatpush1.xpose.msra.mxu0 0.0
    %4784 = vmatprep.subr.mxu0 0.0
    %4785 = vmatpush1.xpose.msra.mxu0 0.0
    %4786 = vmatprep.subr.mxu0 0.0
    %4787 = vmatpush1.xpose.msra.mxu0 0.0
    %4788 = vmatprep.subr.mxu0 0.0
    %4789 = vmatpush1.xpose.msra.mxu0 0.0
    %4790 = vmatprep.subr.mxu0 0.0
    %4791 = vmatpush1.xpose.msra.mxu0 0.0
    %4792 = vmatprep.subr.mxu0 0.0
    %4793 = vmatpush1.xpose.msra.mxu0 0.0
    %4794 = vmatprep.subr.mxu0 0.0
    %4795 = vmatpush1.xpose.msra.mxu0 0.0
    %4796 = vmatprep.subr.mxu0 0.0
    %4797 = vmatpush1.xpose.msra.mxu0 0.0
    %4798 = vmatprep.subr.mxu0 0.0
    %4799 = vmatpush1.xpose.msra.mxu0 0.0
    %4800 = vmatprep.subr.mxu0 0.0
    %4801 = vmatpush1.xpose.msra.mxu0 0.0
    %4802 = vmatprep.subr.mxu0 0.0
    %4803 = vmatpush1.xpose.msra.mxu0 0.0
    %4804 = vmatprep.subr.mxu0 0.0
    %4805 = vmatpush1.xpose.msra.mxu0 0.0
    %4806 = vmatprep.subr.mxu0 0.0
    %4807 = vmatpush1.xpose.msra.mxu0 0.0
    %4808 = vmatprep.subr.mxu0 0.0
    %4809 = vmatpush1.xpose.msra.mxu0 0.0
    %4810 = vmatprep.mubr.f32.mxu0 %v3551
    %4811 = vmatmul.mubr.f32.gmra.mrb[0].mxu0 %v3549
    %v4812 = vpop.f32.mrb[0].mxu0
    %v4813 = vadd.f32 %v4743, %v4812
    %v4814 = vpop.f32.mrb[0].mxu0
    %4815 = vdwg.mxu0
    %v4816 = vmul.f32 %v4813, 0.11111111
    %vm4817 = vcmask 41984
    %4818 = vst.msk [vmem:[#allocation8] sm:$0x3] %vm4817, %v4816
    // Predicated region
    $region26: #{tpu_custom_call.1} parent=1 // pred_check
      _
    $region27: #{tpu_custom_call.1} parent=1 // pred_check_branch
      %4820 = sbr.rel (0) target = $region29
    $region28: #{tpu_custom_call.1} parent=1 // pred_region
      %s4822 = ssub.s32 32, 32
      %4823 = vsyncadd [#allocation4], %s4822
      %s4825 = sshll.u32 [#allocation8], 4
      %s4826 = int_to_ptr.vmem [resolvable:$true] %s4825
      %4828 = dma.vmem_to_hbm [thread:$0]  %s4826, 32, %s3, [#allocation4]
    $region29: #{tpu_custom_call.1} parent=1 // pred_fallthru
      _
    // Predicated region
    $region30: #{tpu_custom_call.1} parent=1 // pred_check
      _
    $region31: #{tpu_custom_call.1} parent=1 // pred_check_branch
      %4830 = sbr.rel (0) target = $region33
    $region32: #{tpu_custom_call.1} parent=1 // pred_region
      _
    $region33: #{tpu_custom_call.1} parent=1 // pred_fallthru
      _
    // Predicated region
    $region34: #{tpu_custom_call.1} parent=1 // pred_check
      _
    $region35: #{tpu_custom_call.1} parent=1 // pred_check_branch
      %4832 = sbr.rel (0) target = $region37
    $region36: #{tpu_custom_call.1} parent=1 // pred_region
      %4833 = dma.done [#allocation4], 32
    $region37: #{tpu_custom_call.1} parent=1 // pred_fallthru
      _
    // Predicated region
    $region38: #{tpu_custom_call.1} parent=1 // pred_check
      _
    $region39: #{tpu_custom_call.1} parent=1 // pred_check_branch
      %4835 = sbr.rel (0) target = $region41
    $region40: #{tpu_custom_call.1} parent=1 // pred_region
      _
    $region41: #{tpu_custom_call.1} parent=1 // pred_fallthru
      _
    %4836 = vsyncpa [#allocation3], 1
    %4837 = vsyncpa [#allocation6], 1
    %4838 = vsyncpa [#allocation4], 1

</llo_original>
